<compile_context>
chip_gen: v7x
topology: tpu7x:2x2x1
jax: 0.10.0
libtpu: 0.0.40
codegen_flags: <defaults>
</compile_context>

<pallas_src>
import numpy as np
import jax
import jax.numpy as jnp
from jax import lax
from jax.experimental import pallas as pl
from jax.experimental.pallas import tpu as pltpu

_NEG = -1.0e30  # finite "-inf": masked lanes never create inf/NaN arithmetic


def _round_up(x, m):
    return ((x + m - 1) // m) * m


def infonce_loss(im, s, log_logit_scale, *, tile_q=512, tile_k=128):
    """InfoNCE loss.  im, s: (B, D) (bf16 recommended); log_logit_scale: scalar.

    tile_q: tall, VMEM-resident im row tile (raise to 1024-2048 on v6e for very
            large B/D if VMEM allows).  tile_k: streamed s col tile (128 fills the
            v5e MXU; 256 recommended on v6e/v7x).  Any B works: the batch is padded
            to a tile multiple and the padding is masked out of the loss.
    """
    B, D = im.shape
    assert s.shape == (B, D), (im.shape, s.shape)

    # ---- asymmetric tile sizing (tall resident rows, narrow streamed cols) ----
    tile_k = max(128, int(tile_k))
    tile_k = min(tile_k, _round_up(B, 128))
    tile_q = max(int(tile_q), tile_k)
    tile_q = min(tile_q, _round_up(B, tile_k))
    tile_q = _round_up(tile_q, tile_k)           # tile_q is a multiple of tile_k
    B_pad = _round_up(B, tile_q)                 # hence also a multiple of tile_k
    nq, nk = B_pad // tile_q, B_pad // tile_k
    needs_mask = B_pad != B

    if needs_mask:
        pad = B_pad - B
        im = jnp.pad(im, ((0, pad), (0, 0)))
        s = jnp.pad(s, ((0, pad), (0, 0)))

    scale = jnp.exp(jnp.asarray(log_logit_scale, jnp.float32)).reshape(1, 1)

    def kernel(scale_ref, im_ref, s_ref, loss_ref,
               row_m, row_l, col_m, col_l, row_acc, col_acc, diag_acc):
        qi = pl.program_id(0)
        ki = pl.program_id(1)
        sc = scale_ref[0, 0]

        a = im_ref[...]                                # (Tq, D), native dtype
        b = s_ref[...]                                 # (Tk, D), native dtype

        # (Tq, Tk) logits tile straight off the MXU (A @ B^T, f32 accumulation).
        z = lax.dot_general(a, b, (((1,), (1,)), ((), ())),
                            preferred_element_type=jnp.float32) * sc

        # Masks for padded rows / cols (trace-time specialization: zero cost when
        # B is already a tile multiple).
        if needs_mask:
            row_ok = (qi * tile_q
                      + lax.broadcasted_iota(jnp.int32, (tile_q, 1), 0)) < B
            col_ok = (ki * tile_k
                      + lax.broadcasted_iota(jnp.int32, (1, tile_k), 1)) < B
            z_row = jnp.where(col_ok, z, _NEG)   # row LSE must ignore padded cols
            z_col = jnp.where(row_ok, z, _NEG)   # col LSE must ignore padded rows
        else:
            z_row = z
            z_col = z

        # ---- init global accumulators on the very first grid step ----
        @pl.when(jnp.logical_and(qi == 0, ki == 0))
        def _():
            row_acc[...] = jnp.zeros_like(row_acc)
            col_acc[...] = jnp.zeros_like(col_acc)
            diag_acc[...] = jnp.zeros_like(diag_acc)

        # ---- row-wise online LSE across the inner (col-tile) axis ----
        @pl.when(ki == 0)
        def _():
            row_m[...] = jnp.full_like(row_m, _NEG)
            row_l[...] = jnp.zeros_like(row_l)

        r_m_new = jnp.maximum(row_m[...], jnp.max(z_row, axis=1, keepdims=True))
        row_l[...] = (row_l[...] * jnp.exp(row_m[...] - r_m_new)
                      + jnp.sum(jnp.exp(z_row - r_m_new), axis=1, keepdims=True))
        row_m[...] = r_m_new

        @pl.when(ki == nk - 1)
        def _():
            lse_r = row_m[...] + jnp.log(row_l[...])           # (Tq, 1)
            if needs_mask:
                lse_r = jnp.where(row_ok, lse_r, 0.0)
            row_acc[...] += jnp.sum(lse_r, axis=0, keepdims=True)

        # ---- column-wise online LSE across the outer (row-tile) axis ----
        @pl.when(qi == 0)
        def _():
            col_m[ki] = jnp.full((1, tile_k), _NEG, jnp.float32)
            col_l[ki] = jnp.zeros((1, tile_k), jnp.float32)

        c_m_prev = col_m[ki]
        c_m_new = jnp.maximum(c_m_prev, jnp.max(z_col, axis=0, keepdims=True))
        c_l_new = (col_l[ki] * jnp.exp(c_m_prev - c_m_new)
                   + jnp.sum(jnp.exp(z_col - c_m_new), axis=0, keepdims=True))
        col_m[ki] = c_m_new
        col_l[ki] = c_l_new

        @pl.when(qi == nq - 1)                    # column LSE is final on last row pass
        def _():
            lse_c = c_m_new + jnp.log(c_l_new)                 # (1, Tk)
            if needs_mask:
                lse_c = jnp.where(col_ok, lse_c, 0.0)
            col_acc[...] += jnp.sum(lse_c, axis=1, keepdims=True)

        # ---- diagonal (labels == arange(B)), read from the MXU logits tile ----
        q_lo = qi * tile_q
        k_lo = ki * tile_k
        has_diag = jnp.logical_and(k_lo + tile_k > q_lo, k_lo < q_lo + tile_q)

        @pl.when(has_diag)
        def _():
            rid = q_lo + lax.broadcasted_iota(jnp.int32, (tile_q, tile_k), 0)
            cid = k_lo + lax.broadcasted_iota(jnp.int32, (tile_q, tile_k), 1)
            dmask = rid == cid
            if needs_mask:
                dmask = jnp.logical_and(dmask, cid < B)
            d = jnp.sum(jnp.where(dmask, z, 0.0), axis=1, keepdims=True)  # (Tq, 1)
            diag_acc[...] += jnp.sum(d, axis=0, keepdims=True)

        # ---- finalize: single (1,1) loss written on the last grid step ----
        @pl.when(jnp.logical_and(qi == nq - 1, ki == nk - 1))
        def _():
            loss_ref[...] = ((row_acc[...] + col_acc[...] - 2.0 * diag_acc[...])
                             / (2.0 * B))

    # VMEM budget: im (assume worst-case double-buffered) + s (double-buffered)
    # + live f32 z tile and a few elementwise temps + sublane-padded (1->8) col
    # scratch + row scratch, with 2x headroom.  v7x only has 64 MiB physical VMEM.
    itemsize = im.dtype.itemsize
    vmem_needed = (2 * tile_q * D * itemsize
                   + 2 * tile_k * D * itemsize
                   + 4 * tile_q * tile_k * 4
                   + 2 * nk * 8 * tile_k * 4
                   + 8 * tile_q * 4)
    vmem_limit = int(min(max(2 * vmem_needed, 32 << 20), 100 << 20))

    def build(im_spec):
        return pl.pallas_call(
            kernel,
            out_shape=jax.ShapeDtypeStruct((1, 1), jnp.float32),
            grid=(nq, nk),
            in_specs=[
                pl.BlockSpec((1, 1), lambda qi, ki: (0, 0),
                             memory_space=pltpu.SMEM),              # logit scale
                im_spec,                                            # im row tile (resident)
                pl.BlockSpec((tile_k, D), lambda qi, ki: (ki, 0)),  # s col tile (streamed)
            ],
            out_specs=pl.BlockSpec((1, 1), lambda qi, ki: (0, 0)),
            scratch_shapes=[
                pltpu.VMEM((tile_q, 1), jnp.float32),       # row_m   (online row max)
                pltpu.VMEM((tile_q, 1), jnp.float32),       # row_l   (online row sum-exp)
                pltpu.VMEM((nk, 1, tile_k), jnp.float32),   # col_m   (per-column max)
                pltpu.VMEM((nk, 1, tile_k), jnp.float32),   # col_l   (per-column sum-exp)
                pltpu.VMEM((1, 1), jnp.float32),            # row_acc (sum of row LSEs)
                pltpu.VMEM((1, 1), jnp.float32),            # col_acc (sum of col LSEs)
                pltpu.VMEM((1, 1), jnp.float32),            # diag_acc (sum of logits_ii)
            ],
            # TODO(synk): v7x megacore -- mark qi "parallel" only after giving each
            # TensorCore private row/col/diag accumulators and merging per-core
            # partial sums in a tiny epilogue; a naive flip is incorrect (shared
            # col/diag accumulators + single final write).
            compiler_params=pltpu.CompilerParams(
                dimension_semantics=("arbitrary", "arbitrary"),
                vmem_limit_bytes=vmem_limit),
        )

    # im only changes block index every nk inner steps, so single-buffer it to
    # free VMEM for a taller tile_q; fall back to the default double-buffered
    # spec if this JAX build rejects pipeline_mode / Buffered(1) here.
    try:
        im_spec = pl.BlockSpec((tile_q, D), lambda qi, ki: (qi, 0),
                               pipeline_mode=pl.Buffered(1))
        out = build(im_spec)(scale, im, s)
    except Exception:
        im_spec = pl.BlockSpec((tile_q, D), lambda qi, ki: (qi, 0))
        out = build(im_spec)(scale, im, s)
    return out[0, 0]


def _reference_loss(im, s, log_logit_scale):
    """Pure-JAX reference mirroring the PyTorch forward (f32 math)."""
    scale = jnp.exp(jnp.asarray(log_logit_scale, jnp.float32))
    logits = scale * (im.astype(jnp.float32) @ s.astype(jnp.float32).T)
    n = logits.shape[0]
    labels = jnp.arange(n)

    def ce(lg):
        lse = jax.scipy.special.logsumexp(lg, axis=1)
        return jnp.mean(lse - lg[labels, labels])

    return 0.5 * (ce(logits) + ce(logits.T))


if __name__ == "__main__":
    # nn.Parameter(ones([]) * log(1/0.07))
    log_logit_scale = jnp.asarray(np.log(1.0 / 0.07), dtype=jnp.float32)

    key = jax.random.PRNGKey(0)
    cases = [
        (256, 128, {}),                                # aligned, single row tile
        (256, 128, dict(tile_q=128, tile_k=128)),      # multi row-tile (online col LSE)
        (200, 128, dict(tile_q=128, tile_k=128)),      # non-multiple B -> pad + mask
    ]
    for B, D, kw in cases:
        key, k_im, k_s = jax.random.split(key, 3)
        im = jax.random.normal(k_im, (B, D), dtype=jnp.float32)
        s = jax.random.normal(k_s, (B, D), dtype=jnp.float32)
        # L2-normalize like typical CLIP embeddings, feed the MXU native bf16.
        im = (im / jnp.linalg.norm(im, axis=-1, keepdims=True)).astype(jnp.bfloat16)
        s = (s / jnp.linalg.norm(s, axis=-1, keepdims=True)).astype(jnp.bfloat16)

        loss = jax.block_until_ready(infonce_loss(im, s, log_logit_scale, **kw))
        ref = jax.block_until_ready(_reference_loss(im, s, log_logit_scale))

        assert np.allclose(np.asarray(loss, dtype=np.float32),
                           np.asarray(ref, dtype=np.float32),
                           rtol=2e-3, atol=2e-3), (B, D, kw, loss, ref)
    print("KERNEL_OK")
</pallas_src>

<mosaic_0001>
module attributes {stable_mosaic.version = 11 : i64} {
  func.func @kernel(%arg0: i32, %arg1: i32, %arg2: memref<1x1xf32, #tpu.memory_space<smem>>, %arg3: memref<256x128xbf16, #tpu.memory_space<vmem>>, %arg4: memref<128x128xbf16, #tpu.memory_space<vmem>>, %arg5: memref<1x1xf32, #tpu.memory_space<vmem>>, %arg6: memref<256x1xf32, #tpu.memory_space<vmem>>, %arg7: memref<256x1xf32, #tpu.memory_space<vmem>>, %arg8: memref<2x1x128xf32, #tpu.memory_space<vmem>>, %arg9: memref<2x1x128xf32, #tpu.memory_space<vmem>>, %arg10: memref<1x1xf32, #tpu.memory_space<vmem>>, %arg11: memref<1x1xf32, #tpu.memory_space<vmem>>, %arg12: memref<1x1xf32, #tpu.memory_space<vmem>>) attributes {dimension_semantics = [#tpu.dimension_semantics<arbitrary>, #tpu.dimension_semantics<arbitrary>], iteration_bounds = array<i64: 1, 2>, scalar_prefetch = 0 : i64, scratch_operands = 7 : i64, tpu.core_type = #tpu.core_type<tc>, window_params = [{transform_indices = @transform_0, window_bounds = array<i64: 1, 1>}, {pipeline_mode = #tpu.pipeline_mode<synchronous>, transform_indices = @transform_1, window_bounds = array<i64: 256, 128>}, {transform_indices = @transform_2, window_bounds = array<i64: 128, 128>}, {pipeline_mode = #tpu.pipeline_mode<synchronous>, transform_indices = @transform_3, window_bounds = array<i64: 1, 1>}]} {
    %c0 = arith.constant 0 : index
    %c0_0 = arith.constant 0 : index
    %0 = memref.load %arg2[%c0, %c0_0] : memref<1x1xf32, #tpu.memory_space<smem>>
    %c0_1 = arith.constant 0 : index
    %c0_2 = arith.constant 0 : index
    %1 = vector.load %arg3[%c0_1, %c0_2] : memref<256x128xbf16, #tpu.memory_space<vmem>>, vector<256x128xbf16>
    %c0_3 = arith.constant 0 : index
    %c0_4 = arith.constant 0 : index
    %2 = vector.load %arg4[%c0_3, %c0_4] : memref<128x128xbf16, #tpu.memory_space<vmem>>, vector<128x128xbf16>
    %cst = arith.constant dense<0.000000e+00> : vector<256x128xf32>
    %3 = tpu.matmul %1, %2, %cst {dimension_numbers = #tpu.dot_dimension_numbers<[1], [1], [0], [0], [0, 0, 1, 0], [], []>} : vector<256x128xbf16>, vector<128x128xbf16>, vector<256x128xf32> -> vector<256x128xf32>
    %4 = vector.broadcast %0 : f32 to vector<256x128xf32>
    %5 = arith.mulf %3, %4 : vector<256x128xf32>
    %c0_i32 = arith.constant 0 : i32
    %6 = arith.cmpi eq, %arg0, %c0_i32 : i32
    %c0_i32_5 = arith.constant 0 : i32
    %7 = arith.cmpi eq, %arg1, %c0_i32_5 : i32
    %8 = arith.andi %6, %7 : i1
    %9 = arith.extui %8 : i1 to i32
    %c0_i32_6 = arith.constant 0 : i32
    %10 = arith.cmpi ne, %9, %c0_i32_6 : i32
    scf.if %10 {
      %cst_42 = arith.constant 0.000000e+00 : f32
      %80 = vector.broadcast %cst_42 : f32 to vector<1x1xf32>
      %c0_43 = arith.constant 0 : index
      %c0_44 = arith.constant 0 : index
      %81 = vector.load %arg10[%c0_43, %c0_44] : memref<1x1xf32, #tpu.memory_space<vmem>>, vector<1x1xf32>
      tpu.vector_store %arg10[%c0_43, %c0_44], %80 {strides = array<i32>} : memref<1x1xf32, #tpu.memory_space<vmem>>, vector<1x1xf32>,
      %cst_45 = arith.constant 0.000000e+00 : f32
      %82 = vector.broadcast %cst_45 : f32 to vector<1x1xf32>
      %c0_46 = arith.constant 0 : index
      %c0_47 = arith.constant 0 : index
      %83 = vector.load %arg11[%c0_46, %c0_47] : memref<1x1xf32, #tpu.memory_space<vmem>>, vector<1x1xf32>
      tpu.vector_store %arg11[%c0_46, %c0_47], %82 {strides = array<i32>} : memref<1x1xf32, #tpu.memory_space<vmem>>, vector<1x1xf32>,
      %cst_48 = arith.constant 0.000000e+00 : f32
      %84 = vector.broadcast %cst_48 : f32 to vector<1x1xf32>
      %c0_49 = arith.constant 0 : index
      %c0_50 = arith.constant 0 : index
      %85 = vector.load %arg12[%c0_49, %c0_50] : memref<1x1xf32, #tpu.memory_space<vmem>>, vector<1x1xf32>
      tpu.vector_store %arg12[%c0_49, %c0_50], %84 {strides = array<i32>} : memref<1x1xf32, #tpu.memory_space<vmem>>, vector<1x1xf32>,
    } else {
    }
    %c0_i32_7 = arith.constant 0 : i32
    %11 = arith.cmpi eq, %arg1, %c0_i32_7 : i32
    %12 = arith.extui %11 : i1 to i32
    %c0_i32_8 = arith.constant 0 : i32
    %13 = arith.cmpi ne, %12, %c0_i32_8 : i32
    scf.if %13 {
      %cst_42 = arith.constant -1.000000e+30 : f32
      %80 = vector.broadcast %cst_42 : f32 to vector<256x1xf32>
      %c0_43 = arith.constant 0 : index
      %c0_44 = arith.constant 0 : index
      %81 = vector.load %arg6[%c0_43, %c0_44] : memref<256x1xf32, #tpu.memory_space<vmem>>, vector<256x1xf32>
      tpu.vector_store %arg6[%c0_43, %c0_44], %80 {strides = array<i32>} : memref<256x1xf32, #tpu.memory_space<vmem>>, vector<256x1xf32>,
      %cst_45 = arith.constant 0.000000e+00 : f32
      %82 = vector.broadcast %cst_45 : f32 to vector<256x1xf32>
      %c0_46 = arith.constant 0 : index
      %c0_47 = arith.constant 0 : index
      %83 = vector.load %arg7[%c0_46, %c0_47] : memref<256x1xf32, #tpu.memory_space<vmem>>, vector<256x1xf32>
      tpu.vector_store %arg7[%c0_46, %c0_47], %82 {strides = array<i32>} : memref<256x1xf32, #tpu.memory_space<vmem>>, vector<256x1xf32>,
    } else {
    }
    %c0_9 = arith.constant 0 : index
    %c0_10 = arith.constant 0 : index
    %14 = vector.load %arg6[%c0_9, %c0_10] : memref<256x1xf32, #tpu.memory_space<vmem>>, vector<256x1xf32>
    %cst_11 = arith.constant dense<0xFF800000> : vector<256xf32>
    %15 = vector.multi_reduction <maximumf>, %5, %cst_11 [1] : vector<256x128xf32> to vector<256xf32>
    %16 = vector.shape_cast %15 : vector<256xf32> to vector<256x1xf32>
    %17 = arith.maximumf %14, %16 : vector<256x1xf32>
    %c0_12 = arith.constant 0 : index
    %c0_13 = arith.constant 0 : index
    %18 = vector.load %arg7[%c0_12, %c0_13] : memref<256x1xf32, #tpu.memory_space<vmem>>, vector<256x1xf32>
    %c0_14 = arith.constant 0 : index
    %c0_15 = arith.constant 0 : index
    %19 = vector.load %arg6[%c0_14, %c0_15] : memref<256x1xf32, #tpu.memory_space<vmem>>, vector<256x1xf32>
    %20 = arith.subf %19, %17 : vector<256x1xf32>
    %21 = math.exp %20 : vector<256x1xf32>
    %22 = arith.mulf %18, %21 : vector<256x1xf32>
    %23 = vector.broadcast %17 : vector<256x1xf32> to vector<256x128xf32>
    %24 = arith.subf %5, %23 : vector<256x128xf32>
    %25 = math.exp %24 : vector<256x128xf32>
    %cst_16 = arith.constant dense<0.000000e+00> : vector<256xf32>
    %26 = vector.multi_reduction <add>, %25, %cst_16 [1] : vector<256x128xf32> to vector<256xf32>
    %27 = vector.shape_cast %26 : vector<256xf32> to vector<256x1xf32>
    %28 = arith.addf %22, %27 : vector<256x1xf32>
    %c0_17 = arith.constant 0 : index
    %c0_18 = arith.constant 0 : index
    %29 = vector.load %arg7[%c0_17, %c0_18] : memref<256x1xf32, #tpu.memory_space<vmem>>, vector<256x1xf32>
    tpu.vector_store %arg7[%c0_17, %c0_18], %28 {strides = array<i32>} : memref<256x1xf32, #tpu.memory_space<vmem>>, vector<256x1xf32>,
    %c0_19 = arith.constant 0 : index
    %c0_20 = arith.constant 0 : index
    %30 = vector.load %arg6[%c0_19, %c0_20] : memref<256x1xf32, #tpu.memory_space<vmem>>, vector<256x1xf32>
    tpu.vector_store %arg6[%c0_19, %c0_20], %17 {strides = array<i32>} : memref<256x1xf32, #tpu.memory_space<vmem>>, vector<256x1xf32>,
    %c1_i32 = arith.constant 1 : i32
    %31 = arith.cmpi eq, %arg1, %c1_i32 : i32
    %32 = arith.extui %31 : i1 to i32
    %c0_i32_21 = arith.constant 0 : i32
    %33 = arith.cmpi ne, %32, %c0_i32_21 : i32
    scf.if %33 {
      %c0_42 = arith.constant 0 : index
      %c0_43 = arith.constant 0 : index
      %80 = vector.load %arg6[%c0_42, %c0_43] : memref<256x1xf32, #tpu.memory_space<vmem>>, vector<256x1xf32>
      %c0_44 = arith.constant 0 : index
      %c0_45 = arith.constant 0 : index
      %81 = vector.load %arg7[%c0_44, %c0_45] : memref<256x1xf32, #tpu.memory_space<vmem>>, vector<256x1xf32>
      %82 = math.log %81 : vector<256x1xf32>
      %83 = arith.addf %80, %82 : vector<256x1xf32>
      %c0_46 = arith.constant 0 : index
      %c0_47 = arith.constant 0 : index
      %84 = vector.load %arg10[%c0_46, %c0_47] : memref<1x1xf32, #tpu.memory_space<vmem>>, vector<1x1xf32>
      %cst_48 = arith.constant dense<0.000000e+00> : vector<1xf32>
      %85 = vector.multi_reduction <add>, %83, %cst_48 [0] : vector<256x1xf32> to vector<1xf32>
      %86 = vector.shape_cast %85 : vector<1xf32> to vector<1x1xf32>
      %87 = arith.addf %84, %86 : vector<1x1xf32>
      %c0_49 = arith.constant 0 : index
      %c0_50 = arith.constant 0 : index
      %88 = vector.load %arg10[%c0_49, %c0_50] : memref<1x1xf32, #tpu.memory_space<vmem>>, vector<1x1xf32>
      tpu.vector_store %arg10[%c0_49, %c0_50], %87 {strides = array<i32>} : memref<1x1xf32, #tpu.memory_space<vmem>>, vector<1x1xf32>,
    } else {
    }
    %c0_i32_22 = arith.constant 0 : i32
    %34 = arith.cmpi eq, %arg0, %c0_i32_22 : i32
    %35 = arith.extui %34 : i1 to i32
    %c0_i32_23 = arith.constant 0 : i32
    %36 = arith.cmpi ne, %35, %c0_i32_23 : i32
    scf.if %36 {
      %cst_42 = arith.constant -1.000000e+30 : f32
      %80 = vector.broadcast %cst_42 : f32 to vector<1x128xf32>
      %81 = arith.index_cast %arg1 : i32 to index
      %c0_43 = arith.constant 0 : index
      %c0_44 = arith.constant 0 : index
      %82 = vector.load %arg8[%81, %c0_43, %c0_44] : memref<2x1x128xf32, #tpu.memory_space<vmem>>, vector<1x1x128xf32>
      %83 = vector.shape_cast %82 : vector<1x1x128xf32> to vector<1x128xf32>
      %84 = vector.shape_cast %80 : vector<1x128xf32> to vector<1x1x128xf32>
      tpu.vector_store %arg8[%81, %c0_43, %c0_44], %84 {strides = array<i32>} : memref<2x1x128xf32, #tpu.memory_space<vmem>>, vector<1x1x128xf32>,
      %cst_45 = arith.constant 0.000000e+00 : f32
      %85 = vector.broadcast %cst_45 : f32 to vector<1x128xf32>
      %86 = arith.index_cast %arg1 : i32 to index
      %c0_46 = arith.constant 0 : index
      %c0_47 = arith.constant 0 : index
      %87 = vector.load %arg9[%86, %c0_46, %c0_47] : memref<2x1x128xf32, #tpu.memory_space<vmem>>, vector<1x1x128xf32>
      %88 = vector.shape_cast %87 : vector<1x1x128xf32> to vector<1x128xf32>
      %89 = vector.shape_cast %85 : vector<1x128xf32> to vector<1x1x128xf32>
      tpu.vector_store %arg9[%86, %c0_46, %c0_47], %89 {strides = array<i32>} : memref<2x1x128xf32, #tpu.memory_space<vmem>>, vector<1x1x128xf32>,
    } else {
    }
    %37 = arith.index_cast %arg1 : i32 to index
    %c0_24 = arith.constant 0 : index
    %c0_25 = arith.constant 0 : index
    %38 = vector.load %arg8[%37, %c0_24, %c0_25] : memref<2x1x128xf32, #tpu.memory_space<vmem>>, vector<1x1x128xf32>
    %39 = vector.shape_cast %38 : vector<1x1x128xf32> to vector<1x128xf32>
    %cst_26 = arith.constant dense<0xFF800000> : vector<128xf32>
    %40 = vector.multi_reduction <maximumf>, %5, %cst_26 [0] : vector<256x128xf32> to vector<128xf32>
    %41 = vector.shape_cast %40 : vector<128xf32> to vector<1x128xf32>
    %42 = arith.maximumf %39, %41 : vector<1x128xf32>
    %43 = arith.index_cast %arg1 : i32 to index
    %c0_27 = arith.constant 0 : index
    %c0_28 = arith.constant 0 : index
    %44 = vector.load %arg9[%43, %c0_27, %c0_28] : memref<2x1x128xf32, #tpu.memory_space<vmem>>, vector<1x1x128xf32>
    %45 = vector.shape_cast %44 : vector<1x1x128xf32> to vector<1x128xf32>
    %46 = arith.subf %39, %42 : vector<1x128xf32>
    %47 = math.exp %46 : vector<1x128xf32>
    %48 = arith.mulf %45, %47 : vector<1x128xf32>
    %49 = vector.broadcast %42 : vector<1x128xf32> to vector<256x128xf32>
    %50 = arith.subf %5, %49 : vector<256x128xf32>
    %51 = math.exp %50 : vector<256x128xf32>
    %cst_29 = arith.constant dense<0.000000e+00> : vector<128xf32>
    %52 = vector.multi_reduction <add>, %51, %cst_29 [0] : vector<256x128xf32> to vector<128xf32>
    %53 = vector.shape_cast %52 : vector<128xf32> to vector<1x128xf32>
    %54 = arith.addf %48, %53 : vector<1x128xf32>
    %55 = arith.index_cast %arg1 : i32 to index
    %c0_30 = arith.constant 0 : index
    %c0_31 = arith.constant 0 : index
    %56 = vector.load %arg8[%55, %c0_30, %c0_31] : memref<2x1x128xf32, #tpu.memory_space<vmem>>, vector<1x1x128xf32>
    %57 = vector.shape_cast %56 : vector<1x1x128xf32> to vector<1x128xf32>
    %58 = vector.shape_cast %42 : vector<1x128xf32> to vector<1x1x128xf32>
    tpu.vector_store %arg8[%55, %c0_30, %c0_31], %58 {strides = array<i32>} : memref<2x1x128xf32, #tpu.memory_space<vmem>>, vector<1x1x128xf32>,
    %59 = arith.index_cast %arg1 : i32 to index
    %c0_32 = arith.constant 0 : index
    %c0_33 = arith.constant 0 : index
    %60 = vector.load %arg9[%59, %c0_32, %c0_33] : memref<2x1x128xf32, #tpu.memory_space<vmem>>, vector<1x1x128xf32>
    %61 = vector.shape_cast %60 : vector<1x1x128xf32> to vector<1x128xf32>
    %62 = vector.shape_cast %54 : vector<1x128xf32> to vector<1x1x128xf32>
    tpu.vector_store %arg9[%59, %c0_32, %c0_33], %62 {strides = array<i32>} : memref<2x1x128xf32, #tpu.memory_space<vmem>>, vector<1x1x128xf32>,
    %c0_i32_34 = arith.constant 0 : i32
    %63 = arith.cmpi eq, %arg0, %c0_i32_34 : i32
    %64 = arith.extui %63 : i1 to i32
    %c0_i32_35 = arith.constant 0 : i32
    %65 = arith.cmpi ne, %64, %c0_i32_35 : i32
    scf.if %65 {
      %80 = math.log %54 : vector<1x128xf32>
      %81 = arith.addf %42, %80 : vector<1x128xf32>
      %c0_42 = arith.constant 0 : index
      %c0_43 = arith.constant 0 : index
      %82 = vector.load %arg11[%c0_42, %c0_43] : memref<1x1xf32, #tpu.memory_space<vmem>>, vector<1x1xf32>
      %cst_44 = arith.constant dense<0.000000e+00> : vector<1xf32>
      %83 = vector.multi_reduction <add>, %81, %cst_44 [1] : vector<1x128xf32> to vector<1xf32>
      %84 = vector.shape_cast %83 : vector<1xf32> to vector<1x1xf32>
      %85 = arith.addf %82, %84 : vector<1x1xf32>
      %c0_45 = arith.constant 0 : index
      %c0_46 = arith.constant 0 : index
      %86 = vector.load %arg11[%c0_45, %c0_46] : memref<1x1xf32, #tpu.memory_space<vmem>>, vector<1x1xf32>
      tpu.vector_store %arg11[%c0_45, %c0_46], %85 {strides = array<i32>} : memref<1x1xf32, #tpu.memory_space<vmem>>, vector<1x1xf32>,
    } else {
    }
    %c256_i32 = arith.constant 256 : i32
    %66 = arith.muli %arg0, %c256_i32 : i32
    %c128_i32 = arith.constant 128 : i32
    %67 = arith.muli %arg1, %c128_i32 : i32
    %c128_i32_36 = arith.constant 128 : i32
    %68 = arith.addi %67, %c128_i32_36 : i32
    %69 = arith.cmpi sgt, %68, %66 : i32
    %c256_i32_37 = arith.constant 256 : i32
    %70 = arith.addi %66, %c256_i32_37 : i32
    %71 = arith.cmpi slt, %67, %70 : i32
    %72 = arith.andi %69, %71 : i1
    %73 = arith.extui %72 : i1 to i32
    %c0_i32_38 = arith.constant 0 : i32
    %74 = arith.cmpi ne, %73, %c0_i32_38 : i32
    scf.if %74 {
      %80 = tpu.iota {dimensions = array<i32: 0>} : vector<256x128xi32>
      %81 = vector.broadcast %66 : i32 to vector<256x128xi32>
      %82 = arith.addi %81, %80 : vector<256x128xi32>
      %83 = tpu.iota {dimensions = array<i32: 1>} : vector<256x128xi32>
      %84 = vector.broadcast %67 : i32 to vector<256x128xi32>
      %85 = arith.addi %84, %83 : vector<256x128xi32>
      %86 = arith.cmpi eq, %82, %85 : vector<256x128xi32>
      %cst_42 = arith.constant 0.000000e+00 : f32
      %87 = vector.broadcast %cst_42 : f32 to vector<256x128xf32>
      %88 = arith.select %86, %5, %87 : vector<256x128xi1>, vector<256x128xf32>
      %cst_43 = arith.constant dense<0.000000e+00> : vector<256xf32>
      %89 = vector.multi_reduction <add>, %88, %cst_43 [1] : vector<256x128xf32> to vector<256xf32>
      %90 = vector.shape_cast %89 : vector<256xf32> to vector<256x1xf32>
      %c0_44 = arith.constant 0 : index
      %c0_45 = arith.constant 0 : index
      %91 = vector.load %arg12[%c0_44, %c0_45] : memref<1x1xf32, #tpu.memory_space<vmem>>, vector<1x1xf32>
      %cst_46 = arith.constant dense<0.000000e+00> : vector<1xf32>
      %92 = vector.multi_reduction <add>, %90, %cst_46 [0] : vector<256x1xf32> to vector<1xf32>
      %93 = vector.shape_cast %92 : vector<1xf32> to vector<1x1xf32>
      %94 = arith.addf %91, %93 : vector<1x1xf32>
      %c0_47 = arith.constant 0 : index
      %c0_48 = arith.constant 0 : index
      %95 = vector.load %arg12[%c0_47, %c0_48] : memref<1x1xf32, #tpu.memory_space<vmem>>, vector<1x1xf32>
      tpu.vector_store %arg12[%c0_47, %c0_48], %94 {strides = array<i32>} : memref<1x1xf32, #tpu.memory_space<vmem>>, vector<1x1xf32>,
    } else {
    }
    %c0_i32_39 = arith.constant 0 : i32
    %75 = arith.cmpi eq, %arg0, %c0_i32_39 : i32
    %c1_i32_40 = arith.constant 1 : i32
    %76 = arith.cmpi eq, %arg1, %c1_i32_40 : i32
    %77 = arith.andi %75, %76 : i1
    %78 = arith.extui %77 : i1 to i32
    %c0_i32_41 = arith.constant 0 : i32
    %79 = arith.cmpi ne, %78, %c0_i32_41 : i32
    scf.if %79 {
      %c0_42 = arith.constant 0 : index
      %c0_43 = arith.constant 0 : index
      %80 = vector.load %arg10[%c0_42, %c0_43] : memref<1x1xf32, #tpu.memory_space<vmem>>, vector<1x1xf32>
      %c0_44 = arith.constant 0 : index
      %c0_45 = arith.constant 0 : index
      %81 = vector.load %arg11[%c0_44, %c0_45] : memref<1x1xf32, #tpu.memory_space<vmem>>, vector<1x1xf32>
      %82 = arith.addf %80, %81 : vector<1x1xf32>
      %c0_46 = arith.constant 0 : index
      %c0_47 = arith.constant 0 : index
      %83 = vector.load %arg12[%c0_46, %c0_47] : memref<1x1xf32, #tpu.memory_space<vmem>>, vector<1x1xf32>
      %cst_48 = arith.constant 2.000000e+00 : f32
      %84 = vector.broadcast %cst_48 : f32 to vector<1x1xf32>
      %85 = arith.mulf %84, %83 : vector<1x1xf32>
      %86 = arith.subf %82, %85 : vector<1x1xf32>
      %cst_49 = arith.constant 5.120000e+02 : f32
      %87 = vector.broadcast %cst_49 : f32 to vector<1x1xf32>
      %88 = arith.divf %86, %87 : vector<1x1xf32>
      %c0_50 = arith.constant 0 : index
      %c0_51 = arith.constant 0 : index
      %89 = vector.load %arg5[%c0_50, %c0_51] : memref<1x1xf32, #tpu.memory_space<vmem>>, vector<1x1xf32>
      tpu.vector_store %arg5[%c0_50, %c0_51], %88 {strides = array<i32>} : memref<1x1xf32, #tpu.memory_space<vmem>>, vector<1x1xf32>,
    } else {
    }
    return
  }
  func.func @transform_0(%arg0: i32, %arg1: i32) -> (i32, i32) {
    %c0_i32 = arith.constant 0 : i32
    %c0_i32_0 = arith.constant 0 : i32
    %c0_i32_1 = arith.constant 0 : i32
    return %c0_i32, %c0_i32_0 : i32, i32
  }
  func.func @transform_1(%arg0: i32, %arg1: i32) -> (i32, i32) {
    %c0_i32 = arith.constant 0 : i32
    %c0_i32_0 = arith.constant 0 : i32
    return %arg0, %c0_i32 : i32, i32
  }
  func.func @transform_2(%arg0: i32, %arg1: i32) -> (i32, i32) {
    %c0_i32 = arith.constant 0 : i32
    %c0_i32_0 = arith.constant 0 : i32
    return %arg1, %c0_i32 : i32, i32
  }
  func.func @transform_3(%arg0: i32, %arg1: i32) -> (i32, i32) {
    %c0_i32 = arith.constant 0 : i32
    %c0_i32_0 = arith.constant 0 : i32
    %c0_i32_1 = arith.constant 0 : i32
    return %c0_i32, %c0_i32_0 : i32, i32
  }
}

module attributes {stable_mosaic.version = 11 : i64} {
  func.func @kernel(%arg0: i32, %arg1: i32, %arg2: memref<1x1xf32, #tpu.memory_space<smem>>, %arg3: memref<256x128xbf16, #tpu.memory_space<vmem>>, %arg4: memref<128x128xbf16, #tpu.memory_space<vmem>>, %arg5: memref<1x1xf32, #tpu.memory_space<vmem>>, %arg6: memref<256x1xf32, #tpu.memory_space<vmem>>, %arg7: memref<256x1xf32, #tpu.memory_space<vmem>>, %arg8: memref<2x1x128xf32, #tpu.memory_space<vmem>>, %arg9: memref<2x1x128xf32, #tpu.memory_space<vmem>>, %arg10: memref<1x1xf32, #tpu.memory_space<vmem>>, %arg11: memref<1x1xf32, #tpu.memory_space<vmem>>, %arg12: memref<1x1xf32, #tpu.memory_space<vmem>>) attributes {dimension_semantics = [#tpu.dimension_semantics<arbitrary>, #tpu.dimension_semantics<arbitrary>], iteration_bounds = array<i64: 1, 2>, scalar_prefetch = 0 : i64, scratch_operands = 7 : i64, tpu.core_type = #tpu.core_type<tc>, window_params = [{transform_indices = @transform_0, window_bounds = array<i64: 1, 1>}, {transform_indices = @transform_1, window_bounds = array<i64: 256, 128>}, {transform_indices = @transform_2, window_bounds = array<i64: 128, 128>}, {pipeline_mode = #tpu.pipeline_mode<synchronous>, transform_indices = @transform_3, window_bounds = array<i64: 1, 1>}]} {
    %c0 = arith.constant 0 : index
    %c0_0 = arith.constant 0 : index
    %0 = memref.load %arg2[%c0, %c0_0] : memref<1x1xf32, #tpu.memory_space<smem>>
    %c0_1 = arith.constant 0 : index
    %c0_2 = arith.constant 0 : index
    %1 = vector.load %arg3[%c0_1, %c0_2] : memref<256x128xbf16, #tpu.memory_space<vmem>>, vector<256x128xbf16>
    %c0_3 = arith.constant 0 : index
    %c0_4 = arith.constant 0 : index
    %2 = vector.load %arg4[%c0_3, %c0_4] : memref<128x128xbf16, #tpu.memory_space<vmem>>, vector<128x128xbf16>
    %cst = arith.constant dense<0.000000e+00> : vector<256x128xf32>
    %3 = tpu.matmul %1, %2, %cst {dimension_numbers = #tpu.dot_dimension_numbers<[1], [1], [0], [0], [0, 0, 1, 0], [], []>} : vector<256x128xbf16>, vector<128x128xbf16>, vector<256x128xf32> -> vector<256x128xf32>
    %4 = vector.broadcast %0 : f32 to vector<256x128xf32>
    %5 = arith.mulf %3, %4 : vector<256x128xf32>
    %c0_i32 = arith.constant 0 : i32
    %6 = arith.cmpi eq, %arg0, %c0_i32 : i32
    %c0_i32_5 = arith.constant 0 : i32
    %7 = arith.cmpi eq, %arg1, %c0_i32_5 : i32
    %8 = arith.andi %6, %7 : i1
    %9 = arith.extui %8 : i1 to i32
    %c0_i32_6 = arith.constant 0 : i32
    %10 = arith.cmpi ne, %9, %c0_i32_6 : i32
    scf.if %10 {
      %cst_42 = arith.constant 0.000000e+00 : f32
      %80 = vector.broadcast %cst_42 : f32 to vector<1x1xf32>
      %c0_43 = arith.constant 0 : index
      %c0_44 = arith.constant 0 : index
      %81 = vector.load %arg10[%c0_43, %c0_44] : memref<1x1xf32, #tpu.memory_space<vmem>>, vector<1x1xf32>
      tpu.vector_store %arg10[%c0_43, %c0_44], %80 {strides = array<i32>} : memref<1x1xf32, #tpu.memory_space<vmem>>, vector<1x1xf32>,
      %cst_45 = arith.constant 0.000000e+00 : f32
      %82 = vector.broadcast %cst_45 : f32 to vector<1x1xf32>
      %c0_46 = arith.constant 0 : index
      %c0_47 = arith.constant 0 : index
      %83 = vector.load %arg11[%c0_46, %c0_47] : memref<1x1xf32, #tpu.memory_space<vmem>>, vector<1x1xf32>
      tpu.vector_store %arg11[%c0_46, %c0_47], %82 {strides = array<i32>} : memref<1x1xf32, #tpu.memory_space<vmem>>, vector<1x1xf32>,
      %cst_48 = arith.constant 0.000000e+00 : f32
      %84 = vector.broadcast %cst_48 : f32 to vector<1x1xf32>
      %c0_49 = arith.constant 0 : index
      %c0_50 = arith.constant 0 : index
      %85 = vector.load %arg12[%c0_49, %c0_50] : memref<1x1xf32, #tpu.memory_space<vmem>>, vector<1x1xf32>
      tpu.vector_store %arg12[%c0_49, %c0_50], %84 {strides = array<i32>} : memref<1x1xf32, #tpu.memory_space<vmem>>, vector<1x1xf32>,
    } else {
    }
    %c0_i32_7 = arith.constant 0 : i32
    %11 = arith.cmpi eq, %arg1, %c0_i32_7 : i32
    %12 = arith.extui %11 : i1 to i32
    %c0_i32_8 = arith.constant 0 : i32
    %13 = arith.cmpi ne, %12, %c0_i32_8 : i32
    scf.if %13 {
      %cst_42 = arith.constant -1.000000e+30 : f32
      %80 = vector.broadcast %cst_42 : f32 to vector<256x1xf32>
      %c0_43 = arith.constant 0 : index
      %c0_44 = arith.constant 0 : index
      %81 = vector.load %arg6[%c0_43, %c0_44] : memref<256x1xf32, #tpu.memory_space<vmem>>, vector<256x1xf32>
      tpu.vector_store %arg6[%c0_43, %c0_44], %80 {strides = array<i32>} : memref<256x1xf32, #tpu.memory_space<vmem>>, vector<256x1xf32>,
      %cst_45 = arith.constant 0.000000e+00 : f32
      %82 = vector.broadcast %cst_45 : f32 to vector<256x1xf32>
      %c0_46 = arith.constant 0 : index
      %c0_47 = arith.constant 0 : index
      %83 = vector.load %arg7[%c0_46, %c0_47] : memref<256x1xf32, #tpu.memory_space<vmem>>, vector<256x1xf32>
      tpu.vector_store %arg7[%c0_46, %c0_47], %82 {strides = array<i32>} : memref<256x1xf32, #tpu.memory_space<vmem>>, vector<256x1xf32>,
    } else {
    }
    %c0_9 = arith.constant 0 : index
    %c0_10 = arith.constant 0 : index
    %14 = vector.load %arg6[%c0_9, %c0_10] : memref<256x1xf32, #tpu.memory_space<vmem>>, vector<256x1xf32>
    %cst_11 = arith.constant dense<0xFF800000> : vector<256xf32>
    %15 = vector.multi_reduction <maximumf>, %5, %cst_11 [1] : vector<256x128xf32> to vector<256xf32>
    %16 = vector.shape_cast %15 : vector<256xf32> to vector<256x1xf32>
    %17 = arith.maximumf %14, %16 : vector<256x1xf32>
    %c0_12 = arith.constant 0 : index
    %c0_13 = arith.constant 0 : index
    %18 = vector.load %arg7[%c0_12, %c0_13] : memref<256x1xf32, #tpu.memory_space<vmem>>, vector<256x1xf32>
    %c0_14 = arith.constant 0 : index
    %c0_15 = arith.constant 0 : index
    %19 = vector.load %arg6[%c0_14, %c0_15] : memref<256x1xf32, #tpu.memory_space<vmem>>, vector<256x1xf32>
    %20 = arith.subf %19, %17 : vector<256x1xf32>
    %21 = math.exp %20 : vector<256x1xf32>
    %22 = arith.mulf %18, %21 : vector<256x1xf32>
    %23 = vector.broadcast %17 : vector<256x1xf32> to vector<256x128xf32>
    %24 = arith.subf %5, %23 : vector<256x128xf32>
    %25 = math.exp %24 : vector<256x128xf32>
    %cst_16 = arith.constant dense<0.000000e+00> : vector<256xf32>
    %26 = vector.multi_reduction <add>, %25, %cst_16 [1] : vector<256x128xf32> to vector<256xf32>
    %27 = vector.shape_cast %26 : vector<256xf32> to vector<256x1xf32>
    %28 = arith.addf %22, %27 : vector<256x1xf32>
    %c0_17 = arith.constant 0 : index
    %c0_18 = arith.constant 0 : index
    %29 = vector.load %arg7[%c0_17, %c0_18] : memref<256x1xf32, #tpu.memory_space<vmem>>, vector<256x1xf32>
    tpu.vector_store %arg7[%c0_17, %c0_18], %28 {strides = array<i32>} : memref<256x1xf32, #tpu.memory_space<vmem>>, vector<256x1xf32>,
    %c0_19 = arith.constant 0 : index
    %c0_20 = arith.constant 0 : index
    %30 = vector.load %arg6[%c0_19, %c0_20] : memref<256x1xf32, #tpu.memory_space<vmem>>, vector<256x1xf32>
    tpu.vector_store %arg6[%c0_19, %c0_20], %17 {strides = array<i32>} : memref<256x1xf32, #tpu.memory_space<vmem>>, vector<256x1xf32>,
    %c1_i32 = arith.constant 1 : i32
    %31 = arith.cmpi eq, %arg1, %c1_i32 : i32
    %32 = arith.extui %31 : i1 to i32
    %c0_i32_21 = arith.constant 0 : i32
    %33 = arith.cmpi ne, %32, %c0_i32_21 : i32
    scf.if %33 {
      %c0_42 = arith.constant 0 : index
      %c0_43 = arith.constant 0 : index
      %80 = vector.load %arg6[%c0_42, %c0_43] : memref<256x1xf32, #tpu.memory_space<vmem>>, vector<256x1xf32>
      %c0_44 = arith.constant 0 : index
      %c0_45 = arith.constant 0 : index
      %81 = vector.load %arg7[%c0_44, %c0_45] : memref<256x1xf32, #tpu.memory_space<vmem>>, vector<256x1xf32>
      %82 = math.log %81 : vector<256x1xf32>
      %83 = arith.addf %80, %82 : vector<256x1xf32>
      %c0_46 = arith.constant 0 : index
      %c0_47 = arith.constant 0 : index
      %84 = vector.load %arg10[%c0_46, %c0_47] : memref<1x1xf32, #tpu.memory_space<vmem>>, vector<1x1xf32>
      %cst_48 = arith.constant dense<0.000000e+00> : vector<1xf32>
      %85 = vector.multi_reduction <add>, %83, %cst_48 [0] : vector<256x1xf32> to vector<1xf32>
      %86 = vector.shape_cast %85 : vector<1xf32> to vector<1x1xf32>
      %87 = arith.addf %84, %86 : vector<1x1xf32>
      %c0_49 = arith.constant 0 : index
      %c0_50 = arith.constant 0 : index
      %88 = vector.load %arg10[%c0_49, %c0_50] : memref<1x1xf32, #tpu.memory_space<vmem>>, vector<1x1xf32>
      tpu.vector_store %arg10[%c0_49, %c0_50], %87 {strides = array<i32>} : memref<1x1xf32, #tpu.memory_space<vmem>>, vector<1x1xf32>,
    } else {
    }
    %c0_i32_22 = arith.constant 0 : i32
    %34 = arith.cmpi eq, %arg0, %c0_i32_22 : i32
    %35 = arith.extui %34 : i1 to i32
    %c0_i32_23 = arith.constant 0 : i32
    %36 = arith.cmpi ne, %35, %c0_i32_23 : i32
    scf.if %36 {
      %cst_42 = arith.constant -1.000000e+30 : f32
      %80 = vector.broadcast %cst_42 : f32 to vector<1x128xf32>
      %81 = arith.index_cast %arg1 : i32 to index
      %c0_43 = arith.constant 0 : index
      %c0_44 = arith.constant 0 : index
      %82 = vector.load %arg8[%81, %c0_43, %c0_44] : memref<2x1x128xf32, #tpu.memory_space<vmem>>, vector<1x1x128xf32>
      %83 = vector.shape_cast %82 : vector<1x1x128xf32> to vector<1x128xf32>
      %84 = vector.shape_cast %80 : vector<1x128xf32> to vector<1x1x128xf32>
      tpu.vector_store %arg8[%81, %c0_43, %c0_44], %84 {strides = array<i32>} : memref<2x1x128xf32, #tpu.memory_space<vmem>>, vector<1x1x128xf32>,
      %cst_45 = arith.constant 0.000000e+00 : f32
      %85 = vector.broadcast %cst_45 : f32 to vector<1x128xf32>
      %86 = arith.index_cast %arg1 : i32 to index
      %c0_46 = arith.constant 0 : index
      %c0_47 = arith.constant 0 : index
      %87 = vector.load %arg9[%86, %c0_46, %c0_47] : memref<2x1x128xf32, #tpu.memory_space<vmem>>, vector<1x1x128xf32>
      %88 = vector.shape_cast %87 : vector<1x1x128xf32> to vector<1x128xf32>
      %89 = vector.shape_cast %85 : vector<1x128xf32> to vector<1x1x128xf32>
      tpu.vector_store %arg9[%86, %c0_46, %c0_47], %89 {strides = array<i32>} : memref<2x1x128xf32, #tpu.memory_space<vmem>>, vector<1x1x128xf32>,
    } else {
    }
    %37 = arith.index_cast %arg1 : i32 to index
    %c0_24 = arith.constant 0 : index
    %c0_25 = arith.constant 0 : index
    %38 = vector.load %arg8[%37, %c0_24, %c0_25] : memref<2x1x128xf32, #tpu.memory_space<vmem>>, vector<1x1x128xf32>
    %39 = vector.shape_cast %38 : vector<1x1x128xf32> to vector<1x128xf32>
    %cst_26 = arith.constant dense<0xFF800000> : vector<128xf32>
    %40 = vector.multi_reduction <maximumf>, %5, %cst_26 [0] : vector<256x128xf32> to vector<128xf32>
    %41 = vector.shape_cast %40 : vector<128xf32> to vector<1x128xf32>
    %42 = arith.maximumf %39, %41 : vector<1x128xf32>
    %43 = arith.index_cast %arg1 : i32 to index
    %c0_27 = arith.constant 0 : index
    %c0_28 = arith.constant 0 : index
    %44 = vector.load %arg9[%43, %c0_27, %c0_28] : memref<2x1x128xf32, #tpu.memory_space<vmem>>, vector<1x1x128xf32>
    %45 = vector.shape_cast %44 : vector<1x1x128xf32> to vector<1x128xf32>
    %46 = arith.subf %39, %42 : vector<1x128xf32>
    %47 = math.exp %46 : vector<1x128xf32>
    %48 = arith.mulf %45, %47 : vector<1x128xf32>
    %49 = vector.broadcast %42 : vector<1x128xf32> to vector<256x128xf32>
    %50 = arith.subf %5, %49 : vector<256x128xf32>
    %51 = math.exp %50 : vector<256x128xf32>
    %cst_29 = arith.constant dense<0.000000e+00> : vector<128xf32>
    %52 = vector.multi_reduction <add>, %51, %cst_29 [0] : vector<256x128xf32> to vector<128xf32>
    %53 = vector.shape_cast %52 : vector<128xf32> to vector<1x128xf32>
    %54 = arith.addf %48, %53 : vector<1x128xf32>
    %55 = arith.index_cast %arg1 : i32 to index
    %c0_30 = arith.constant 0 : index
    %c0_31 = arith.constant 0 : index
    %56 = vector.load %arg8[%55, %c0_30, %c0_31] : memref<2x1x128xf32, #tpu.memory_space<vmem>>, vector<1x1x128xf32>
    %57 = vector.shape_cast %56 : vector<1x1x128xf32> to vector<1x128xf32>
    %58 = vector.shape_cast %42 : vector<1x128xf32> to vector<1x1x128xf32>
    tpu.vector_store %arg8[%55, %c0_30, %c0_31], %58 {strides = array<i32>} : memref<2x1x128xf32, #tpu.memory_space<vmem>>, vector<1x1x128xf32>,
    %59 = arith.index_cast %arg1 : i32 to index
    %c0_32 = arith.constant 0 : index
    %c0_33 = arith.constant 0 : index
    %60 = vector.load %arg9[%59, %c0_32, %c0_33] : memref<2x1x128xf32, #tpu.memory_space<vmem>>, vector<1x1x128xf32>
    %61 = vector.shape_cast %60 : vector<1x1x128xf32> to vector<1x128xf32>
    %62 = vector.shape_cast %54 : vector<1x128xf32> to vector<1x1x128xf32>
    tpu.vector_store %arg9[%59, %c0_32, %c0_33], %62 {strides = array<i32>} : memref<2x1x128xf32, #tpu.memory_space<vmem>>, vector<1x1x128xf32>,
    %c0_i32_34 = arith.constant 0 : i32
    %63 = arith.cmpi eq, %arg0, %c0_i32_34 : i32
    %64 = arith.extui %63 : i1 to i32
    %c0_i32_35 = arith.constant 0 : i32
    %65 = arith.cmpi ne, %64, %c0_i32_35 : i32
    scf.if %65 {
      %80 = math.log %54 : vector<1x128xf32>
      %81 = arith.addf %42, %80 : vector<1x128xf32>
      %c0_42 = arith.constant 0 : index
      %c0_43 = arith.constant 0 : index
      %82 = vector.load %arg11[%c0_42, %c0_43] : memref<1x1xf32, #tpu.memory_space<vmem>>, vector<1x1xf32>
      %cst_44 = arith.constant dense<0.000000e+00> : vector<1xf32>
      %83 = vector.multi_reduction <add>, %81, %cst_44 [1] : vector<1x128xf32> to vector<1xf32>
      %84 = vector.shape_cast %83 : vector<1xf32> to vector<1x1xf32>
      %85 = arith.addf %82, %84 : vector<1x1xf32>
      %c0_45 = arith.constant 0 : index
      %c0_46 = arith.constant 0 : index
      %86 = vector.load %arg11[%c0_45, %c0_46] : memref<1x1xf32, #tpu.memory_space<vmem>>, vector<1x1xf32>
      tpu.vector_store %arg11[%c0_45, %c0_46], %85 {strides = array<i32>} : memref<1x1xf32, #tpu.memory_space<vmem>>, vector<1x1xf32>,
    } else {
    }
    %c256_i32 = arith.constant 256 : i32
    %66 = arith.muli %arg0, %c256_i32 : i32
    %c128_i32 = arith.constant 128 : i32
    %67 = arith.muli %arg1, %c128_i32 : i32
    %c128_i32_36 = arith.constant 128 : i32
    %68 = arith.addi %67, %c128_i32_36 : i32
    %69 = arith.cmpi sgt, %68, %66 : i32
    %c256_i32_37 = arith.constant 256 : i32
    %70 = arith.addi %66, %c256_i32_37 : i32
    %71 = arith.cmpi slt, %67, %70 : i32
    %72 = arith.andi %69, %71 : i1
    %73 = arith.extui %72 : i1 to i32
    %c0_i32_38 = arith.constant 0 : i32
    %74 = arith.cmpi ne, %73, %c0_i32_38 : i32
    scf.if %74 {
      %80 = tpu.iota {dimensions = array<i32: 0>} : vector<256x128xi32>
      %81 = vector.broadcast %66 : i32 to vector<256x128xi32>
      %82 = arith.addi %81, %80 : vector<256x128xi32>
      %83 = tpu.iota {dimensions = array<i32: 1>} : vector<256x128xi32>
      %84 = vector.broadcast %67 : i32 to vector<256x128xi32>
      %85 = arith.addi %84, %83 : vector<256x128xi32>
      %86 = arith.cmpi eq, %82, %85 : vector<256x128xi32>
      %cst_42 = arith.constant 0.000000e+00 : f32
      %87 = vector.broadcast %cst_42 : f32 to vector<256x128xf32>
      %88 = arith.select %86, %5, %87 : vector<256x128xi1>, vector<256x128xf32>
      %cst_43 = arith.constant dense<0.000000e+00> : vector<256xf32>
      %89 = vector.multi_reduction <add>, %88, %cst_43 [1] : vector<256x128xf32> to vector<256xf32>
      %90 = vector.shape_cast %89 : vector<256xf32> to vector<256x1xf32>
      %c0_44 = arith.constant 0 : index
      %c0_45 = arith.constant 0 : index
      %91 = vector.load %arg12[%c0_44, %c0_45] : memref<1x1xf32, #tpu.memory_space<vmem>>, vector<1x1xf32>
      %cst_46 = arith.constant dense<0.000000e+00> : vector<1xf32>
      %92 = vector.multi_reduction <add>, %90, %cst_46 [0] : vector<256x1xf32> to vector<1xf32>
      %93 = vector.shape_cast %92 : vector<1xf32> to vector<1x1xf32>
      %94 = arith.addf %91, %93 : vector<1x1xf32>
      %c0_47 = arith.constant 0 : index
      %c0_48 = arith.constant 0 : index
      %95 = vector.load %arg12[%c0_47, %c0_48] : memref<1x1xf32, #tpu.memory_space<vmem>>, vector<1x1xf32>
      tpu.vector_store %arg12[%c0_47, %c0_48], %94 {strides = array<i32>} : memref<1x1xf32, #tpu.memory_space<vmem>>, vector<1x1xf32>,
    } else {
    }
    %c0_i32_39 = arith.constant 0 : i32
    %75 = arith.cmpi eq, %arg0, %c0_i32_39 : i32
    %c1_i32_40 = arith.constant 1 : i32
    %76 = arith.cmpi eq, %arg1, %c1_i32_40 : i32
    %77 = arith.andi %75, %76 : i1
    %78 = arith.extui %77 : i1 to i32
    %c0_i32_41 = arith.constant 0 : i32
    %79 = arith.cmpi ne, %78, %c0_i32_41 : i32
    scf.if %79 {
      %c0_42 = arith.constant 0 : index
      %c0_43 = arith.constant 0 : index
      %80 = vector.load %arg10[%c0_42, %c0_43] : memref<1x1xf32, #tpu.memory_space<vmem>>, vector<1x1xf32>
      %c0_44 = arith.constant 0 : index
      %c0_45 = arith.constant 0 : index
      %81 = vector.load %arg11[%c0_44, %c0_45] : memref<1x1xf32, #tpu.memory_space<vmem>>, vector<1x1xf32>
      %82 = arith.addf %80, %81 : vector<1x1xf32>
      %c0_46 = arith.constant 0 : index
      %c0_47 = arith.constant 0 : index
      %83 = vector.load %arg12[%c0_46, %c0_47] : memref<1x1xf32, #tpu.memory_space<vmem>>, vector<1x1xf32>
      %cst_48 = arith.constant 2.000000e+00 : f32
      %84 = vector.broadcast %cst_48 : f32 to vector<1x1xf32>
      %85 = arith.mulf %84, %83 : vector<1x1xf32>
      %86 = arith.subf %82, %85 : vector<1x1xf32>
      %cst_49 = arith.constant 5.120000e+02 : f32
      %87 = vector.broadcast %cst_49 : f32 to vector<1x1xf32>
      %88 = arith.divf %86, %87 : vector<1x1xf32>
      %c0_50 = arith.constant 0 : index
      %c0_51 = arith.constant 0 : index
      %89 = vector.load %arg5[%c0_50, %c0_51] : memref<1x1xf32, #tpu.memory_space<vmem>>, vector<1x1xf32>
      tpu.vector_store %arg5[%c0_50, %c0_51], %88 {strides = array<i32>} : memref<1x1xf32, #tpu.memory_space<vmem>>, vector<1x1xf32>,
    } else {
    }
    return
  }
  func.func @transform_0(%arg0: i32, %arg1: i32) -> (i32, i32) {
    %c0_i32 = arith.constant 0 : i32
    %c0_i32_0 = arith.constant 0 : i32
    %c0_i32_1 = arith.constant 0 : i32
    return %c0_i32, %c0_i32_0 : i32, i32
  }
  func.func @transform_1(%arg0: i32, %arg1: i32) -> (i32, i32) {
    %c0_i32 = arith.constant 0 : i32
    %c0_i32_0 = arith.constant 0 : i32
    return %arg0, %c0_i32 : i32, i32
  }
  func.func @transform_2(%arg0: i32, %arg1: i32) -> (i32, i32) {
    %c0_i32 = arith.constant 0 : i32
    %c0_i32_0 = arith.constant 0 : i32
    return %arg1, %c0_i32 : i32, i32
  }
  func.func @transform_3(%arg0: i32, %arg1: i32) -> (i32, i32) {
    %c0_i32 = arith.constant 0 : i32
    %c0_i32_0 = arith.constant 0 : i32
    %c0_i32_1 = arith.constant 0 : i32
    return %c0_i32, %c0_i32_0 : i32, i32
  }
}

</mosaic_0001>

<llo_original>
// kernel: tpu_custom_call.1
$region0: #{tpu_custom_call.1}
  #allocation0 [shape = 'u32[]', space=smem, size = 0x4, offset = 0x4, fixed_abs, tag = 'smem constant byte address 0x4 - core index']
  #allocation1 [shape = 'u32[144,128]{1,0:T(1,128)}', space=vmem, size = 0x12000, scoped, tag = 'internal scratch']
  #allocation2 [shape = 'f32[256,1]{1,0:T(8,128)}', space=vmem, size = 0x20000, scoped, tag = 'scratch operand']
  #allocation3 [shape = 'f32[256,1]{1,0:T(8,128)}', space=vmem, size = 0x20000, scoped, tag = 'scratch operand']
  #allocation4 [shape = 'f32[2,1,128]{2,1,0:T(1,128)}', space=vmem, size = 0x400, scoped, tag = 'scratch operand']
  #allocation5 [shape = 'f32[2,1,128]{2,1,0:T(1,128)}', space=vmem, size = 0x400, scoped, tag = 'scratch operand']
  #allocation6 [shape = 'f32[1,1]{1,0:T(1,128)}', space=vmem, size = 0x200, scoped, tag = 'scratch operand']
  #allocation7 [shape = 'f32[1,1]{1,0:T(1,128)}', space=vmem, size = 0x200, scoped, tag = 'scratch operand']
  #allocation8 [shape = 'f32[1,1]{1,0:T(1,128)}', space=vmem, size = 0x200, scoped, tag = 'scratch operand']
  #allocation9 [shape = 'f32[1,1]{1,0:T(1,128)S(6)}', space=smem, size = 0x200, scoped, tag = 'scoped memory for tpu_custom_call.1']
  %s0 = inlined_call_operand.<no memory space> [shape: f32[1,1], index: 0, kind: input, shape index: {}]
  %s1 = inlined_call_operand.hbm [shape: bf16[256,128], index: 1, kind: input, shape index: {}]
  %s2 = inlined_call_operand.hbm [shape: bf16[256,128], index: 2, kind: input, shape index: {}]
  %s3 = inlined_call_operand.hbm [shape: f32[1,1], index: 3, kind: output, shape index: {}]
  %s4 = sld [smem:[#allocation0]]
  $region81: #{tpu_custom_call.1} parent=0
    _
  %s6 = ssub.s32 1, %s4
  %s7 = scalar_select 0, %s6, %s4
  %8 = sst [smem:[#allocation9]] %s0
  $region1: #{tpu_custom_call.1} parent=0
    #allocation10 [shape = 'u8[65536]{0}', space=vmem, size = 0x10000, scoped, tag = 'input window, operand 1, single buffered']
    #allocation11 [shape = 's32[2]{0}', space=sflag, size = 0x8, scoped, tag = 'scoped memory for tpu_custom_call.1']
    #allocation12 [shape = 's32[2]{0}', space=sflag, size = 0x8, scoped, tag = 'scoped memory for tpu_custom_call.1']
    #allocation13 [shape = 'u8[65536]{0}', space=vmem, size = 0x10000, scoped, tag = 'input window, operand 2']
    #allocation14 [shape = 's32[2]{0}', space=sflag, size = 0x8, scoped, tag = 'scoped memory for tpu_custom_call.1']
    #allocation15 [shape = 'u8[512]{0}', space=vmem, size = 0x400, scoped, tag = 'output window, operand 0, single buffered']
    %9 = vsyncpa [#allocation11], 0
    %10 = vsyncpa [#allocation14], 0
    %s11 = scalar_lea.sflag [#allocation14], 1
    %12 = vsyncpa %s11, 0
    %13 = vsyncpa [#allocation12], 0
    loop: start=0, step=1, limit=4
    $region2: #{tpu_custom_call.1} parent=1 // loop_pre_header
      _
    $region3: #{tpu_custom_call.1} parent=1 // loop_header
      %s15 = sphi 0, %s19
      %p16 = scmp.ge.s32.totalorder %s15, 4
      %s22 = sphi 0, %s34
      %s23 = sphi 0, %s30
      %s24 = sphi 0, %s22
      %s25 = sphi 0, %s23
      %s26 = sphi 0, %s24
      %s27 = sphi 0, %s25
      %s35 = sphi 0, %s35
      %s37 = sphi 0, %s35
      %s38 = sphi 0, %s37
      %s52 = sphi 0, %s38
      %s58 = sphi 0, %s60
      %s61 = sphi 0, %s58
      %s62 = sphi 0, %s61
      %s78 = sphi 0, %s62
      %s84 = sphi 0, %s86
      %s87 = sphi 0, %s84
      %s88 = sphi 0, %s87
      %s104 = sphi 0, %s88
      %s108 = sphi 0, %s108
      %s110 = sphi 0, %s108
      %s111 = sphi 0, %s110
      %s125 = sphi 0, %s111
    $region4: #{tpu_custom_call.1} parent=1 // loop_header_branch
      %18 = sbr.rel (%p16) target = $region8
    $region5: #{tpu_custom_call.1} parent=1 // loop_body
      %s20 = ssub.s32 %s15, 1
      %s21 = ssub.s32 %s15, 2
      %s28 = sadd.s32 1, %s23
      %p29 = scmp.ge.s32.totalorder %s28, 2
      %s30 = scalar_select %p29, 0, %s28
      %s31 = sadd.s32 1, %s22
      %s32 = scalar_select %p29, %s31, %s22
      %p33 = scmp.ge.s32.totalorder %s32, 1
      %s34 = scalar_select %p33, 0, %s32
      %s36 = sadd.s32 %s35, 1
      %p39 = scmp.eq.s32.totalorder %s15, 1
      %p40 = scmp.ne.s32.totalorder %s35, %s37
      %p41 = scmp.eq.s32.totalorder %s15, 0
      %p42 = por %p40, %p41
      %p43 = scmp.ne.s32.totalorder %s35, %s37
      %p44 = scmp.eq.s32.totalorder %s20, 1
      %p45 = por %p43, %p44
      %p46 = scmp.ne.s32.totalorder %s37, %s38
      %p47 = scmp.eq.s32.totalorder %s20, 0
      %p48 = por %p46, %p47
      %p49 = scmp.ne.s32.totalorder %s37, %s38
      %p50 = scmp.eq.s32.totalorder %s21, 1
      %p51 = por %p49, %p50
      %p53 = scmp.ne.s32.totalorder %s38, %s52
      %p54 = scmp.eq.s32.totalorder %s21, 0
      %p55 = por %p53, %p54
      %s56 = ssub.s32 %s22, %s34
      %p57 = scmp.eq.s32.totalorder %s56, 0
      %s59 = sadd.s32 %s58, 1
      %s60 = scalar_select %p57, %s58, %s59
      %p63 = pneg %p57
      %p64 = scmp.eq.s32.totalorder %s15, 1
      %p65 = por %p63, %p64
      %p66 = scmp.ne.s32.totalorder %s58, %s61
      %p67 = scmp.eq.s32.totalorder %s15, 0
      %p68 = por %p66, %p67
      %p69 = scmp.ne.s32.totalorder %s58, %s61
      %p70 = scmp.eq.s32.totalorder %s20, 1
      %p71 = por %p69, %p70
      %p72 = scmp.ne.s32.totalorder %s61, %s62
      %p73 = scmp.eq.s32.totalorder %s20, 0
      %p74 = por %p72, %p73
      %p75 = scmp.ne.s32.totalorder %s61, %s62
      %p76 = scmp.eq.s32.totalorder %s21, 1
      %p77 = por %p75, %p76
      %p79 = scmp.ne.s32.totalorder %s62, %s78
      %p80 = scmp.eq.s32.totalorder %s21, 0
      %p81 = por %p79, %p80
      %s82 = ssub.s32 %s23, %s30
      %p83 = scmp.eq.s32.totalorder %s82, 0
      %s85 = sadd.s32 %s84, 1
      %s86 = scalar_select %p83, %s84, %s85
      %p89 = pneg %p83
      %p90 = scmp.eq.s32.totalorder %s15, 1
      %p91 = por %p89, %p90
      %p92 = scmp.ne.s32.totalorder %s84, %s87
      %p93 = scmp.eq.s32.totalorder %s15, 0
      %p94 = por %p92, %p93
      %p95 = scmp.ne.s32.totalorder %s84, %s87
      %p96 = scmp.eq.s32.totalorder %s20, 1
      %p97 = por %p95, %p96
      %p98 = scmp.ne.s32.totalorder %s87, %s88
      %p99 = scmp.eq.s32.totalorder %s20, 0
      %p100 = por %p98, %p99
      %p101 = scmp.ne.s32.totalorder %s87, %s88
      %p102 = scmp.eq.s32.totalorder %s21, 1
      %p103 = por %p101, %p102
      %p105 = scmp.ne.s32.totalorder %s88, %s104
      %p106 = scmp.eq.s32.totalorder %s21, 0
      %p107 = por %p105, %p106
      %s109 = sadd.s32 %s108, 1
      %p112 = scmp.eq.s32.totalorder %s15, 1
      %p113 = scmp.ne.s32.totalorder %s108, %s110
      %p114 = scmp.eq.s32.totalorder %s15, 0
      %p115 = por %p113, %p114
      %p116 = scmp.ne.s32.totalorder %s108, %s110
      %p117 = scmp.eq.s32.totalorder %s20, 1
      %p118 = por %p116, %p117
      %p119 = scmp.ne.s32.totalorder %s110, %s111
      %p120 = scmp.eq.s32.totalorder %s20, 0
      %p121 = por %p119, %p120
      %p122 = scmp.ne.s32.totalorder %s110, %s111
      %p123 = scmp.eq.s32.totalorder %s21, 1
      %p124 = por %p122, %p123
      %p126 = scmp.ne.s32.totalorder %s111, %s125
      %p127 = scmp.eq.s32.totalorder %s21, 0
      %p128 = por %p126, %p127
      %p129 = scmp.le.s32.totalorder 1, %s15
      %p130 = scmp.lt.s32.totalorder %s15, 3
      %p131 = pnand %p129, %p130
      %p132 = pneg %p131
      // Predicated region
      $region9: #{tpu_custom_call.1} parent=5 // pred_check
        _
      $region10: #{tpu_custom_call.1} parent=5 // pred_check_branch
        %134 = sbr.rel (%p131) target = $region12
      $region11: #{tpu_custom_call.1} parent=5 // pred_region
        %s135 = ssub.s32 %s15, 1
        // Predicated region
        $region13: #{tpu_custom_call.1} parent=11 // pred_check
          %p136 = pneg %p48
        $region14: #{tpu_custom_call.1} parent=11 // pred_check_branch
          %138 = sbr.rel (%p136) target = $region16
        $region15: #{tpu_custom_call.1} parent=11 // pred_region
          _
        $region16: #{tpu_custom_call.1} parent=11 // pred_fallthru
          _
        // Predicated region
        $region17: #{tpu_custom_call.1} parent=11 // pred_check
          %p139 = pneg %p74
        $region18: #{tpu_custom_call.1} parent=11 // pred_check_branch
          %141 = sbr.rel (%p139) target = $region20
        $region19: #{tpu_custom_call.1} parent=11 // pred_region
          %s142 = smul.u32 32, %s24
          %s144 = ssub.s32 2048, 2048
          %145 = vsyncadd [#allocation11], %s144
          %s146 = smul.addr %s142, 64
          %s147 = scalar_lea.hbm %s1, %s146
          %s148 = sshll.u32 [#allocation10], 4
          %s149 = int_to_ptr.vmem [resolvable:$true] %s148
          %154 = dma.hbm_to_vmem [thread:$0]  %s147, 2048, %s149, [#allocation11], 64, 64, 4
        $region20: #{tpu_custom_call.1} parent=11 // pred_fallthru
          _
      $region12: #{tpu_custom_call.1} parent=5 // pred_fallthru
        _
      %p155 = scmp.lt.s32.totalorder %s15, 2
      // Predicated region
      $region21: #{tpu_custom_call.1} parent=5 // pred_check
        %p156 = pneg %p155
      $region22: #{tpu_custom_call.1} parent=5 // pred_check_branch
        %158 = sbr.rel (%p156) target = $region24
      $region23: #{tpu_custom_call.1} parent=5 // pred_region
        // Predicated region
        $region25: #{tpu_custom_call.1} parent=23 // pred_check
          %p159 = pneg %p94
        $region26: #{tpu_custom_call.1} parent=23 // pred_check_branch
          %161 = sbr.rel (%p159) target = $region28
        $region27: #{tpu_custom_call.1} parent=23 // pred_region
          %s162 = sand.u32 %s84, 1
          %s163 = scalar_lea.sflag [#allocation14], %s162
          %s164 = sand.u32 %s84, 1
          %s165 = smul.addr %s164, 64
          %s166 = scalar_lea.vmem [#allocation13], %s165
          %s167 = smul.u32 16, %s23
          %s169 = ssub.s32 1024, 1024
          %170 = vsyncadd %s163, %s169
          %s171 = smul.addr %s167, 64
          %s172 = scalar_lea.hbm %s2, %s171
          %s173 = sshll.u32 %s166, 4
          %s174 = int_to_ptr.vmem [resolvable:$true] %s173
          %179 = dma.hbm_to_vmem [thread:$0]  %s172, 1024, %s174, %s163, 64, 64, 4
        $region28: #{tpu_custom_call.1} parent=23 // pred_fallthru
          _
      $region24: #{tpu_custom_call.1} parent=5 // pred_fallthru
        _
      %p180 = scmp.le.s32.totalorder 1, %s15
      %p181 = scmp.lt.s32.totalorder %s15, 3
      %p182 = pnand %p180, %p181
      %p183 = pneg %p182
      // Predicated region
      $region29: #{tpu_custom_call.1} parent=5 // pred_check
        _
      $region30: #{tpu_custom_call.1} parent=5 // pred_check_branch
        %185 = sbr.rel (%p182) target = $region32
      $region31: #{tpu_custom_call.1} parent=5 // pred_region
        %s186 = ssub.s32 %s15, 1
        // Predicated region
        $region33: #{tpu_custom_call.1} parent=31 // pred_check
          %p187 = pneg %p74
        $region34: #{tpu_custom_call.1} parent=31 // pred_check_branch
          %189 = sbr.rel (%p187) target = $region36
        $region35: #{tpu_custom_call.1} parent=31 // pred_region
          %190 = dma.done [#allocation11], 2048
        $region36: #{tpu_custom_call.1} parent=31 // pred_fallthru
          _
        %s191 = sand.u32 %s87, 1
        %s192 = scalar_lea.sflag [#allocation14], %s191
        %s193 = sand.u32 %s87, 1
        %s194 = smul.addr %s193, 64
        %s195 = scalar_lea.vmem [#allocation13], %s194
        // Predicated region
        $region37: #{tpu_custom_call.1} parent=31 // pred_check
          %p196 = pneg %p100
        $region38: #{tpu_custom_call.1} parent=31 // pred_check_branch
          %198 = sbr.rel (%p196) target = $region40
        $region39: #{tpu_custom_call.1} parent=31 // pred_region
          %199 = dma.done %s192, 1024
        $region40: #{tpu_custom_call.1} parent=31 // pred_fallthru
          _
        %p200 = pneg %p48
        %p201 = pneg %p45
        %p202 = pneg %p74
        %p203 = pneg %p71
        %s204 = sand.u32 %s87, 1
        %s205 = scalar_lea.sflag [#allocation14], %s204
        %s206 = sand.u32 %s87, 1
        %s207 = smul.addr %s206, 64
        %s208 = scalar_lea.vmem [#allocation13], %s207
        %p209 = pneg %p100
        %p210 = pneg %p97
        %p211 = pneg %p121
        %p212 = pneg %p118
        %s213 = smul.u32 32, %s24
        %s214 = smul.u32 16, %s25
        %s216 = sld [smem:[#allocation9]]
        %v217 = vld [vmem:[#allocation10] sm:$0xf]
        %v218 = vld [vmem:[#allocation10 + $0x4] sm:$0xf]
        %v219 = vld [vmem:[#allocation10 + $0x8] sm:$0xf]
        %v220 = vld [vmem:[#allocation10 + $0xc] sm:$0xf]
        %v221 = vld [vmem:[#allocation10 + $0x10] sm:$0xf]
        %v222 = vld [vmem:[#allocation10 + $0x14] sm:$0xf]
        %v223 = vld [vmem:[#allocation10 + $0x18] sm:$0xf]
        %v224 = vld [vmem:[#allocation10 + $0x1c] sm:$0xf]
        %v225 = vld [vmem:[#allocation10 + $0x20] sm:$0xf]
        %v226 = vld [vmem:[#allocation10 + $0x24] sm:$0xf]
        %v227 = vld [vmem:[#allocation10 + $0x28] sm:$0xf]
        %v228 = vld [vmem:[#allocation10 + $0x2c] sm:$0xf]
        %v229 = vld [vmem:[#allocation10 + $0x30] sm:$0xf]
        %v230 = vld [vmem:[#allocation10 + $0x34] sm:$0xf]
        %v231 = vld [vmem:[#allocation10 + $0x38] sm:$0xf]
        %v232 = vld [vmem:[#allocation10 + $0x3c] sm:$0xf]
        %v233 = vld [vmem:[#allocation10 + $0x40] sm:$0xf]
        %v234 = vld [vmem:[#allocation10 + $0x44] sm:$0xf]
        %v235 = vld [vmem:[#allocation10 + $0x48] sm:$0xf]
        %v236 = vld [vmem:[#allocation10 + $0x4c] sm:$0xf]
        %v237 = vld [vmem:[#allocation10 + $0x50] sm:$0xf]
        %v238 = vld [vmem:[#allocation10 + $0x54] sm:$0xf]
        %v239 = vld [vmem:[#allocation10 + $0x58] sm:$0xf]
        %v240 = vld [vmem:[#allocation10 + $0x5c] sm:$0xf]
        %v241 = vld [vmem:[#allocation10 + $0x60] sm:$0xf]
        %v242 = vld [vmem:[#allocation10 + $0x64] sm:$0xf]
        %v243 = vld [vmem:[#allocation10 + $0x68] sm:$0xf]
        %v244 = vld [vmem:[#allocation10 + $0x6c] sm:$0xf]
        %v245 = vld [vmem:[#allocation10 + $0x70] sm:$0xf]
        %v246 = vld [vmem:[#allocation10 + $0x74] sm:$0xf]
        %v247 = vld [vmem:[#allocation10 + $0x78] sm:$0xf]
        %v248 = vld [vmem:[#allocation10 + $0x7c] sm:$0xf]
        %v249 = vld [vmem:[%s195] sm:$0xf]
        %v250 = vld [vmem:[%s195 + $0x4] sm:$0xf]
        %v251 = vld [vmem:[%s195 + $0x8] sm:$0xf]
        %v252 = vld [vmem:[%s195 + $0xc] sm:$0xf]
        %v253 = vld [vmem:[%s195 + $0x10] sm:$0xf]
        %v254 = vld [vmem:[%s195 + $0x14] sm:$0xf]
        %v255 = vld [vmem:[%s195 + $0x18] sm:$0xf]
        %v256 = vld [vmem:[%s195 + $0x1c] sm:$0xf]
        %v257 = vld [vmem:[%s195 + $0x20] sm:$0xf]
        %v258 = vld [vmem:[%s195 + $0x24] sm:$0xf]
        %v259 = vld [vmem:[%s195 + $0x28] sm:$0xf]
        %v260 = vld [vmem:[%s195 + $0x2c] sm:$0xf]
        %v261 = vld [vmem:[%s195 + $0x30] sm:$0xf]
        %v262 = vld [vmem:[%s195 + $0x34] sm:$0xf]
        %v263 = vld [vmem:[%s195 + $0x38] sm:$0xf]
        %v264 = vld [vmem:[%s195 + $0x3c] sm:$0xf]
        %v297 = vunpack.c.l.b16 %v217
        %v298 = vunpack.c.l.b16 %v218
        %v299 = vunpack.c.l.b16 %v219
        %v300 = vunpack.c.l.b16 %v220
        %v301 = vunpack.c.l.b16 %v221
        %v302 = vunpack.c.l.b16 %v222
        %v303 = vunpack.c.l.b16 %v223
        %v304 = vunpack.c.l.b16 %v224
        %v305 = vunpack.c.l.b16 %v225
        %v306 = vunpack.c.l.b16 %v226
        %v307 = vunpack.c.l.b16 %v227
        %v308 = vunpack.c.l.b16 %v228
        %v309 = vunpack.c.l.b16 %v229
        %v310 = vunpack.c.l.b16 %v230
        %v311 = vunpack.c.l.b16 %v231
        %v312 = vunpack.c.l.b16 %v232
        %v313 = vunpack.c.l.b16 %v233
        %v314 = vunpack.c.l.b16 %v234
        %v315 = vunpack.c.l.b16 %v235
        %v316 = vunpack.c.l.b16 %v236
        %v317 = vunpack.c.l.b16 %v237
        %v318 = vunpack.c.l.b16 %v238
        %v319 = vunpack.c.l.b16 %v239
        %v320 = vunpack.c.l.b16 %v240
        %v321 = vunpack.c.l.b16 %v241
        %v322 = vunpack.c.l.b16 %v242
        %v323 = vunpack.c.l.b16 %v243
        %v324 = vunpack.c.l.b16 %v244
        %v325 = vunpack.c.l.b16 %v245
        %v326 = vunpack.c.l.b16 %v246
        %v327 = vunpack.c.l.b16 %v247
        %v328 = vunpack.c.l.b16 %v248
        %v329 = vpack.c.b16 %v298, %v297
        %v330 = vpack.c.b16 %v300, %v299
        %v331 = vpack.c.b16 %v302, %v301
        %v332 = vpack.c.b16 %v304, %v303
        %v333 = vpack.c.b16 %v306, %v305
        %v334 = vpack.c.b16 %v308, %v307
        %v335 = vpack.c.b16 %v310, %v309
        %v336 = vpack.c.b16 %v312, %v311
        %v337 = vpack.c.b16 %v314, %v313
        %v338 = vpack.c.b16 %v316, %v315
        %v339 = vpack.c.b16 %v318, %v317
        %v340 = vpack.c.b16 %v320, %v319
        %v341 = vpack.c.b16 %v322, %v321
        %v342 = vpack.c.b16 %v324, %v323
        %v343 = vpack.c.b16 %v326, %v325
        %v344 = vpack.c.b16 %v328, %v327
        %v377 = vunpack.c.l.b16 %v249
        %v378 = vunpack.c.l.b16 %v250
        %v379 = vunpack.c.l.b16 %v251
        %v380 = vunpack.c.l.b16 %v252
        %v381 = vunpack.c.l.b16 %v253
        %v382 = vunpack.c.l.b16 %v254
        %v383 = vunpack.c.l.b16 %v255
        %v384 = vunpack.c.l.b16 %v256
        %v385 = vunpack.c.l.b16 %v257
        %v386 = vunpack.c.l.b16 %v258
        %v387 = vunpack.c.l.b16 %v259
        %v388 = vunpack.c.l.b16 %v260
        %v389 = vunpack.c.l.b16 %v261
        %v390 = vunpack.c.l.b16 %v262
        %v391 = vunpack.c.l.b16 %v263
        %v392 = vunpack.c.l.b16 %v264
        %v393 = vpack.c.b16 %v378, %v377
        %v394 = vpack.c.b16 %v380, %v379
        %v395 = vpack.c.b16 %v382, %v381
        %v396 = vpack.c.b16 %v384, %v383
        %v397 = vpack.c.b16 %v386, %v385
        %v398 = vpack.c.b16 %v388, %v387
        %v399 = vpack.c.b16 %v390, %v389
        %v400 = vpack.c.b16 %v392, %v391
        %409 = vmatprep.subr.bf16.mxu0 0
        %410 = vmatpush1.bf16.xpose.msra.mxu0 %v393
        %411 = vmatprep.subr.bf16.mxu0 0
        %412 = vmatpush1.bf16.xpose.msra.mxu0 %v394
        %413 = vmatprep.subr.bf16.mxu0 0
        %414 = vmatpush1.bf16.xpose.msra.mxu0 %v395
        %415 = vmatprep.subr.bf16.mxu0 0
        %416 = vmatpush1.bf16.xpose.msra.mxu0 %v396
        %417 = vmatprep.subr.bf16.mxu0 0
        %418 = vmatpush1.bf16.xpose.msra.mxu0 %v397
        %419 = vmatprep.subr.bf16.mxu0 0
        %420 = vmatpush1.bf16.xpose.msra.mxu0 %v398
        %421 = vmatprep.subr.bf16.mxu0 0
        %422 = vmatpush1.bf16.xpose.msra.mxu0 %v399
        %423 = vmatprep.subr.bf16.mxu0 0
        %424 = vmatpush1.bf16.xpose.msra.mxu0 %v400
        %425 = vmatprep.subr.bf16.mxu0 0
        %426 = vmatpush1.bf16.xpose.msra.mxu0 0
        %427 = vmatprep.subr.bf16.mxu0 0
        %428 = vmatpush1.bf16.xpose.msra.mxu0 0
        %429 = vmatprep.subr.bf16.mxu0 0
        %430 = vmatpush1.bf16.xpose.msra.mxu0 0
        %431 = vmatprep.subr.bf16.mxu0 0
        %432 = vmatpush1.bf16.xpose.msra.mxu0 0
        %433 = vmatprep.subr.bf16.mxu0 0
        %434 = vmatpush1.bf16.xpose.msra.mxu0 0
        %435 = vmatprep.subr.bf16.mxu0 0
        %436 = vmatpush1.bf16.xpose.msra.mxu0 0
        %437 = vmatprep.subr.bf16.mxu0 0
        %438 = vmatpush1.bf16.xpose.msra.mxu0 0
        %439 = vmatprep.subr.bf16.mxu0 0
        %440 = vmatpush1.bf16.xpose.msra.mxu0 0
        %441 = vmatprep.mubr.bf16.mxu0 0
        %442 = vmatmul.mubr.bf16.gmra.mrb[0].mxu0 %v329
        %v443 = vpop.f32.mrb[0].mxu0
        %v444 = vadd.f32 0.0, %v443
        %v445 = vpop.f32.mrb[0].mxu0
        %v446 = vpop.f32.mrb[0].mxu0
        %v447 = vadd.f32 0.0, %v446
        %v448 = vpop.f32.mrb[0].mxu0
        %449 = vmatprep.mubr.bf16.mxu0 0
        %450 = vmatmul.mubr.bf16.gmra.mrb[0].mxu0 %v330
        %v451 = vpop.f32.mrb[0].mxu0
        %v452 = vadd.f32 0.0, %v451
        %v453 = vpop.f32.mrb[0].mxu0
        %v454 = vpop.f32.mrb[0].mxu0
        %v455 = vadd.f32 0.0, %v454
        %v456 = vpop.f32.mrb[0].mxu0
        %457 = vmatprep.mubr.bf16.mxu0 0
        %458 = vmatmul.mubr.bf16.gmra.mrb[0].mxu0 %v331
        %v459 = vpop.f32.mrb[0].mxu0
        %v460 = vadd.f32 0.0, %v459
        %v461 = vpop.f32.mrb[0].mxu0
        %v462 = vpop.f32.mrb[0].mxu0
        %v463 = vadd.f32 0.0, %v462
        %v464 = vpop.f32.mrb[0].mxu0
        %465 = vmatprep.mubr.bf16.mxu0 0
        %466 = vmatmul.mubr.bf16.gmra.mrb[0].mxu0 %v332
        %v467 = vpop.f32.mrb[0].mxu0
        %v468 = vadd.f32 0.0, %v467
        %v469 = vpop.f32.mrb[0].mxu0
        %v470 = vpop.f32.mrb[0].mxu0
        %v471 = vadd.f32 0.0, %v470
        %v472 = vpop.f32.mrb[0].mxu0
        %473 = vmatprep.mubr.bf16.mxu0 0
        %474 = vmatmul.mubr.bf16.gmra.mrb[0].mxu0 %v333
        %v475 = vpop.f32.mrb[0].mxu0
        %v476 = vadd.f32 0.0, %v475
        %v477 = vpop.f32.mrb[0].mxu0
        %v478 = vpop.f32.mrb[0].mxu0
        %v479 = vadd.f32 0.0, %v478
        %v480 = vpop.f32.mrb[0].mxu0
        %481 = vmatprep.mubr.bf16.mxu0 0
        %482 = vmatmul.mubr.bf16.gmra.mrb[0].mxu0 %v334
        %v483 = vpop.f32.mrb[0].mxu0
        %v484 = vadd.f32 0.0, %v483
        %v485 = vpop.f32.mrb[0].mxu0
        %v486 = vpop.f32.mrb[0].mxu0
        %v487 = vadd.f32 0.0, %v486
        %v488 = vpop.f32.mrb[0].mxu0
        %489 = vmatprep.mubr.bf16.mxu0 0
        %490 = vmatmul.mubr.bf16.gmra.mrb[0].mxu0 %v335
        %v491 = vpop.f32.mrb[0].mxu0
        %v492 = vadd.f32 0.0, %v491
        %v493 = vpop.f32.mrb[0].mxu0
        %v494 = vpop.f32.mrb[0].mxu0
        %v495 = vadd.f32 0.0, %v494
        %v496 = vpop.f32.mrb[0].mxu0
        %497 = vmatprep.mubr.bf16.mxu0 0
        %498 = vmatmul.mubr.bf16.gmra.mrb[0].mxu0 %v336
        %v499 = vpop.f32.mrb[0].mxu0
        %v500 = vadd.f32 0.0, %v499
        %v501 = vpop.f32.mrb[0].mxu0
        %v502 = vpop.f32.mrb[0].mxu0
        %v503 = vadd.f32 0.0, %v502
        %v504 = vpop.f32.mrb[0].mxu0
        %505 = vmatprep.mubr.bf16.mxu0 0
        %506 = vmatmul.mubr.bf16.gmra.mrb[0].mxu0 %v337
        %v507 = vpop.f32.mrb[0].mxu0
        %v508 = vadd.f32 0.0, %v507
        %v509 = vpop.f32.mrb[0].mxu0
        %v510 = vpop.f32.mrb[0].mxu0
        %v511 = vadd.f32 0.0, %v510
        %v512 = vpop.f32.mrb[0].mxu0
        %513 = vmatprep.mubr.bf16.mxu0 0
        %514 = vmatmul.mubr.bf16.gmra.mrb[0].mxu0 %v338
        %v515 = vpop.f32.mrb[0].mxu0
        %v516 = vadd.f32 0.0, %v515
        %v517 = vpop.f32.mrb[0].mxu0
        %v518 = vpop.f32.mrb[0].mxu0
        %v519 = vadd.f32 0.0, %v518
        %v520 = vpop.f32.mrb[0].mxu0
        %521 = vmatprep.mubr.bf16.mxu0 0
        %522 = vmatmul.mubr.bf16.gmra.mrb[0].mxu0 %v339
        %v523 = vpop.f32.mrb[0].mxu0
        %v524 = vadd.f32 0.0, %v523
        %v525 = vpop.f32.mrb[0].mxu0
        %v526 = vpop.f32.mrb[0].mxu0
        %v527 = vadd.f32 0.0, %v526
        %v528 = vpop.f32.mrb[0].mxu0
        %529 = vmatprep.mubr.bf16.mxu0 0
        %530 = vmatmul.mubr.bf16.gmra.mrb[0].mxu0 %v340
        %v531 = vpop.f32.mrb[0].mxu0
        %v532 = vadd.f32 0.0, %v531
        %v533 = vpop.f32.mrb[0].mxu0
        %v534 = vpop.f32.mrb[0].mxu0
        %v535 = vadd.f32 0.0, %v534
        %v536 = vpop.f32.mrb[0].mxu0
        %537 = vmatprep.mubr.bf16.mxu0 0
        %538 = vmatmul.mubr.bf16.gmra.mrb[0].mxu0 %v341
        %v539 = vpop.f32.mrb[0].mxu0
        %v540 = vadd.f32 0.0, %v539
        %v541 = vpop.f32.mrb[0].mxu0
        %v542 = vpop.f32.mrb[0].mxu0
        %v543 = vadd.f32 0.0, %v542
        %v544 = vpop.f32.mrb[0].mxu0
        %545 = vmatprep.mubr.bf16.mxu0 0
        %546 = vmatmul.mubr.bf16.gmra.mrb[0].mxu0 %v342
        %v547 = vpop.f32.mrb[0].mxu0
        %v548 = vadd.f32 0.0, %v547
        %v549 = vpop.f32.mrb[0].mxu0
        %v550 = vpop.f32.mrb[0].mxu0
        %v551 = vadd.f32 0.0, %v550
        %v552 = vpop.f32.mrb[0].mxu0
        %553 = vmatprep.mubr.bf16.mxu0 0
        %554 = vmatmul.mubr.bf16.gmra.mrb[0].mxu0 %v343
        %v555 = vpop.f32.mrb[0].mxu0
        %v556 = vadd.f32 0.0, %v555
        %v557 = vpop.f32.mrb[0].mxu0
        %v558 = vpop.f32.mrb[0].mxu0
        %v559 = vadd.f32 0.0, %v558
        %v560 = vpop.f32.mrb[0].mxu0
        %561 = vmatprep.mubr.bf16.mxu0 0
        %562 = vmatmul.mubr.bf16.gmra.mrb[0].mxu0 %v344
        %v563 = vpop.f32.mrb[0].mxu0
        %v564 = vadd.f32 0.0, %v563
        %v565 = vpop.f32.mrb[0].mxu0
        %v566 = vpop.f32.mrb[0].mxu0
        %v567 = vadd.f32 0.0, %v566
        %v568 = vpop.f32.mrb[0].mxu0
        %569 = vdwg.mxu0
        %v570 = vstv %s216
        %v571 = vmul.f32 %v444, %v570
        %v572 = vmul.f32 %v447, %v570
        %v573 = vmul.f32 %v452, %v570
        %v574 = vmul.f32 %v455, %v570
        %v575 = vmul.f32 %v460, %v570
        %v576 = vmul.f32 %v463, %v570
        %v577 = vmul.f32 %v468, %v570
        %v578 = vmul.f32 %v471, %v570
        %v579 = vmul.f32 %v476, %v570
        %v580 = vmul.f32 %v479, %v570
        %v581 = vmul.f32 %v484, %v570
        %v582 = vmul.f32 %v487, %v570
        %v583 = vmul.f32 %v492, %v570
        %v584 = vmul.f32 %v495, %v570
        %v585 = vmul.f32 %v500, %v570
        %v586 = vmul.f32 %v503, %v570
        %v587 = vmul.f32 %v508, %v570
        %v588 = vmul.f32 %v511, %v570
        %v589 = vmul.f32 %v516, %v570
        %v590 = vmul.f32 %v519, %v570
        %v591 = vmul.f32 %v524, %v570
        %v592 = vmul.f32 %v527, %v570
        %v593 = vmul.f32 %v532, %v570
        %v594 = vmul.f32 %v535, %v570
        %v595 = vmul.f32 %v540, %v570
        %v596 = vmul.f32 %v543, %v570
        %v597 = vmul.f32 %v548, %v570
        %v598 = vmul.f32 %v551, %v570
        %v599 = vmul.f32 %v556, %v570
        %v600 = vmul.f32 %v559, %v570
        %v601 = vmul.f32 %v564, %v570
        %v602 = vmul.f32 %v567, %v570
        %p603 = scmp.eq.s32.totalorder %s24, 0
        %p604 = scmp.eq.s32.totalorder %s25, 0
        %p605 = pnand %p603, %p604
        %p606 = pneg %p605
        // Predicated region
        $region41: #{tpu_custom_call.1} parent=31 // pred_check
          _
        $region42: #{tpu_custom_call.1} parent=31 // pred_check_branch
          %608 = sbr.rel (%p605) target = $region44
        $region43: #{tpu_custom_call.1} parent=31 // pred_region
          %vm609 = vcmask 0
          %610 = vst.msk [vmem:[#allocation6] sm:$0x1] %vm609, 0.0
          %611 = vst.msk [vmem:[#allocation7] sm:$0x1] %vm609, 0.0
          %612 = vst.msk [vmem:[#allocation8] sm:$0x1] %vm609, 0.0
        $region44: #{tpu_custom_call.1} parent=31 // pred_fallthru
          _
        // Predicated region
        $region45: #{tpu_custom_call.1} parent=31 // pred_check
          %p613 = pneg %p604
        $region46: #{tpu_custom_call.1} parent=31 // pred_check_branch
          %615 = sbr.rel (%p613) target = $region48
        $region47: #{tpu_custom_call.1} parent=31 // pred_region
          %vm616 = vcmask 7168
          %617 = vst.msk [vmem:[#allocation2] sm:$0xff] %vm616, -1e+30
          %618 = vst.msk [vmem:[#allocation2 + $0x8] sm:$0xff] %vm616, -1e+30
          %619 = vst.msk [vmem:[#allocation2 + $0x10] sm:$0xff] %vm616, -1e+30
          %620 = vst.msk [vmem:[#allocation2 + $0x18] sm:$0xff] %vm616, -1e+30
          %621 = vst.msk [vmem:[#allocation2 + $0x20] sm:$0xff] %vm616, -1e+30
          %622 = vst.msk [vmem:[#allocation2 + $0x28] sm:$0xff] %vm616, -1e+30
          %623 = vst.msk [vmem:[#allocation2 + $0x30] sm:$0xff] %vm616, -1e+30
          %624 = vst.msk [vmem:[#allocation2 + $0x38] sm:$0xff] %vm616, -1e+30
          %625 = vst.msk [vmem:[#allocation2 + $0x40] sm:$0xff] %vm616, -1e+30
          %626 = vst.msk [vmem:[#allocation2 + $0x48] sm:$0xff] %vm616, -1e+30
          %627 = vst.msk [vmem:[#allocation2 + $0x50] sm:$0xff] %vm616, -1e+30
          %628 = vst.msk [vmem:[#allocation2 + $0x58] sm:$0xff] %vm616, -1e+30
          %629 = vst.msk [vmem:[#allocation2 + $0x60] sm:$0xff] %vm616, -1e+30
          %630 = vst.msk [vmem:[#allocation2 + $0x68] sm:$0xff] %vm616, -1e+30
          %631 = vst.msk [vmem:[#allocation2 + $0x70] sm:$0xff] %vm616, -1e+30
          %632 = vst.msk [vmem:[#allocation2 + $0x78] sm:$0xff] %vm616, -1e+30
          %633 = vst.msk [vmem:[#allocation2 + $0x80] sm:$0xff] %vm616, -1e+30
          %634 = vst.msk [vmem:[#allocation2 + $0x88] sm:$0xff] %vm616, -1e+30
          %635 = vst.msk [vmem:[#allocation2 + $0x90] sm:$0xff] %vm616, -1e+30
          %636 = vst.msk [vmem:[#allocation2 + $0x98] sm:$0xff] %vm616, -1e+30
          %637 = vst.msk [vmem:[#allocation2 + $0xa0] sm:$0xff] %vm616, -1e+30
          %638 = vst.msk [vmem:[#allocation2 + $0xa8] sm:$0xff] %vm616, -1e+30
          %639 = vst.msk [vmem:[#allocation2 + $0xb0] sm:$0xff] %vm616, -1e+30
          %640 = vst.msk [vmem:[#allocation2 + $0xb8] sm:$0xff] %vm616, -1e+30
          %641 = vst.msk [vmem:[#allocation2 + $0xc0] sm:$0xff] %vm616, -1e+30
          %642 = vst.msk [vmem:[#allocation2 + $0xc8] sm:$0xff] %vm616, -1e+30
          %643 = vst.msk [vmem:[#allocation2 + $0xd0] sm:$0xff] %vm616, -1e+30
          %644 = vst.msk [vmem:[#allocation2 + $0xd8] sm:$0xff] %vm616, -1e+30
          %645 = vst.msk [vmem:[#allocation2 + $0xe0] sm:$0xff] %vm616, -1e+30
          %646 = vst.msk [vmem:[#allocation2 + $0xe8] sm:$0xff] %vm616, -1e+30
          %647 = vst.msk [vmem:[#allocation2 + $0xf0] sm:$0xff] %vm616, -1e+30
          %648 = vst.msk [vmem:[#allocation2 + $0xf8] sm:$0xff] %vm616, -1e+30
          %649 = vst.msk [vmem:[#allocation3] sm:$0xff] %vm616, 0.0
          %650 = vst.msk [vmem:[#allocation3 + $0x8] sm:$0xff] %vm616, 0.0
          %651 = vst.msk [vmem:[#allocation3 + $0x10] sm:$0xff] %vm616, 0.0
          %652 = vst.msk [vmem:[#allocation3 + $0x18] sm:$0xff] %vm616, 0.0
          %653 = vst.msk [vmem:[#allocation3 + $0x20] sm:$0xff] %vm616, 0.0
          %654 = vst.msk [vmem:[#allocation3 + $0x28] sm:$0xff] %vm616, 0.0
          %655 = vst.msk [vmem:[#allocation3 + $0x30] sm:$0xff] %vm616, 0.0
          %656 = vst.msk [vmem:[#allocation3 + $0x38] sm:$0xff] %vm616, 0.0
          %657 = vst.msk [vmem:[#allocation3 + $0x40] sm:$0xff] %vm616, 0.0
          %658 = vst.msk [vmem:[#allocation3 + $0x48] sm:$0xff] %vm616, 0.0
          %659 = vst.msk [vmem:[#allocation3 + $0x50] sm:$0xff] %vm616, 0.0
          %660 = vst.msk [vmem:[#allocation3 + $0x58] sm:$0xff] %vm616, 0.0
          %661 = vst.msk [vmem:[#allocation3 + $0x60] sm:$0xff] %vm616, 0.0
          %662 = vst.msk [vmem:[#allocation3 + $0x68] sm:$0xff] %vm616, 0.0
          %663 = vst.msk [vmem:[#allocation3 + $0x70] sm:$0xff] %vm616, 0.0
          %664 = vst.msk [vmem:[#allocation3 + $0x78] sm:$0xff] %vm616, 0.0
          %665 = vst.msk [vmem:[#allocation3 + $0x80] sm:$0xff] %vm616, 0.0
          %666 = vst.msk [vmem:[#allocation3 + $0x88] sm:$0xff] %vm616, 0.0
          %667 = vst.msk [vmem:[#allocation3 + $0x90] sm:$0xff] %vm616, 0.0
          %668 = vst.msk [vmem:[#allocation3 + $0x98] sm:$0xff] %vm616, 0.0
          %669 = vst.msk [vmem:[#allocation3 + $0xa0] sm:$0xff] %vm616, 0.0
          %670 = vst.msk [vmem:[#allocation3 + $0xa8] sm:$0xff] %vm616, 0.0
          %671 = vst.msk [vmem:[#allocation3 + $0xb0] sm:$0xff] %vm616, 0.0
          %672 = vst.msk [vmem:[#allocation3 + $0xb8] sm:$0xff] %vm616, 0.0
          %673 = vst.msk [vmem:[#allocation3 + $0xc0] sm:$0xff] %vm616, 0.0
          %674 = vst.msk [vmem:[#allocation3 + $0xc8] sm:$0xff] %vm616, 0.0
          %675 = vst.msk [vmem:[#allocation3 + $0xd0] sm:$0xff] %vm616, 0.0
          %676 = vst.msk [vmem:[#allocation3 + $0xd8] sm:$0xff] %vm616, 0.0
          %677 = vst.msk [vmem:[#allocation3 + $0xe0] sm:$0xff] %vm616, 0.0
          %678 = vst.msk [vmem:[#allocation3 + $0xe8] sm:$0xff] %vm616, 0.0
          %679 = vst.msk [vmem:[#allocation3 + $0xf0] sm:$0xff] %vm616, 0.0
          %680 = vst.msk [vmem:[#allocation3 + $0xf8] sm:$0xff] %vm616, 0.0
        $region48: #{tpu_custom_call.1} parent=31 // pred_fallthru
          _
        %v681 = vld [vmem:[#allocation2] sm:$0xff]
        %v682 = vld [vmem:[#allocation2 + $0x8] sm:$0xff]
        %v683 = vld [vmem:[#allocation2 + $0x10] sm:$0xff]
        %v684 = vld [vmem:[#allocation2 + $0x18] sm:$0xff]
        %v685 = vld [vmem:[#allocation2 + $0x20] sm:$0xff]
        %v686 = vld [vmem:[#allocation2 + $0x28] sm:$0xff]
        %v687 = vld [vmem:[#allocation2 + $0x30] sm:$0xff]
        %v688 = vld [vmem:[#allocation2 + $0x38] sm:$0xff]
        %v689 = vld [vmem:[#allocation2 + $0x40] sm:$0xff]
        %v690 = vld [vmem:[#allocation2 + $0x48] sm:$0xff]
        %v691 = vld [vmem:[#allocation2 + $0x50] sm:$0xff]
        %v692 = vld [vmem:[#allocation2 + $0x58] sm:$0xff]
        %v693 = vld [vmem:[#allocation2 + $0x60] sm:$0xff]
        %v694 = vld [vmem:[#allocation2 + $0x68] sm:$0xff]
        %v695 = vld [vmem:[#allocation2 + $0x70] sm:$0xff]
        %v696 = vld [vmem:[#allocation2 + $0x78] sm:$0xff]
        %v697 = vld [vmem:[#allocation2 + $0x80] sm:$0xff]
        %v698 = vld [vmem:[#allocation2 + $0x88] sm:$0xff]
        %v699 = vld [vmem:[#allocation2 + $0x90] sm:$0xff]
        %v700 = vld [vmem:[#allocation2 + $0x98] sm:$0xff]
        %v701 = vld [vmem:[#allocation2 + $0xa0] sm:$0xff]
        %v702 = vld [vmem:[#allocation2 + $0xa8] sm:$0xff]
        %v703 = vld [vmem:[#allocation2 + $0xb0] sm:$0xff]
        %v704 = vld [vmem:[#allocation2 + $0xb8] sm:$0xff]
        %v705 = vld [vmem:[#allocation2 + $0xc0] sm:$0xff]
        %v706 = vld [vmem:[#allocation2 + $0xc8] sm:$0xff]
        %v707 = vld [vmem:[#allocation2 + $0xd0] sm:$0xff]
        %v708 = vld [vmem:[#allocation2 + $0xd8] sm:$0xff]
        %v709 = vld [vmem:[#allocation2 + $0xe0] sm:$0xff]
        %v710 = vld [vmem:[#allocation2 + $0xe8] sm:$0xff]
        %v711 = vld [vmem:[#allocation2 + $0xf0] sm:$0xff]
        %v712 = vld [vmem:[#allocation2 + $0xf8] sm:$0xff]
        %713 = vmax.xlane.f32.xlu0 %v571
        %v714 = vpop.xlane.xlu0 %713
        %715 = vmax.xlane.f32.xlu0 %v572
        %v716 = vpop.xlane.xlu0 %715
        %717 = vmax.xlane.f32.xlu0 %v573
        %v718 = vpop.xlane.xlu0 %717
        %719 = vmax.xlane.f32.xlu0 %v574
        %v720 = vpop.xlane.xlu0 %719
        %721 = vmax.xlane.f32.xlu0 %v575
        %v722 = vpop.xlane.xlu0 %721
        %723 = vmax.xlane.f32.xlu0 %v576
        %v724 = vpop.xlane.xlu0 %723
        %725 = vmax.xlane.f32.xlu0 %v577
        %v726 = vpop.xlane.xlu0 %725
        %727 = vmax.xlane.f32.xlu0 %v578
        %v728 = vpop.xlane.xlu0 %727
        %729 = vmax.xlane.f32.xlu0 %v579
        %v730 = vpop.xlane.xlu0 %729
        %731 = vmax.xlane.f32.xlu0 %v580
        %v732 = vpop.xlane.xlu0 %731
        %733 = vmax.xlane.f32.xlu0 %v581
        %v734 = vpop.xlane.xlu0 %733
        %735 = vmax.xlane.f32.xlu0 %v582
        %v736 = vpop.xlane.xlu0 %735
        %737 = vmax.xlane.f32.xlu0 %v583
        %v738 = vpop.xlane.xlu0 %737
        %739 = vmax.xlane.f32.xlu0 %v584
        %v740 = vpop.xlane.xlu0 %739
        %741 = vmax.xlane.f32.xlu0 %v585
        %v742 = vpop.xlane.xlu0 %741
        %743 = vmax.xlane.f32.xlu0 %v586
        %v744 = vpop.xlane.xlu0 %743
        %745 = vmax.xlane.f32.xlu0 %v587
        %v746 = vpop.xlane.xlu0 %745
        %747 = vmax.xlane.f32.xlu0 %v588
        %v748 = vpop.xlane.xlu0 %747
        %749 = vmax.xlane.f32.xlu0 %v589
        %v750 = vpop.xlane.xlu0 %749
        %751 = vmax.xlane.f32.xlu0 %v590
        %v752 = vpop.xlane.xlu0 %751
        %753 = vmax.xlane.f32.xlu0 %v591
        %v754 = vpop.xlane.xlu0 %753
        %755 = vmax.xlane.f32.xlu0 %v592
        %v756 = vpop.xlane.xlu0 %755
        %757 = vmax.xlane.f32.xlu0 %v593
        %v758 = vpop.xlane.xlu0 %757
        %759 = vmax.xlane.f32.xlu0 %v594
        %v760 = vpop.xlane.xlu0 %759
        %761 = vmax.xlane.f32.xlu0 %v595
        %v762 = vpop.xlane.xlu0 %761
        %763 = vmax.xlane.f32.xlu0 %v596
        %v764 = vpop.xlane.xlu0 %763
        %765 = vmax.xlane.f32.xlu0 %v597
        %v766 = vpop.xlane.xlu0 %765
        %767 = vmax.xlane.f32.xlu0 %v598
        %v768 = vpop.xlane.xlu0 %767
        %769 = vmax.xlane.f32.xlu0 %v599
        %v770 = vpop.xlane.xlu0 %769
        %771 = vmax.xlane.f32.xlu0 %v600
        %v772 = vpop.xlane.xlu0 %771
        %773 = vmax.xlane.f32.xlu0 %v601
        %v774 = vpop.xlane.xlu0 %773
        %775 = vmax.xlane.f32.xlu0 %v602
        %v776 = vpop.xlane.xlu0 %775
        %v777 = vmax.f32 %v681, %v714
        %v778 = vmax.f32 %v682, %v716
        %v779 = vmax.f32 %v683, %v718
        %v780 = vmax.f32 %v684, %v720
        %v781 = vmax.f32 %v685, %v722
        %v782 = vmax.f32 %v686, %v724
        %v783 = vmax.f32 %v687, %v726
        %v784 = vmax.f32 %v688, %v728
        %v785 = vmax.f32 %v689, %v730
        %v786 = vmax.f32 %v690, %v732
        %v787 = vmax.f32 %v691, %v734
        %v788 = vmax.f32 %v692, %v736
        %v789 = vmax.f32 %v693, %v738
        %v790 = vmax.f32 %v694, %v740
        %v791 = vmax.f32 %v695, %v742
        %v792 = vmax.f32 %v696, %v744
        %v793 = vmax.f32 %v697, %v746
        %v794 = vmax.f32 %v698, %v748
        %v795 = vmax.f32 %v699, %v750
        %v796 = vmax.f32 %v700, %v752
        %v797 = vmax.f32 %v701, %v754
        %v798 = vmax.f32 %v702, %v756
        %v799 = vmax.f32 %v703, %v758
        %v800 = vmax.f32 %v704, %v760
        %v801 = vmax.f32 %v705, %v762
        %v802 = vmax.f32 %v706, %v764
        %v803 = vmax.f32 %v707, %v766
        %v804 = vmax.f32 %v708, %v768
        %v805 = vmax.f32 %v709, %v770
        %v806 = vmax.f32 %v710, %v772
        %v807 = vmax.f32 %v711, %v774
        %v808 = vmax.f32 %v712, %v776
        %v809 = vld [vmem:[#allocation3] sm:$0xff]
        %v810 = vld [vmem:[#allocation3 + $0x8] sm:$0xff]
        %v811 = vld [vmem:[#allocation3 + $0x10] sm:$0xff]
        %v812 = vld [vmem:[#allocation3 + $0x18] sm:$0xff]
        %v813 = vld [vmem:[#allocation3 + $0x20] sm:$0xff]
        %v814 = vld [vmem:[#allocation3 + $0x28] sm:$0xff]
        %v815 = vld [vmem:[#allocation3 + $0x30] sm:$0xff]
        %v816 = vld [vmem:[#allocation3 + $0x38] sm:$0xff]
        %v817 = vld [vmem:[#allocation3 + $0x40] sm:$0xff]
        %v818 = vld [vmem:[#allocation3 + $0x48] sm:$0xff]
        %v819 = vld [vmem:[#allocation3 + $0x50] sm:$0xff]
        %v820 = vld [vmem:[#allocation3 + $0x58] sm:$0xff]
        %v821 = vld [vmem:[#allocation3 + $0x60] sm:$0xff]
        %v822 = vld [vmem:[#allocation3 + $0x68] sm:$0xff]
        %v823 = vld [vmem:[#allocation3 + $0x70] sm:$0xff]
        %v824 = vld [vmem:[#allocation3 + $0x78] sm:$0xff]
        %v825 = vld [vmem:[#allocation3 + $0x80] sm:$0xff]
        %v826 = vld [vmem:[#allocation3 + $0x88] sm:$0xff]
        %v827 = vld [vmem:[#allocation3 + $0x90] sm:$0xff]
        %v828 = vld [vmem:[#allocation3 + $0x98] sm:$0xff]
        %v829 = vld [vmem:[#allocation3 + $0xa0] sm:$0xff]
        %v830 = vld [vmem:[#allocation3 + $0xa8] sm:$0xff]
        %v831 = vld [vmem:[#allocation3 + $0xb0] sm:$0xff]
        %v832 = vld [vmem:[#allocation3 + $0xb8] sm:$0xff]
        %v833 = vld [vmem:[#allocation3 + $0xc0] sm:$0xff]
        %v834 = vld [vmem:[#allocation3 + $0xc8] sm:$0xff]
        %v835 = vld [vmem:[#allocation3 + $0xd0] sm:$0xff]
        %v836 = vld [vmem:[#allocation3 + $0xd8] sm:$0xff]
        %v837 = vld [vmem:[#allocation3 + $0xe0] sm:$0xff]
        %v838 = vld [vmem:[#allocation3 + $0xe8] sm:$0xff]
        %v839 = vld [vmem:[#allocation3 + $0xf0] sm:$0xff]
        %v840 = vld [vmem:[#allocation3 + $0xf8] sm:$0xff]
        %v841 = vsub.f32 %v681, %v777
        %v842 = vsub.f32 %v682, %v778
        %v843 = vsub.f32 %v683, %v779
        %v844 = vsub.f32 %v684, %v780
        %v845 = vsub.f32 %v685, %v781
        %v846 = vsub.f32 %v686, %v782
        %v847 = vsub.f32 %v687, %v783
        %v848 = vsub.f32 %v688, %v784
        %v849 = vsub.f32 %v689, %v785
        %v850 = vsub.f32 %v690, %v786
        %v851 = vsub.f32 %v691, %v787
        %v852 = vsub.f32 %v692, %v788
        %v853 = vsub.f32 %v693, %v789
        %v854 = vsub.f32 %v694, %v790
        %v855 = vsub.f32 %v695, %v791
        %v856 = vsub.f32 %v696, %v792
        %v857 = vsub.f32 %v697, %v793
        %v858 = vsub.f32 %v698, %v794
        %v859 = vsub.f32 %v699, %v795
        %v860 = vsub.f32 %v700, %v796
        %v861 = vsub.f32 %v701, %v797
        %v862 = vsub.f32 %v702, %v798
        %v863 = vsub.f32 %v703, %v799
        %v864 = vsub.f32 %v704, %v800
        %v865 = vsub.f32 %v705, %v801
        %v866 = vsub.f32 %v706, %v802
        %v867 = vsub.f32 %v707, %v803
        %v868 = vsub.f32 %v708, %v804
        %v869 = vsub.f32 %v709, %v805
        %v870 = vsub.f32 %v710, %v806
        %v871 = vsub.f32 %v711, %v807
        %v872 = vsub.f32 %v712, %v808
        %v873 = vmul.f32 %v841, 1.442695
        %v874 = vpow.pop %v873
        %v875 = vmul.f32 %v842, 1.442695
        %v876 = vpow.pop %v875
        %v877 = vmul.f32 %v843, 1.442695
        %v878 = vpow.pop %v877
        %v879 = vmul.f32 %v844, 1.442695
        %v880 = vpow.pop %v879
        %v881 = vmul.f32 %v845, 1.442695
        %v882 = vpow.pop %v881
        %v883 = vmul.f32 %v846, 1.442695
        %v884 = vpow.pop %v883
        %v885 = vmul.f32 %v847, 1.442695
        %v886 = vpow.pop %v885
        %v887 = vmul.f32 %v848, 1.442695
        %v888 = vpow.pop %v887
        %v889 = vmul.f32 %v849, 1.442695
        %v890 = vpow.pop %v889
        %v891 = vmul.f32 %v850, 1.442695
        %v892 = vpow.pop %v891
        %v893 = vmul.f32 %v851, 1.442695
        %v894 = vpow.pop %v893
        %v895 = vmul.f32 %v852, 1.442695
        %v896 = vpow.pop %v895
        %v897 = vmul.f32 %v853, 1.442695
        %v898 = vpow.pop %v897
        %v899 = vmul.f32 %v854, 1.442695
        %v900 = vpow.pop %v899
        %v901 = vmul.f32 %v855, 1.442695
        %v902 = vpow.pop %v901
        %v903 = vmul.f32 %v856, 1.442695
        %v904 = vpow.pop %v903
        %v905 = vmul.f32 %v857, 1.442695
        %v906 = vpow.pop %v905
        %v907 = vmul.f32 %v858, 1.442695
        %v908 = vpow.pop %v907
        %v909 = vmul.f32 %v859, 1.442695
        %v910 = vpow.pop %v909
        %v911 = vmul.f32 %v860, 1.442695
        %v912 = vpow.pop %v911
        %v913 = vmul.f32 %v861, 1.442695
        %v914 = vpow.pop %v913
        %v915 = vmul.f32 %v862, 1.442695
        %v916 = vpow.pop %v915
        %v917 = vmul.f32 %v863, 1.442695
        %v918 = vpow.pop %v917
        %v919 = vmul.f32 %v864, 1.442695
        %v920 = vpow.pop %v919
        %v921 = vmul.f32 %v865, 1.442695
        %v922 = vpow.pop %v921
        %v923 = vmul.f32 %v866, 1.442695
        %v924 = vpow.pop %v923
        %v925 = vmul.f32 %v867, 1.442695
        %v926 = vpow.pop %v925
        %v927 = vmul.f32 %v868, 1.442695
        %v928 = vpow.pop %v927
        %v929 = vmul.f32 %v869, 1.442695
        %v930 = vpow.pop %v929
        %v931 = vmul.f32 %v870, 1.442695
        %v932 = vpow.pop %v931
        %v933 = vmul.f32 %v871, 1.442695
        %v934 = vpow.pop %v933
        %v935 = vmul.f32 %v872, 1.442695
        %v936 = vpow.pop %v935
        %v937 = vmul.f32 %v809, %v874
        %v938 = vmul.f32 %v810, %v876
        %v939 = vmul.f32 %v811, %v878
        %v940 = vmul.f32 %v812, %v880
        %v941 = vmul.f32 %v813, %v882
        %v942 = vmul.f32 %v814, %v884
        %v943 = vmul.f32 %v815, %v886
        %v944 = vmul.f32 %v816, %v888
        %v945 = vmul.f32 %v817, %v890
        %v946 = vmul.f32 %v818, %v892
        %v947 = vmul.f32 %v819, %v894
        %v948 = vmul.f32 %v820, %v896
        %v949 = vmul.f32 %v821, %v898
        %v950 = vmul.f32 %v822, %v900
        %v951 = vmul.f32 %v823, %v902
        %v952 = vmul.f32 %v824, %v904
        %v953 = vmul.f32 %v825, %v906
        %v954 = vmul.f32 %v826, %v908
        %v955 = vmul.f32 %v827, %v910
        %v956 = vmul.f32 %v828, %v912
        %v957 = vmul.f32 %v829, %v914
        %v958 = vmul.f32 %v830, %v916
        %v959 = vmul.f32 %v831, %v918
        %v960 = vmul.f32 %v832, %v920
        %v961 = vmul.f32 %v833, %v922
        %v962 = vmul.f32 %v834, %v924
        %v963 = vmul.f32 %v835, %v926
        %v964 = vmul.f32 %v836, %v928
        %v965 = vmul.f32 %v837, %v930
        %v966 = vmul.f32 %v838, %v932
        %v967 = vmul.f32 %v839, %v934
        %v968 = vmul.f32 %v840, %v936
        %970 = vset.pattern.permute.xlu0 0
        %971 = vperm.xlu0 %970, %v777
        %v972 = vpop.permute.xlu0 %971
        %975 = vset.pattern.permute.xlu0 0
        %976 = vperm.xlu0 %975, %v778
        %v977 = vpop.permute.xlu0 %976
        %980 = vset.pattern.permute.xlu0 0
        %981 = vperm.xlu0 %980, %v779
        %v982 = vpop.permute.xlu0 %981
        %985 = vset.pattern.permute.xlu0 0
        %986 = vperm.xlu0 %985, %v780
        %v987 = vpop.permute.xlu0 %986
        %990 = vset.pattern.permute.xlu0 0
        %991 = vperm.xlu0 %990, %v781
        %v992 = vpop.permute.xlu0 %991
        %995 = vset.pattern.permute.xlu0 0
        %996 = vperm.xlu0 %995, %v782
        %v997 = vpop.permute.xlu0 %996
        %1000 = vset.pattern.permute.xlu0 0
        %1001 = vperm.xlu0 %1000, %v783
        %v1002 = vpop.permute.xlu0 %1001
        %1005 = vset.pattern.permute.xlu0 0
        %1006 = vperm.xlu0 %1005, %v784
        %v1007 = vpop.permute.xlu0 %1006
        %1010 = vset.pattern.permute.xlu0 0
        %1011 = vperm.xlu0 %1010, %v785
        %v1012 = vpop.permute.xlu0 %1011
        %1015 = vset.pattern.permute.xlu0 0
        %1016 = vperm.xlu0 %1015, %v786
        %v1017 = vpop.permute.xlu0 %1016
        %1020 = vset.pattern.permute.xlu0 0
        %1021 = vperm.xlu0 %1020, %v787
        %v1022 = vpop.permute.xlu0 %1021
        %1025 = vset.pattern.permute.xlu0 0
        %1026 = vperm.xlu0 %1025, %v788
        %v1027 = vpop.permute.xlu0 %1026
        %1030 = vset.pattern.permute.xlu0 0
        %1031 = vperm.xlu0 %1030, %v789
        %v1032 = vpop.permute.xlu0 %1031
        %1035 = vset.pattern.permute.xlu0 0
        %1036 = vperm.xlu0 %1035, %v790
        %v1037 = vpop.permute.xlu0 %1036
        %1040 = vset.pattern.permute.xlu0 0
        %1041 = vperm.xlu0 %1040, %v791
        %v1042 = vpop.permute.xlu0 %1041
        %1045 = vset.pattern.permute.xlu0 0
        %1046 = vperm.xlu0 %1045, %v792
        %v1047 = vpop.permute.xlu0 %1046
        %1050 = vset.pattern.permute.xlu0 0
        %1051 = vperm.xlu0 %1050, %v793
        %v1052 = vpop.permute.xlu0 %1051
        %1055 = vset.pattern.permute.xlu0 0
        %1056 = vperm.xlu0 %1055, %v794
        %v1057 = vpop.permute.xlu0 %1056
        %1060 = vset.pattern.permute.xlu0 0
        %1061 = vperm.xlu0 %1060, %v795
        %v1062 = vpop.permute.xlu0 %1061
        %1065 = vset.pattern.permute.xlu0 0
        %1066 = vperm.xlu0 %1065, %v796
        %v1067 = vpop.permute.xlu0 %1066
        %1070 = vset.pattern.permute.xlu0 0
        %1071 = vperm.xlu0 %1070, %v797
        %v1072 = vpop.permute.xlu0 %1071
        %1075 = vset.pattern.permute.xlu0 0
        %1076 = vperm.xlu0 %1075, %v798
        %v1077 = vpop.permute.xlu0 %1076
        %1080 = vset.pattern.permute.xlu0 0
        %1081 = vperm.xlu0 %1080, %v799
        %v1082 = vpop.permute.xlu0 %1081
        %1085 = vset.pattern.permute.xlu0 0
        %1086 = vperm.xlu0 %1085, %v800
        %v1087 = vpop.permute.xlu0 %1086
        %1090 = vset.pattern.permute.xlu0 0
        %1091 = vperm.xlu0 %1090, %v801
        %v1092 = vpop.permute.xlu0 %1091
        %1095 = vset.pattern.permute.xlu0 0
        %1096 = vperm.xlu0 %1095, %v802
        %v1097 = vpop.permute.xlu0 %1096
        %1100 = vset.pattern.permute.xlu0 0
        %1101 = vperm.xlu0 %1100, %v803
        %v1102 = vpop.permute.xlu0 %1101
        %1105 = vset.pattern.permute.xlu0 0
        %1106 = vperm.xlu0 %1105, %v804
        %v1107 = vpop.permute.xlu0 %1106
        %1110 = vset.pattern.permute.xlu0 0
        %1111 = vperm.xlu0 %1110, %v805
        %v1112 = vpop.permute.xlu0 %1111
        %1115 = vset.pattern.permute.xlu0 0
        %1116 = vperm.xlu0 %1115, %v806
        %v1117 = vpop.permute.xlu0 %1116
        %1120 = vset.pattern.permute.xlu0 0
        %1121 = vperm.xlu0 %1120, %v807
        %v1122 = vpop.permute.xlu0 %1121
        %1125 = vset.pattern.permute.xlu0 0
        %1126 = vperm.xlu0 %1125, %v808
        %v1127 = vpop.permute.xlu0 %1126
        %v1129 = vsub.f32 %v571, %v972
        %v1130 = vsub.f32 %v572, %v977
        %v1131 = vsub.f32 %v573, %v982
        %v1132 = vsub.f32 %v574, %v987
        %v1133 = vsub.f32 %v575, %v992
        %v1134 = vsub.f32 %v576, %v997
        %v1135 = vsub.f32 %v577, %v1002
        %v1136 = vsub.f32 %v578, %v1007
        %v1137 = vsub.f32 %v579, %v1012
        %v1138 = vsub.f32 %v580, %v1017
        %v1139 = vsub.f32 %v581, %v1022
        %v1140 = vsub.f32 %v582, %v1027
        %v1141 = vsub.f32 %v583, %v1032
        %v1142 = vsub.f32 %v584, %v1037
        %v1143 = vsub.f32 %v585, %v1042
        %v1144 = vsub.f32 %v586, %v1047
        %v1145 = vsub.f32 %v587, %v1052
        %v1146 = vsub.f32 %v588, %v1057
        %v1147 = vsub.f32 %v589, %v1062
        %v1148 = vsub.f32 %v590, %v1067
        %v1149 = vsub.f32 %v591, %v1072
        %v1150 = vsub.f32 %v592, %v1077
        %v1151 = vsub.f32 %v593, %v1082
        %v1152 = vsub.f32 %v594, %v1087
        %v1153 = vsub.f32 %v595, %v1092
        %v1154 = vsub.f32 %v596, %v1097
        %v1155 = vsub.f32 %v597, %v1102
        %v1156 = vsub.f32 %v598, %v1107
        %v1157 = vsub.f32 %v599, %v1112
        %v1158 = vsub.f32 %v600, %v1117
        %v1159 = vsub.f32 %v601, %v1122
        %v1160 = vsub.f32 %v602, %v1127
        %v1161 = vmul.f32 %v1129, 1.442695
        %v1162 = vpow.pop %v1161
        %v1163 = vmul.f32 %v1130, 1.442695
        %v1164 = vpow.pop %v1163
        %v1165 = vmul.f32 %v1131, 1.442695
        %v1166 = vpow.pop %v1165
        %v1167 = vmul.f32 %v1132, 1.442695
        %v1168 = vpow.pop %v1167
        %v1169 = vmul.f32 %v1133, 1.442695
        %v1170 = vpow.pop %v1169
        %v1171 = vmul.f32 %v1134, 1.442695
        %v1172 = vpow.pop %v1171
        %v1173 = vmul.f32 %v1135, 1.442695
        %v1174 = vpow.pop %v1173
        %v1175 = vmul.f32 %v1136, 1.442695
        %v1176 = vpow.pop %v1175
        %v1177 = vmul.f32 %v1137, 1.442695
        %v1178 = vpow.pop %v1177
        %v1179 = vmul.f32 %v1138, 1.442695
        %v1180 = vpow.pop %v1179
        %v1181 = vmul.f32 %v1139, 1.442695
        %v1182 = vpow.pop %v1181
        %v1183 = vmul.f32 %v1140, 1.442695
        %v1184 = vpow.pop %v1183
        %v1185 = vmul.f32 %v1141, 1.442695
        %v1186 = vpow.pop %v1185
        %v1187 = vmul.f32 %v1142, 1.442695
        %v1188 = vpow.pop %v1187
        %v1189 = vmul.f32 %v1143, 1.442695
        %v1190 = vpow.pop %v1189
        %v1191 = vmul.f32 %v1144, 1.442695
        %v1192 = vpow.pop %v1191
        %v1193 = vmul.f32 %v1145, 1.442695
        %v1194 = vpow.pop %v1193
        %v1195 = vmul.f32 %v1146, 1.442695
        %v1196 = vpow.pop %v1195
        %v1197 = vmul.f32 %v1147, 1.442695
        %v1198 = vpow.pop %v1197
        %v1199 = vmul.f32 %v1148, 1.442695
        %v1200 = vpow.pop %v1199
        %v1201 = vmul.f32 %v1149, 1.442695
        %v1202 = vpow.pop %v1201
        %v1203 = vmul.f32 %v1150, 1.442695
        %v1204 = vpow.pop %v1203
        %v1205 = vmul.f32 %v1151, 1.442695
        %v1206 = vpow.pop %v1205
        %v1207 = vmul.f32 %v1152, 1.442695
        %v1208 = vpow.pop %v1207
        %v1209 = vmul.f32 %v1153, 1.442695
        %v1210 = vpow.pop %v1209
        %v1211 = vmul.f32 %v1154, 1.442695
        %v1212 = vpow.pop %v1211
        %v1213 = vmul.f32 %v1155, 1.442695
        %v1214 = vpow.pop %v1213
        %v1215 = vmul.f32 %v1156, 1.442695
        %v1216 = vpow.pop %v1215
        %v1217 = vmul.f32 %v1157, 1.442695
        %v1218 = vpow.pop %v1217
        %v1219 = vmul.f32 %v1158, 1.442695
        %v1220 = vpow.pop %v1219
        %v1221 = vmul.f32 %v1159, 1.442695
        %v1222 = vpow.pop %v1221
        %v1223 = vmul.f32 %v1160, 1.442695
        %v1224 = vpow.pop %v1223
        %1225 = vadd.xlane.f32.xlu0 %v1162
        %v1226 = vpop.xlane.xlu0 %1225
        %1227 = vadd.xlane.f32.xlu0 %v1164
        %v1228 = vpop.xlane.xlu0 %1227
        %1229 = vadd.xlane.f32.xlu0 %v1166
        %v1230 = vpop.xlane.xlu0 %1229
        %1231 = vadd.xlane.f32.xlu0 %v1168
        %v1232 = vpop.xlane.xlu0 %1231
        %1233 = vadd.xlane.f32.xlu0 %v1170
        %v1234 = vpop.xlane.xlu0 %1233
        %1235 = vadd.xlane.f32.xlu0 %v1172
        %v1236 = vpop.xlane.xlu0 %1235
        %1237 = vadd.xlane.f32.xlu0 %v1174
        %v1238 = vpop.xlane.xlu0 %1237
        %1239 = vadd.xlane.f32.xlu0 %v1176
        %v1240 = vpop.xlane.xlu0 %1239
        %1241 = vadd.xlane.f32.xlu0 %v1178
        %v1242 = vpop.xlane.xlu0 %1241
        %1243 = vadd.xlane.f32.xlu0 %v1180
        %v1244 = vpop.xlane.xlu0 %1243
        %1245 = vadd.xlane.f32.xlu0 %v1182
        %v1246 = vpop.xlane.xlu0 %1245
        %1247 = vadd.xlane.f32.xlu0 %v1184
        %v1248 = vpop.xlane.xlu0 %1247
        %1249 = vadd.xlane.f32.xlu0 %v1186
        %v1250 = vpop.xlane.xlu0 %1249
        %1251 = vadd.xlane.f32.xlu0 %v1188
        %v1252 = vpop.xlane.xlu0 %1251
        %1253 = vadd.xlane.f32.xlu0 %v1190
        %v1254 = vpop.xlane.xlu0 %1253
        %1255 = vadd.xlane.f32.xlu0 %v1192
        %v1256 = vpop.xlane.xlu0 %1255
        %1257 = vadd.xlane.f32.xlu0 %v1194
        %v1258 = vpop.xlane.xlu0 %1257
        %1259 = vadd.xlane.f32.xlu0 %v1196
        %v1260 = vpop.xlane.xlu0 %1259
        %1261 = vadd.xlane.f32.xlu0 %v1198
        %v1262 = vpop.xlane.xlu0 %1261
        %1263 = vadd.xlane.f32.xlu0 %v1200
        %v1264 = vpop.xlane.xlu0 %1263
        %1265 = vadd.xlane.f32.xlu0 %v1202
        %v1266 = vpop.xlane.xlu0 %1265
        %1267 = vadd.xlane.f32.xlu0 %v1204
        %v1268 = vpop.xlane.xlu0 %1267
        %1269 = vadd.xlane.f32.xlu0 %v1206
        %v1270 = vpop.xlane.xlu0 %1269
        %1271 = vadd.xlane.f32.xlu0 %v1208
        %v1272 = vpop.xlane.xlu0 %1271
        %1273 = vadd.xlane.f32.xlu0 %v1210
        %v1274 = vpop.xlane.xlu0 %1273
        %1275 = vadd.xlane.f32.xlu0 %v1212
        %v1276 = vpop.xlane.xlu0 %1275
        %1277 = vadd.xlane.f32.xlu0 %v1214
        %v1278 = vpop.xlane.xlu0 %1277
        %1279 = vadd.xlane.f32.xlu0 %v1216
        %v1280 = vpop.xlane.xlu0 %1279
        %1281 = vadd.xlane.f32.xlu0 %v1218
        %v1282 = vpop.xlane.xlu0 %1281
        %1283 = vadd.xlane.f32.xlu0 %v1220
        %v1284 = vpop.xlane.xlu0 %1283
        %1285 = vadd.xlane.f32.xlu0 %v1222
        %v1286 = vpop.xlane.xlu0 %1285
        %1287 = vadd.xlane.f32.xlu0 %v1224
        %v1288 = vpop.xlane.xlu0 %1287
        %v1289 = vadd.f32 %v937, %v1226
        %v1290 = vadd.f32 %v938, %v1228
        %v1291 = vadd.f32 %v939, %v1230
        %v1292 = vadd.f32 %v940, %v1232
        %v1293 = vadd.f32 %v941, %v1234
        %v1294 = vadd.f32 %v942, %v1236
        %v1295 = vadd.f32 %v943, %v1238
        %v1296 = vadd.f32 %v944, %v1240
        %v1297 = vadd.f32 %v945, %v1242
        %v1298 = vadd.f32 %v946, %v1244
        %v1299 = vadd.f32 %v947, %v1246
        %v1300 = vadd.f32 %v948, %v1248
        %v1301 = vadd.f32 %v949, %v1250
        %v1302 = vadd.f32 %v950, %v1252
        %v1303 = vadd.f32 %v951, %v1254
        %v1304 = vadd.f32 %v952, %v1256
        %v1305 = vadd.f32 %v953, %v1258
        %v1306 = vadd.f32 %v954, %v1260
        %v1307 = vadd.f32 %v955, %v1262
        %v1308 = vadd.f32 %v956, %v1264
        %v1309 = vadd.f32 %v957, %v1266
        %v1310 = vadd.f32 %v958, %v1268
        %v1311 = vadd.f32 %v959, %v1270
        %v1312 = vadd.f32 %v960, %v1272
        %v1313 = vadd.f32 %v961, %v1274
        %v1314 = vadd.f32 %v962, %v1276
        %v1315 = vadd.f32 %v963, %v1278
        %v1316 = vadd.f32 %v964, %v1280
        %v1317 = vadd.f32 %v965, %v1282
        %v1318 = vadd.f32 %v966, %v1284
        %v1319 = vadd.f32 %v967, %v1286
        %v1320 = vadd.f32 %v968, %v1288
        %vm1321 = vcmask 7168
        %1322 = vst.msk [vmem:[#allocation3] sm:$0xff] %vm1321, %v1289
        %1323 = vst.msk [vmem:[#allocation3 + $0x8] sm:$0xff] %vm1321, %v1290
        %1324 = vst.msk [vmem:[#allocation3 + $0x10] sm:$0xff] %vm1321, %v1291
        %1325 = vst.msk [vmem:[#allocation3 + $0x18] sm:$0xff] %vm1321, %v1292
        %1326 = vst.msk [vmem:[#allocation3 + $0x20] sm:$0xff] %vm1321, %v1293
        %1327 = vst.msk [vmem:[#allocation3 + $0x28] sm:$0xff] %vm1321, %v1294
        %1328 = vst.msk [vmem:[#allocation3 + $0x30] sm:$0xff] %vm1321, %v1295
        %1329 = vst.msk [vmem:[#allocation3 + $0x38] sm:$0xff] %vm1321, %v1296
        %1330 = vst.msk [vmem:[#allocation3 + $0x40] sm:$0xff] %vm1321, %v1297
        %1331 = vst.msk [vmem:[#allocation3 + $0x48] sm:$0xff] %vm1321, %v1298
        %1332 = vst.msk [vmem:[#allocation3 + $0x50] sm:$0xff] %vm1321, %v1299
        %1333 = vst.msk [vmem:[#allocation3 + $0x58] sm:$0xff] %vm1321, %v1300
        %1334 = vst.msk [vmem:[#allocation3 + $0x60] sm:$0xff] %vm1321, %v1301
        %1335 = vst.msk [vmem:[#allocation3 + $0x68] sm:$0xff] %vm1321, %v1302
        %1336 = vst.msk [vmem:[#allocation3 + $0x70] sm:$0xff] %vm1321, %v1303
        %1337 = vst.msk [vmem:[#allocation3 + $0x78] sm:$0xff] %vm1321, %v1304
        %1338 = vst.msk [vmem:[#allocation3 + $0x80] sm:$0xff] %vm1321, %v1305
        %1339 = vst.msk [vmem:[#allocation3 + $0x88] sm:$0xff] %vm1321, %v1306
        %1340 = vst.msk [vmem:[#allocation3 + $0x90] sm:$0xff] %vm1321, %v1307
        %1341 = vst.msk [vmem:[#allocation3 + $0x98] sm:$0xff] %vm1321, %v1308
        %1342 = vst.msk [vmem:[#allocation3 + $0xa0] sm:$0xff] %vm1321, %v1309
        %1343 = vst.msk [vmem:[#allocation3 + $0xa8] sm:$0xff] %vm1321, %v1310
        %1344 = vst.msk [vmem:[#allocation3 + $0xb0] sm:$0xff] %vm1321, %v1311
        %1345 = vst.msk [vmem:[#allocation3 + $0xb8] sm:$0xff] %vm1321, %v1312
        %1346 = vst.msk [vmem:[#allocation3 + $0xc0] sm:$0xff] %vm1321, %v1313
        %1347 = vst.msk [vmem:[#allocation3 + $0xc8] sm:$0xff] %vm1321, %v1314
        %1348 = vst.msk [vmem:[#allocation3 + $0xd0] sm:$0xff] %vm1321, %v1315
        %1349 = vst.msk [vmem:[#allocation3 + $0xd8] sm:$0xff] %vm1321, %v1316
        %1350 = vst.msk [vmem:[#allocation3 + $0xe0] sm:$0xff] %vm1321, %v1317
        %1351 = vst.msk [vmem:[#allocation3 + $0xe8] sm:$0xff] %vm1321, %v1318
        %1352 = vst.msk [vmem:[#allocation3 + $0xf0] sm:$0xff] %vm1321, %v1319
        %1353 = vst.msk [vmem:[#allocation3 + $0xf8] sm:$0xff] %vm1321, %v1320
        %1354 = vst.msk [vmem:[#allocation2] sm:$0xff] %vm1321, %v777
        %1355 = vst.msk [vmem:[#allocation2 + $0x8] sm:$0xff] %vm1321, %v778
        %1356 = vst.msk [vmem:[#allocation2 + $0x10] sm:$0xff] %vm1321, %v779
        %1357 = vst.msk [vmem:[#allocation2 + $0x18] sm:$0xff] %vm1321, %v780
        %1358 = vst.msk [vmem:[#allocation2 + $0x20] sm:$0xff] %vm1321, %v781
        %1359 = vst.msk [vmem:[#allocation2 + $0x28] sm:$0xff] %vm1321, %v782
        %1360 = vst.msk [vmem:[#allocation2 + $0x30] sm:$0xff] %vm1321, %v783
        %1361 = vst.msk [vmem:[#allocation2 + $0x38] sm:$0xff] %vm1321, %v784
        %1362 = vst.msk [vmem:[#allocation2 + $0x40] sm:$0xff] %vm1321, %v785
        %1363 = vst.msk [vmem:[#allocation2 + $0x48] sm:$0xff] %vm1321, %v786
        %1364 = vst.msk [vmem:[#allocation2 + $0x50] sm:$0xff] %vm1321, %v787
        %1365 = vst.msk [vmem:[#allocation2 + $0x58] sm:$0xff] %vm1321, %v788
        %1366 = vst.msk [vmem:[#allocation2 + $0x60] sm:$0xff] %vm1321, %v789
        %1367 = vst.msk [vmem:[#allocation2 + $0x68] sm:$0xff] %vm1321, %v790
        %1368 = vst.msk [vmem:[#allocation2 + $0x70] sm:$0xff] %vm1321, %v791
        %1369 = vst.msk [vmem:[#allocation2 + $0x78] sm:$0xff] %vm1321, %v792
        %1370 = vst.msk [vmem:[#allocation2 + $0x80] sm:$0xff] %vm1321, %v793
        %1371 = vst.msk [vmem:[#allocation2 + $0x88] sm:$0xff] %vm1321, %v794
        %1372 = vst.msk [vmem:[#allocation2 + $0x90] sm:$0xff] %vm1321, %v795
        %1373 = vst.msk [vmem:[#allocation2 + $0x98] sm:$0xff] %vm1321, %v796
        %1374 = vst.msk [vmem:[#allocation2 + $0xa0] sm:$0xff] %vm1321, %v797
        %1375 = vst.msk [vmem:[#allocation2 + $0xa8] sm:$0xff] %vm1321, %v798
        %1376 = vst.msk [vmem:[#allocation2 + $0xb0] sm:$0xff] %vm1321, %v799
        %1377 = vst.msk [vmem:[#allocation2 + $0xb8] sm:$0xff] %vm1321, %v800
        %1378 = vst.msk [vmem:[#allocation2 + $0xc0] sm:$0xff] %vm1321, %v801
        %1379 = vst.msk [vmem:[#allocation2 + $0xc8] sm:$0xff] %vm1321, %v802
        %1380 = vst.msk [vmem:[#allocation2 + $0xd0] sm:$0xff] %vm1321, %v803
        %1381 = vst.msk [vmem:[#allocation2 + $0xd8] sm:$0xff] %vm1321, %v804
        %1382 = vst.msk [vmem:[#allocation2 + $0xe0] sm:$0xff] %vm1321, %v805
        %1383 = vst.msk [vmem:[#allocation2 + $0xe8] sm:$0xff] %vm1321, %v806
        %1384 = vst.msk [vmem:[#allocation2 + $0xf0] sm:$0xff] %vm1321, %v807
        %1385 = vst.msk [vmem:[#allocation2 + $0xf8] sm:$0xff] %vm1321, %v808
        %p1386 = scmp.eq.s32.totalorder %s25, 1
        // Predicated region
        $region49: #{tpu_custom_call.1} parent=31 // pred_check
          %p1387 = pneg %p1386
        $region50: #{tpu_custom_call.1} parent=31 // pred_check_branch
          %1389 = sbr.rel (%p1387) target = $region52
        $region51: #{tpu_custom_call.1} parent=31 // pred_region
          %v1390 = vld [vmem:[#allocation2] sm:$0xff]
          %v1391 = vld [vmem:[#allocation2 + $0x8] sm:$0xff]
          %v1392 = vld [vmem:[#allocation2 + $0x10] sm:$0xff]
          %v1393 = vld [vmem:[#allocation2 + $0x18] sm:$0xff]
          %v1394 = vld [vmem:[#allocation2 + $0x20] sm:$0xff]
          %v1395 = vld [vmem:[#allocation2 + $0x28] sm:$0xff]
          %v1396 = vld [vmem:[#allocation2 + $0x30] sm:$0xff]
          %v1397 = vld [vmem:[#allocation2 + $0x38] sm:$0xff]
          %v1398 = vld [vmem:[#allocation2 + $0x40] sm:$0xff]
          %v1399 = vld [vmem:[#allocation2 + $0x48] sm:$0xff]
          %v1400 = vld [vmem:[#allocation2 + $0x50] sm:$0xff]
          %v1401 = vld [vmem:[#allocation2 + $0x58] sm:$0xff]
          %v1402 = vld [vmem:[#allocation2 + $0x60] sm:$0xff]
          %v1403 = vld [vmem:[#allocation2 + $0x68] sm:$0xff]
          %v1404 = vld [vmem:[#allocation2 + $0x70] sm:$0xff]
          %v1405 = vld [vmem:[#allocation2 + $0x78] sm:$0xff]
          %v1406 = vld [vmem:[#allocation2 + $0x80] sm:$0xff]
          %v1407 = vld [vmem:[#allocation2 + $0x88] sm:$0xff]
          %v1408 = vld [vmem:[#allocation2 + $0x90] sm:$0xff]
          %v1409 = vld [vmem:[#allocation2 + $0x98] sm:$0xff]
          %v1410 = vld [vmem:[#allocation2 + $0xa0] sm:$0xff]
          %v1411 = vld [vmem:[#allocation2 + $0xa8] sm:$0xff]
          %v1412 = vld [vmem:[#allocation2 + $0xb0] sm:$0xff]
          %v1413 = vld [vmem:[#allocation2 + $0xb8] sm:$0xff]
          %v1414 = vld [vmem:[#allocation2 + $0xc0] sm:$0xff]
          %v1415 = vld [vmem:[#allocation2 + $0xc8] sm:$0xff]
          %v1416 = vld [vmem:[#allocation2 + $0xd0] sm:$0xff]
          %v1417 = vld [vmem:[#allocation2 + $0xd8] sm:$0xff]
          %v1418 = vld [vmem:[#allocation2 + $0xe0] sm:$0xff]
          %v1419 = vld [vmem:[#allocation2 + $0xe8] sm:$0xff]
          %v1420 = vld [vmem:[#allocation2 + $0xf0] sm:$0xff]
          %v1421 = vld [vmem:[#allocation2 + $0xf8] sm:$0xff]
          %v1422 = vld [vmem:[#allocation3] sm:$0xff]
          %v1423 = vld [vmem:[#allocation3 + $0x8] sm:$0xff]
          %v1424 = vld [vmem:[#allocation3 + $0x10] sm:$0xff]
          %v1425 = vld [vmem:[#allocation3 + $0x18] sm:$0xff]
          %v1426 = vld [vmem:[#allocation3 + $0x20] sm:$0xff]
          %v1427 = vld [vmem:[#allocation3 + $0x28] sm:$0xff]
          %v1428 = vld [vmem:[#allocation3 + $0x30] sm:$0xff]
          %v1429 = vld [vmem:[#allocation3 + $0x38] sm:$0xff]
          %v1430 = vld [vmem:[#allocation3 + $0x40] sm:$0xff]
          %v1431 = vld [vmem:[#allocation3 + $0x48] sm:$0xff]
          %v1432 = vld [vmem:[#allocation3 + $0x50] sm:$0xff]
          %v1433 = vld [vmem:[#allocation3 + $0x58] sm:$0xff]
          %v1434 = vld [vmem:[#allocation3 + $0x60] sm:$0xff]
          %v1435 = vld [vmem:[#allocation3 + $0x68] sm:$0xff]
          %v1436 = vld [vmem:[#allocation3 + $0x70] sm:$0xff]
          %v1437 = vld [vmem:[#allocation3 + $0x78] sm:$0xff]
          %v1438 = vld [vmem:[#allocation3 + $0x80] sm:$0xff]
          %v1439 = vld [vmem:[#allocation3 + $0x88] sm:$0xff]
          %v1440 = vld [vmem:[#allocation3 + $0x90] sm:$0xff]
          %v1441 = vld [vmem:[#allocation3 + $0x98] sm:$0xff]
          %v1442 = vld [vmem:[#allocation3 + $0xa0] sm:$0xff]
          %v1443 = vld [vmem:[#allocation3 + $0xa8] sm:$0xff]
          %v1444 = vld [vmem:[#allocation3 + $0xb0] sm:$0xff]
          %v1445 = vld [vmem:[#allocation3 + $0xb8] sm:$0xff]
          %v1446 = vld [vmem:[#allocation3 + $0xc0] sm:$0xff]
          %v1447 = vld [vmem:[#allocation3 + $0xc8] sm:$0xff]
          %v1448 = vld [vmem:[#allocation3 + $0xd0] sm:$0xff]
          %v1449 = vld [vmem:[#allocation3 + $0xd8] sm:$0xff]
          %v1450 = vld [vmem:[#allocation3 + $0xe0] sm:$0xff]
          %v1451 = vld [vmem:[#allocation3 + $0xe8] sm:$0xff]
          %v1452 = vld [vmem:[#allocation3 + $0xf0] sm:$0xff]
          %v1453 = vld [vmem:[#allocation3 + $0xf8] sm:$0xff]
          %v1454 = vlog2.pop %v1422
          %v1455 = vmul.f32 %v1454, 0.6931472
          %v1456 = vlog2.pop %v1423
          %v1457 = vmul.f32 %v1456, 0.6931472
          %v1458 = vlog2.pop %v1424
          %v1459 = vmul.f32 %v1458, 0.6931472
          %v1460 = vlog2.pop %v1425
          %v1461 = vmul.f32 %v1460, 0.6931472
          %v1462 = vlog2.pop %v1426
          %v1463 = vmul.f32 %v1462, 0.6931472
          %v1464 = vlog2.pop %v1427
          %v1465 = vmul.f32 %v1464, 0.6931472
          %v1466 = vlog2.pop %v1428
          %v1467 = vmul.f32 %v1466, 0.6931472
          %v1468 = vlog2.pop %v1429
          %v1469 = vmul.f32 %v1468, 0.6931472
          %v1470 = vlog2.pop %v1430
          %v1471 = vmul.f32 %v1470, 0.6931472
          %v1472 = vlog2.pop %v1431
          %v1473 = vmul.f32 %v1472, 0.6931472
          %v1474 = vlog2.pop %v1432
          %v1475 = vmul.f32 %v1474, 0.6931472
          %v1476 = vlog2.pop %v1433
          %v1477 = vmul.f32 %v1476, 0.6931472
          %v1478 = vlog2.pop %v1434
          %v1479 = vmul.f32 %v1478, 0.6931472
          %v1480 = vlog2.pop %v1435
          %v1481 = vmul.f32 %v1480, 0.6931472
          %v1482 = vlog2.pop %v1436
          %v1483 = vmul.f32 %v1482, 0.6931472
          %v1484 = vlog2.pop %v1437
          %v1485 = vmul.f32 %v1484, 0.6931472
          %v1486 = vlog2.pop %v1438
          %v1487 = vmul.f32 %v1486, 0.6931472
          %v1488 = vlog2.pop %v1439
          %v1489 = vmul.f32 %v1488, 0.6931472
          %v1490 = vlog2.pop %v1440
          %v1491 = vmul.f32 %v1490, 0.6931472
          %v1492 = vlog2.pop %v1441
          %v1493 = vmul.f32 %v1492, 0.6931472
          %v1494 = vlog2.pop %v1442
          %v1495 = vmul.f32 %v1494, 0.6931472
          %v1496 = vlog2.pop %v1443
          %v1497 = vmul.f32 %v1496, 0.6931472
          %v1498 = vlog2.pop %v1444
          %v1499 = vmul.f32 %v1498, 0.6931472
          %v1500 = vlog2.pop %v1445
          %v1501 = vmul.f32 %v1500, 0.6931472
          %v1502 = vlog2.pop %v1446
          %v1503 = vmul.f32 %v1502, 0.6931472
          %v1504 = vlog2.pop %v1447
          %v1505 = vmul.f32 %v1504, 0.6931472
          %v1506 = vlog2.pop %v1448
          %v1507 = vmul.f32 %v1506, 0.6931472
          %v1508 = vlog2.pop %v1449
          %v1509 = vmul.f32 %v1508, 0.6931472
          %v1510 = vlog2.pop %v1450
          %v1511 = vmul.f32 %v1510, 0.6931472
          %v1512 = vlog2.pop %v1451
          %v1513 = vmul.f32 %v1512, 0.6931472
          %v1514 = vlog2.pop %v1452
          %v1515 = vmul.f32 %v1514, 0.6931472
          %v1516 = vlog2.pop %v1453
          %v1517 = vmul.f32 %v1516, 0.6931472
          %v1518 = vadd.f32 %v1390, %v1455
          %v1519 = vadd.f32 %v1391, %v1457
          %v1520 = vadd.f32 %v1392, %v1459
          %v1521 = vadd.f32 %v1393, %v1461
          %v1522 = vadd.f32 %v1394, %v1463
          %v1523 = vadd.f32 %v1395, %v1465
          %v1524 = vadd.f32 %v1396, %v1467
          %v1525 = vadd.f32 %v1397, %v1469
          %v1526 = vadd.f32 %v1398, %v1471
          %v1527 = vadd.f32 %v1399, %v1473
          %v1528 = vadd.f32 %v1400, %v1475
          %v1529 = vadd.f32 %v1401, %v1477
          %v1530 = vadd.f32 %v1402, %v1479
          %v1531 = vadd.f32 %v1403, %v1481
          %v1532 = vadd.f32 %v1404, %v1483
          %v1533 = vadd.f32 %v1405, %v1485
          %v1534 = vadd.f32 %v1406, %v1487
          %v1535 = vadd.f32 %v1407, %v1489
          %v1536 = vadd.f32 %v1408, %v1491
          %v1537 = vadd.f32 %v1409, %v1493
          %v1538 = vadd.f32 %v1410, %v1495
          %v1539 = vadd.f32 %v1411, %v1497
          %v1540 = vadd.f32 %v1412, %v1499
          %v1541 = vadd.f32 %v1413, %v1501
          %v1542 = vadd.f32 %v1414, %v1503
          %v1543 = vadd.f32 %v1415, %v1505
          %v1544 = vadd.f32 %v1416, %v1507
          %v1545 = vadd.f32 %v1417, %v1509
          %v1546 = vadd.f32 %v1418, %v1511
          %v1547 = vadd.f32 %v1419, %v1513
          %v1548 = vadd.f32 %v1420, %v1515
          %v1549 = vadd.f32 %v1421, %v1517
          %v1550 = vld [vmem:[#allocation6] sm:$0x1]
          %v1551 = vsel %vm1321, %v1518, 0.0
          %v1552 = vsel %vm1321, %v1519, 0.0
          %v1553 = vadd.f32 %v1551, %v1552
          %v1554 = vsel %vm1321, %v1520, 0.0
          %v1555 = vadd.f32 %v1553, %v1554
          %v1556 = vsel %vm1321, %v1521, 0.0
          %v1557 = vadd.f32 %v1555, %v1556
          %v1558 = vsel %vm1321, %v1522, 0.0
          %v1559 = vadd.f32 %v1557, %v1558
          %v1560 = vsel %vm1321, %v1523, 0.0
          %v1561 = vadd.f32 %v1559, %v1560
          %v1562 = vsel %vm1321, %v1524, 0.0
          %v1563 = vadd.f32 %v1561, %v1562
          %v1564 = vsel %vm1321, %v1525, 0.0
          %v1565 = vadd.f32 %v1563, %v1564
          %v1566 = vsel %vm1321, %v1526, 0.0
          %v1567 = vadd.f32 %v1565, %v1566
          %v1568 = vsel %vm1321, %v1527, 0.0
          %v1569 = vadd.f32 %v1567, %v1568
          %v1570 = vsel %vm1321, %v1528, 0.0
          %v1571 = vadd.f32 %v1569, %v1570
          %v1572 = vsel %vm1321, %v1529, 0.0
          %v1573 = vadd.f32 %v1571, %v1572
          %v1574 = vsel %vm1321, %v1530, 0.0
          %v1575 = vadd.f32 %v1573, %v1574
          %v1576 = vsel %vm1321, %v1531, 0.0
          %v1577 = vadd.f32 %v1575, %v1576
          %v1578 = vsel %vm1321, %v1532, 0.0
          %v1579 = vadd.f32 %v1577, %v1578
          %v1580 = vsel %vm1321, %v1533, 0.0
          %v1581 = vadd.f32 %v1579, %v1580
          %v1582 = vsel %vm1321, %v1534, 0.0
          %v1583 = vadd.f32 %v1581, %v1582
          %v1584 = vsel %vm1321, %v1535, 0.0
          %v1585 = vadd.f32 %v1583, %v1584
          %v1586 = vsel %vm1321, %v1536, 0.0
          %v1587 = vadd.f32 %v1585, %v1586
          %v1588 = vsel %vm1321, %v1537, 0.0
          %v1589 = vadd.f32 %v1587, %v1588
          %v1590 = vsel %vm1321, %v1538, 0.0
          %v1591 = vadd.f32 %v1589, %v1590
          %v1592 = vsel %vm1321, %v1539, 0.0
          %v1593 = vadd.f32 %v1591, %v1592
          %v1594 = vsel %vm1321, %v1540, 0.0
          %v1595 = vadd.f32 %v1593, %v1594
          %v1596 = vsel %vm1321, %v1541, 0.0
          %v1597 = vadd.f32 %v1595, %v1596
          %v1598 = vsel %vm1321, %v1542, 0.0
          %v1599 = vadd.f32 %v1597, %v1598
          %v1600 = vsel %vm1321, %v1543, 0.0
          %v1601 = vadd.f32 %v1599, %v1600
          %v1602 = vsel %vm1321, %v1544, 0.0
          %v1603 = vadd.f32 %v1601, %v1602
          %v1604 = vsel %vm1321, %v1545, 0.0
          %v1605 = vadd.f32 %v1603, %v1604
          %v1606 = vsel %vm1321, %v1546, 0.0
          %v1607 = vadd.f32 %v1605, %v1606
          %v1608 = vsel %vm1321, %v1547, 0.0
          %v1609 = vadd.f32 %v1607, %v1608
          %v1610 = vsel %vm1321, %v1548, 0.0
          %v1611 = vadd.f32 %v1609, %v1610
          %v1612 = vsel %vm1321, %v1549, 0.0
          %v1613 = vadd.f32 %v1611, %v1612
          %v1614 = vrot.slane %v1613, 4
          %v1615 = vadd.f32 %v1613, %v1614
          %v1616 = vrot.slane %v1615, 2
          %v1617 = vadd.f32 %v1615, %v1616
          %v1618 = vrot.slane %v1617, 1
          %v1619 = vadd.f32 %v1617, %v1618
          %v1620 = vadd.f32 %v1550, %v1619
          %vm1621 = vcmask 0
          %1622 = vst.msk [vmem:[#allocation6] sm:$0x1] %vm1621, %v1620
        $region52: #{tpu_custom_call.1} parent=31 // pred_fallthru
          _
        // Predicated region
        $region53: #{tpu_custom_call.1} parent=31 // pred_check
          %p1623 = pneg %p603
        $region54: #{tpu_custom_call.1} parent=31 // pred_check_branch
          %1625 = sbr.rel (%p1623) target = $region56
        $region55: #{tpu_custom_call.1} parent=31 // pred_region
          %s1626 = scalar_lea.vmem [#allocation4], %s25
          %1627 = vst [vmem:[%s1626] sm:$0x1] -1e+30
          %s1628 = scalar_lea.vmem [#allocation5], %s25
          %1629 = vst [vmem:[%s1628] sm:$0x1] 0.0
        $region56: #{tpu_custom_call.1} parent=31 // pred_fallthru
          _
        %s1630 = scalar_lea.vmem [#allocation4], %s25
        %v1631 = vld [vmem:[%s1630] sm:$0x1]
        %v1632 = vmax.f32 %v571, %v575
        %v1633 = vmax.f32 %v572, %v576
        %v1634 = vmax.f32 %v573, %v577
        %v1635 = vmax.f32 %v574, %v578
        %v1636 = vmax.f32 %v1632, %v579
        %v1637 = vmax.f32 %v1633, %v580
        %v1638 = vmax.f32 %v1634, %v581
        %v1639 = vmax.f32 %v1635, %v582
        %v1640 = vmax.f32 %v1636, %v583
        %v1641 = vmax.f32 %v1637, %v584
        %v1642 = vmax.f32 %v1638, %v585
        %v1643 = vmax.f32 %v1639, %v586
        %v1644 = vmax.f32 %v1640, %v587
        %v1645 = vmax.f32 %v1641, %v588
        %v1646 = vmax.f32 %v1642, %v589
        %v1647 = vmax.f32 %v1643, %v590
        %v1648 = vmax.f32 %v1644, %v591
        %v1649 = vmax.f32 %v1645, %v592
        %v1650 = vmax.f32 %v1646, %v593
        %v1651 = vmax.f32 %v1647, %v594
        %v1652 = vmax.f32 %v1648, %v595
        %v1653 = vmax.f32 %v1649, %v596
        %v1654 = vmax.f32 %v1650, %v597
        %v1655 = vmax.f32 %v1651, %v598
        %v1656 = vmax.f32 %v1652, %v599
        %v1657 = vmax.f32 %v1653, %v600
        %v1658 = vmax.f32 %v1654, %v601
        %v1659 = vmax.f32 %v1655, %v602
        %v1660 = vmax.f32 %v1656, %v1657
        %v1661 = vmax.f32 %v1658, %v1659
        %v1662 = vmax.f32 %v1660, %v1661
        %v1663 = vrot.slane %v1662, 4
        %v1664 = vmax.f32 %v1662, %v1663
        %v1665 = vrot.slane %v1664, 2
        %v1666 = vmax.f32 %v1664, %v1665
        %v1667 = vrot.slane %v1666, 1
        %v1668 = vmax.f32 %v1666, %v1667
        %v1669 = vmax.f32 %v1631, %v1668
        %s1670 = scalar_lea.vmem [#allocation5], %s25
        %v1671 = vld [vmem:[%s1670] sm:$0x1]
        %v1672 = vsub.f32 %v1631, %v1669
        %v1673 = vmul.f32 %v1672, 1.442695
        %v1674 = vpow.pop %v1673
        %v1675 = vmul.f32 %v1671, %v1674
        %v1677 = vlaneseq
        %v1678 = vshrl.u32 %v1677, 7
        %v1679 = vsub.s32 0, %v1678
        %v1680 = vrot.slane %v1669, %v1679
        %v1682 = vsub.f32 %v571, %v1680
        %v1683 = vsub.f32 %v572, %v1680
        %v1684 = vsub.f32 %v573, %v1680
        %v1685 = vsub.f32 %v574, %v1680
        %v1686 = vsub.f32 %v575, %v1680
        %v1687 = vsub.f32 %v576, %v1680
        %v1688 = vsub.f32 %v577, %v1680
        %v1689 = vsub.f32 %v578, %v1680
        %v1690 = vsub.f32 %v579, %v1680
        %v1691 = vsub.f32 %v580, %v1680
        %v1692 = vsub.f32 %v581, %v1680
        %v1693 = vsub.f32 %v582, %v1680
        %v1694 = vsub.f32 %v583, %v1680
        %v1695 = vsub.f32 %v584, %v1680
        %v1696 = vsub.f32 %v585, %v1680
        %v1697 = vsub.f32 %v586, %v1680
        %v1698 = vsub.f32 %v587, %v1680
        %v1699 = vsub.f32 %v588, %v1680
        %v1700 = vsub.f32 %v589, %v1680
        %v1701 = vsub.f32 %v590, %v1680
        %v1702 = vsub.f32 %v591, %v1680
        %v1703 = vsub.f32 %v592, %v1680
        %v1704 = vsub.f32 %v593, %v1680
        %v1705 = vsub.f32 %v594, %v1680
        %v1706 = vsub.f32 %v595, %v1680
        %v1707 = vsub.f32 %v596, %v1680
        %v1708 = vsub.f32 %v597, %v1680
        %v1709 = vsub.f32 %v598, %v1680
        %v1710 = vsub.f32 %v599, %v1680
        %v1711 = vsub.f32 %v600, %v1680
        %v1712 = vsub.f32 %v601, %v1680
        %v1713 = vsub.f32 %v602, %v1680
        %v1714 = vmul.f32 %v1682, 1.442695
        %v1715 = vpow.pop %v1714
        %v1716 = vmul.f32 %v1683, 1.442695
        %v1717 = vpow.pop %v1716
        %v1718 = vmul.f32 %v1684, 1.442695
        %v1719 = vpow.pop %v1718
        %v1720 = vmul.f32 %v1685, 1.442695
        %v1721 = vpow.pop %v1720
        %v1722 = vmul.f32 %v1686, 1.442695
        %v1723 = vpow.pop %v1722
        %v1724 = vmul.f32 %v1687, 1.442695
        %v1725 = vpow.pop %v1724
        %v1726 = vmul.f32 %v1688, 1.442695
        %v1727 = vpow.pop %v1726
        %v1728 = vmul.f32 %v1689, 1.442695
        %v1729 = vpow.pop %v1728
        %v1730 = vmul.f32 %v1690, 1.442695
        %v1731 = vpow.pop %v1730
        %v1732 = vmul.f32 %v1691, 1.442695
        %v1733 = vpow.pop %v1732
        %v1734 = vmul.f32 %v1692, 1.442695
        %v1735 = vpow.pop %v1734
        %v1736 = vmul.f32 %v1693, 1.442695
        %v1737 = vpow.pop %v1736
        %v1738 = vmul.f32 %v1694, 1.442695
        %v1739 = vpow.pop %v1738
        %v1740 = vmul.f32 %v1695, 1.442695
        %v1741 = vpow.pop %v1740
        %v1742 = vmul.f32 %v1696, 1.442695
        %v1743 = vpow.pop %v1742
        %v1744 = vmul.f32 %v1697, 1.442695
        %v1745 = vpow.pop %v1744
        %v1746 = vmul.f32 %v1698, 1.442695
        %v1747 = vpow.pop %v1746
        %v1748 = vmul.f32 %v1699, 1.442695
        %v1749 = vpow.pop %v1748
        %v1750 = vmul.f32 %v1700, 1.442695
        %v1751 = vpow.pop %v1750
        %v1752 = vmul.f32 %v1701, 1.442695
        %v1753 = vpow.pop %v1752
        %v1754 = vmul.f32 %v1702, 1.442695
        %v1755 = vpow.pop %v1754
        %v1756 = vmul.f32 %v1703, 1.442695
        %v1757 = vpow.pop %v1756
        %v1758 = vmul.f32 %v1704, 1.442695
        %v1759 = vpow.pop %v1758
        %v1760 = vmul.f32 %v1705, 1.442695
        %v1761 = vpow.pop %v1760
        %v1762 = vmul.f32 %v1706, 1.442695
        %v1763 = vpow.pop %v1762
        %v1764 = vmul.f32 %v1707, 1.442695
        %v1765 = vpow.pop %v1764
        %v1766 = vmul.f32 %v1708, 1.442695
        %v1767 = vpow.pop %v1766
        %v1768 = vmul.f32 %v1709, 1.442695
        %v1769 = vpow.pop %v1768
        %v1770 = vmul.f32 %v1710, 1.442695
        %v1771 = vpow.pop %v1770
        %v1772 = vmul.f32 %v1711, 1.442695
        %v1773 = vpow.pop %v1772
        %v1774 = vmul.f32 %v1712, 1.442695
        %v1775 = vpow.pop %v1774
        %v1776 = vmul.f32 %v1713, 1.442695
        %v1777 = vpow.pop %v1776
        %v1778 = vadd.f32 %v1715, %v1717
        %v1779 = vadd.f32 %v1778, %v1719
        %v1780 = vadd.f32 %v1779, %v1721
        %v1781 = vadd.f32 %v1780, %v1723
        %v1782 = vadd.f32 %v1781, %v1725
        %v1783 = vadd.f32 %v1782, %v1727
        %v1784 = vadd.f32 %v1783, %v1729
        %v1785 = vadd.f32 %v1784, %v1731
        %v1786 = vadd.f32 %v1785, %v1733
        %v1787 = vadd.f32 %v1786, %v1735
        %v1788 = vadd.f32 %v1787, %v1737
        %v1789 = vadd.f32 %v1788, %v1739
        %v1790 = vadd.f32 %v1789, %v1741
        %v1791 = vadd.f32 %v1790, %v1743
        %v1792 = vadd.f32 %v1791, %v1745
        %v1793 = vadd.f32 %v1792, %v1747
        %v1794 = vadd.f32 %v1793, %v1749
        %v1795 = vadd.f32 %v1794, %v1751
        %v1796 = vadd.f32 %v1795, %v1753
        %v1797 = vadd.f32 %v1796, %v1755
        %v1798 = vadd.f32 %v1797, %v1757
        %v1799 = vadd.f32 %v1798, %v1759
        %v1800 = vadd.f32 %v1799, %v1761
        %v1801 = vadd.f32 %v1800, %v1763
        %v1802 = vadd.f32 %v1801, %v1765
        %v1803 = vadd.f32 %v1802, %v1767
        %v1804 = vadd.f32 %v1803, %v1769
        %v1805 = vadd.f32 %v1804, %v1771
        %v1806 = vadd.f32 %v1805, %v1773
        %v1807 = vadd.f32 %v1806, %v1775
        %v1808 = vadd.f32 %v1807, %v1777
        %v1809 = vrot.slane %v1808, 4
        %v1810 = vadd.f32 %v1808, %v1809
        %v1811 = vrot.slane %v1810, 2
        %v1812 = vadd.f32 %v1810, %v1811
        %v1813 = vrot.slane %v1812, 1
        %v1814 = vadd.f32 %v1812, %v1813
        %v1815 = vadd.f32 %v1675, %v1814
        %1816 = vst [vmem:[%s1630] sm:$0x1] %v1669
        %1817 = vst [vmem:[%s1670] sm:$0x1] %v1815
        // Predicated region
        $region57: #{tpu_custom_call.1} parent=31 // pred_check
          %p1818 = pneg %p603
        $region58: #{tpu_custom_call.1} parent=31 // pred_check_branch
          %1820 = sbr.rel (%p1818) target = $region60
        $region59: #{tpu_custom_call.1} parent=31 // pred_region
          %v1821 = vlog2.pop %v1815
          %v1822 = vmul.f32 %v1821, 0.6931472
          %v1823 = vadd.f32 %v1669, %v1822
          %v1824 = vld [vmem:[#allocation7] sm:$0x1]
          %vm1825 = vcmask 1040384
          %v1826 = vsel %vm1825, %v1823, 0.0
          %1827 = vadd.xlane.f32.xlu0 %v1826
          %v1828 = vpop.xlane.xlu0 %1827
          %v1829 = vadd.f32 %v1824, %v1828
          %vm1830 = vcmask 0
          %1831 = vst.msk [vmem:[#allocation7] sm:$0x1] %vm1830, %v1829
        $region60: #{tpu_custom_call.1} parent=31 // pred_fallthru
          _
        %s1832 = smul.u32 %s24, 256
        %s1833 = smul.u32 %s25, 128
        %s1834 = sadd.s32 %s1833, 128
        %p1835 = scmp.gt.s32.totalorder %s1834, %s1832
        %s1836 = sadd.s32 %s1832, 256
        %p1837 = scmp.lt.s32.totalorder %s1833, %s1836
        %p1838 = pnand %p1835, %p1837
        %p1839 = pneg %p1838
        // Predicated region
        $region61: #{tpu_custom_call.1} parent=31 // pred_check
          _
        $region62: #{tpu_custom_call.1} parent=31 // pred_check_branch
          %1841 = sbr.rel (%p1838) target = $region64
        $region63: #{tpu_custom_call.1} parent=31 // pred_region
          %v1842 = vlaneseq
          %v1843 = vshrl.u32 %v1842, 7
          %v1844 = vadd.s32 %v1843, 8
          %v1845 = vadd.s32 %v1843, 16
          %v1846 = vadd.s32 %v1843, 24
          %v1847 = vadd.s32 %v1843, 32
          %v1848 = vadd.s32 %v1843, 40
          %v1849 = vadd.s32 %v1843, 48
          %v1850 = vadd.s32 %v1843, 56
          %v1851 = vadd.s32 %v1843, 64
          %v1852 = vadd.s32 %v1843, 72
          %v1853 = vadd.s32 %v1843, 80
          %v1854 = vadd.s32 %v1843, 88
          %v1855 = vadd.s32 %v1843, 96
          %v1856 = vadd.s32 %v1843, 104
          %v1857 = vadd.s32 %v1843, 112
          %v1858 = vadd.s32 %v1843, 120
          %v1859 = vadd.s32 %v1843, 128
          %v1860 = vadd.s32 %v1843, 136
          %v1861 = vadd.s32 %v1843, 144
          %v1862 = vadd.s32 %v1843, 152
          %v1863 = vadd.s32 %v1843, 160
          %v1864 = vadd.s32 %v1843, 168
          %v1865 = vadd.s32 %v1843, 176
          %v1866 = vadd.s32 %v1843, 184
          %v1867 = vadd.s32 %v1843, 192
          %v1868 = vadd.s32 %v1843, 200
          %v1869 = vadd.s32 %v1843, 208
          %v1870 = vadd.s32 %v1843, 216
          %v1871 = vadd.s32 %v1843, 224
          %v1872 = vadd.s32 %v1843, 232
          %v1873 = vadd.s32 %v1843, 240
          %v1874 = vadd.s32 %v1843, 248
          %v1875 = vstv %s1832
          %v1876 = vadd.s32 %v1875, %v1843
          %v1877 = vadd.s32 %v1875, %v1844
          %v1878 = vadd.s32 %v1875, %v1845
          %v1879 = vadd.s32 %v1875, %v1846
          %v1880 = vadd.s32 %v1875, %v1847
          %v1881 = vadd.s32 %v1875, %v1848
          %v1882 = vadd.s32 %v1875, %v1849
          %v1883 = vadd.s32 %v1875, %v1850
          %v1884 = vadd.s32 %v1875, %v1851
          %v1885 = vadd.s32 %v1875, %v1852
          %v1886 = vadd.s32 %v1875, %v1853
          %v1887 = vadd.s32 %v1875, %v1854
          %v1888 = vadd.s32 %v1875, %v1855
          %v1889 = vadd.s32 %v1875, %v1856
          %v1890 = vadd.s32 %v1875, %v1857
          %v1891 = vadd.s32 %v1875, %v1858
          %v1892 = vadd.s32 %v1875, %v1859
          %v1893 = vadd.s32 %v1875, %v1860
          %v1894 = vadd.s32 %v1875, %v1861
          %v1895 = vadd.s32 %v1875, %v1862
          %v1896 = vadd.s32 %v1875, %v1863
          %v1897 = vadd.s32 %v1875, %v1864
          %v1898 = vadd.s32 %v1875, %v1865
          %v1899 = vadd.s32 %v1875, %v1866
          %v1900 = vadd.s32 %v1875, %v1867
          %v1901 = vadd.s32 %v1875, %v1868
          %v1902 = vadd.s32 %v1875, %v1869
          %v1903 = vadd.s32 %v1875, %v1870
          %v1904 = vadd.s32 %v1875, %v1871
          %v1905 = vadd.s32 %v1875, %v1872
          %v1906 = vadd.s32 %v1875, %v1873
          %v1907 = vadd.s32 %v1875, %v1874
          %v1908 = vlaneseq
          %v1909 = vand.u32 %v1908, 127
          %v1910 = vstv %s1833
          %v1911 = vadd.s32 %v1910, %v1909
          %vm1912 = vcmp.eq.s32.totalorder %v1876, %v1911
          %vm1913 = vcmp.eq.s32.totalorder %v1877, %v1911
          %vm1914 = vcmp.eq.s32.totalorder %v1878, %v1911
          %vm1915 = vcmp.eq.s32.totalorder %v1879, %v1911
          %vm1916 = vcmp.eq.s32.totalorder %v1880, %v1911
          %vm1917 = vcmp.eq.s32.totalorder %v1881, %v1911
          %vm1918 = vcmp.eq.s32.totalorder %v1882, %v1911
          %vm1919 = vcmp.eq.s32.totalorder %v1883, %v1911
          %vm1920 = vcmp.eq.s32.totalorder %v1884, %v1911
          %vm1921 = vcmp.eq.s32.totalorder %v1885, %v1911
          %vm1922 = vcmp.eq.s32.totalorder %v1886, %v1911
          %vm1923 = vcmp.eq.s32.totalorder %v1887, %v1911
          %vm1924 = vcmp.eq.s32.totalorder %v1888, %v1911
          %vm1925 = vcmp.eq.s32.totalorder %v1889, %v1911
          %vm1926 = vcmp.eq.s32.totalorder %v1890, %v1911
          %vm1927 = vcmp.eq.s32.totalorder %v1891, %v1911
          %vm1928 = vcmp.eq.s32.totalorder %v1892, %v1911
          %vm1929 = vcmp.eq.s32.totalorder %v1893, %v1911
          %vm1930 = vcmp.eq.s32.totalorder %v1894, %v1911
          %vm1931 = vcmp.eq.s32.totalorder %v1895, %v1911
          %vm1932 = vcmp.eq.s32.totalorder %v1896, %v1911
          %vm1933 = vcmp.eq.s32.totalorder %v1897, %v1911
          %vm1934 = vcmp.eq.s32.totalorder %v1898, %v1911
          %vm1935 = vcmp.eq.s32.totalorder %v1899, %v1911
          %vm1936 = vcmp.eq.s32.totalorder %v1900, %v1911
          %vm1937 = vcmp.eq.s32.totalorder %v1901, %v1911
          %vm1938 = vcmp.eq.s32.totalorder %v1902, %v1911
          %vm1939 = vcmp.eq.s32.totalorder %v1903, %v1911
          %vm1940 = vcmp.eq.s32.totalorder %v1904, %v1911
          %vm1941 = vcmp.eq.s32.totalorder %v1905, %v1911
          %vm1942 = vcmp.eq.s32.totalorder %v1906, %v1911
          %vm1943 = vcmp.eq.s32.totalorder %v1907, %v1911
          %v1944 = vsel %vm1912, %v571, 0.0
          %v1945 = vsel %vm1913, %v572, 0.0
          %v1946 = vsel %vm1914, %v573, 0.0
          %v1947 = vsel %vm1915, %v574, 0.0
          %v1948 = vsel %vm1916, %v575, 0.0
          %v1949 = vsel %vm1917, %v576, 0.0
          %v1950 = vsel %vm1918, %v577, 0.0
          %v1951 = vsel %vm1919, %v578, 0.0
          %v1952 = vsel %vm1920, %v579, 0.0
          %v1953 = vsel %vm1921, %v580, 0.0
          %v1954 = vsel %vm1922, %v581, 0.0
          %v1955 = vsel %vm1923, %v582, 0.0
          %v1956 = vsel %vm1924, %v583, 0.0
          %v1957 = vsel %vm1925, %v584, 0.0
          %v1958 = vsel %vm1926, %v585, 0.0
          %v1959 = vsel %vm1927, %v586, 0.0
          %v1960 = vsel %vm1928, %v587, 0.0
          %v1961 = vsel %vm1929, %v588, 0.0
          %v1962 = vsel %vm1930, %v589, 0.0
          %v1963 = vsel %vm1931, %v590, 0.0
          %v1964 = vsel %vm1932, %v591, 0.0
          %v1965 = vsel %vm1933, %v592, 0.0
          %v1966 = vsel %vm1934, %v593, 0.0
          %v1967 = vsel %vm1935, %v594, 0.0
          %v1968 = vsel %vm1936, %v595, 0.0
          %v1969 = vsel %vm1937, %v596, 0.0
          %v1970 = vsel %vm1938, %v597, 0.0
          %v1971 = vsel %vm1939, %v598, 0.0
          %v1972 = vsel %vm1940, %v599, 0.0
          %v1973 = vsel %vm1941, %v600, 0.0
          %v1974 = vsel %vm1942, %v601, 0.0
          %v1975 = vsel %vm1943, %v602, 0.0
          %1976 = vadd.xlane.f32.xlu0 %v1944
          %v1977 = vpop.xlane.xlu0 %1976
          %1978 = vadd.xlane.f32.xlu0 %v1945
          %v1979 = vpop.xlane.xlu0 %1978
          %1980 = vadd.xlane.f32.xlu0 %v1946
          %v1981 = vpop.xlane.xlu0 %1980
          %1982 = vadd.xlane.f32.xlu0 %v1947
          %v1983 = vpop.xlane.xlu0 %1982
          %1984 = vadd.xlane.f32.xlu0 %v1948
          %v1985 = vpop.xlane.xlu0 %1984
          %1986 = vadd.xlane.f32.xlu0 %v1949
          %v1987 = vpop.xlane.xlu0 %1986
          %1988 = vadd.xlane.f32.xlu0 %v1950
          %v1989 = vpop.xlane.xlu0 %1988
          %1990 = vadd.xlane.f32.xlu0 %v1951
          %v1991 = vpop.xlane.xlu0 %1990
          %1992 = vadd.xlane.f32.xlu0 %v1952
          %v1993 = vpop.xlane.xlu0 %1992
          %1994 = vadd.xlane.f32.xlu0 %v1953
          %v1995 = vpop.xlane.xlu0 %1994
          %1996 = vadd.xlane.f32.xlu0 %v1954
          %v1997 = vpop.xlane.xlu0 %1996
          %1998 = vadd.xlane.f32.xlu0 %v1955
          %v1999 = vpop.xlane.xlu0 %1998
          %2000 = vadd.xlane.f32.xlu0 %v1956
          %v2001 = vpop.xlane.xlu0 %2000
          %2002 = vadd.xlane.f32.xlu0 %v1957
          %v2003 = vpop.xlane.xlu0 %2002
          %2004 = vadd.xlane.f32.xlu0 %v1958
          %v2005 = vpop.xlane.xlu0 %2004
          %2006 = vadd.xlane.f32.xlu0 %v1959
          %v2007 = vpop.xlane.xlu0 %2006
          %2008 = vadd.xlane.f32.xlu0 %v1960
          %v2009 = vpop.xlane.xlu0 %2008
          %2010 = vadd.xlane.f32.xlu0 %v1961
          %v2011 = vpop.xlane.xlu0 %2010
          %2012 = vadd.xlane.f32.xlu0 %v1962
          %v2013 = vpop.xlane.xlu0 %2012
          %2014 = vadd.xlane.f32.xlu0 %v1963
          %v2015 = vpop.xlane.xlu0 %2014
          %2016 = vadd.xlane.f32.xlu0 %v1964
          %v2017 = vpop.xlane.xlu0 %2016
          %2018 = vadd.xlane.f32.xlu0 %v1965
          %v2019 = vpop.xlane.xlu0 %2018
          %2020 = vadd.xlane.f32.xlu0 %v1966
          %v2021 = vpop.xlane.xlu0 %2020
          %2022 = vadd.xlane.f32.xlu0 %v1967
          %v2023 = vpop.xlane.xlu0 %2022
          %2024 = vadd.xlane.f32.xlu0 %v1968
          %v2025 = vpop.xlane.xlu0 %2024
          %2026 = vadd.xlane.f32.xlu0 %v1969
          %v2027 = vpop.xlane.xlu0 %2026
          %2028 = vadd.xlane.f32.xlu0 %v1970
          %v2029 = vpop.xlane.xlu0 %2028
          %2030 = vadd.xlane.f32.xlu0 %v1971
          %v2031 = vpop.xlane.xlu0 %2030
          %2032 = vadd.xlane.f32.xlu0 %v1972
          %v2033 = vpop.xlane.xlu0 %2032
          %2034 = vadd.xlane.f32.xlu0 %v1973
          %v2035 = vpop.xlane.xlu0 %2034
          %2036 = vadd.xlane.f32.xlu0 %v1974
          %v2037 = vpop.xlane.xlu0 %2036
          %2038 = vadd.xlane.f32.xlu0 %v1975
          %v2039 = vpop.xlane.xlu0 %2038
          %v2040 = vld [vmem:[#allocation8] sm:$0x1]
          %v2041 = vadd.f32 %v1977, %v1979
          %v2042 = vadd.f32 %v2041, %v1981
          %v2043 = vadd.f32 %v2042, %v1983
          %v2044 = vadd.f32 %v2043, %v1985
          %v2045 = vadd.f32 %v2044, %v1987
          %v2046 = vadd.f32 %v2045, %v1989
          %v2047 = vadd.f32 %v2046, %v1991
          %v2048 = vadd.f32 %v2047, %v1993
          %v2049 = vadd.f32 %v2048, %v1995
          %v2050 = vadd.f32 %v2049, %v1997
          %v2051 = vadd.f32 %v2050, %v1999
          %v2052 = vadd.f32 %v2051, %v2001
          %v2053 = vadd.f32 %v2052, %v2003
          %v2054 = vadd.f32 %v2053, %v2005
          %v2055 = vadd.f32 %v2054, %v2007
          %v2056 = vadd.f32 %v2055, %v2009
          %v2057 = vadd.f32 %v2056, %v2011
          %v2058 = vadd.f32 %v2057, %v2013
          %v2059 = vadd.f32 %v2058, %v2015
          %v2060 = vadd.f32 %v2059, %v2017
          %v2061 = vadd.f32 %v2060, %v2019
          %v2062 = vadd.f32 %v2061, %v2021
          %v2063 = vadd.f32 %v2062, %v2023
          %v2064 = vadd.f32 %v2063, %v2025
          %v2065 = vadd.f32 %v2064, %v2027
          %v2066 = vadd.f32 %v2065, %v2029
          %v2067 = vadd.f32 %v2066, %v2031
          %v2068 = vadd.f32 %v2067, %v2033
          %v2069 = vadd.f32 %v2068, %v2035
          %v2070 = vadd.f32 %v2069, %v2037
          %v2071 = vadd.f32 %v2070, %v2039
          %v2072 = vrot.slane %v2071, 4
          %v2073 = vadd.f32 %v2071, %v2072
          %v2074 = vrot.slane %v2073, 2
          %v2075 = vadd.f32 %v2073, %v2074
          %v2076 = vrot.slane %v2075, 1
          %v2077 = vadd.f32 %v2075, %v2076
          %v2078 = vadd.f32 %v2040, %v2077
          %vm2079 = vcmask 0
          %2080 = vst.msk [vmem:[#allocation8] sm:$0x1] %vm2079, %v2078
        $region64: #{tpu_custom_call.1} parent=31 // pred_fallthru
          _
        %p2081 = pnand %p603, %p1386
        %p2082 = pneg %p2081
        // Predicated region
        $region65: #{tpu_custom_call.1} parent=31 // pred_check
          _
        $region66: #{tpu_custom_call.1} parent=31 // pred_check_branch
          %2084 = sbr.rel (%p2081) target = $region68
        $region67: #{tpu_custom_call.1} parent=31 // pred_region
          %v2085 = vld [vmem:[#allocation6] sm:$0x1]
          %v2086 = vld [vmem:[#allocation7] sm:$0x1]
          %v2087 = vadd.f32 %v2085, %v2086
          %v2088 = vld [vmem:[#allocation8] sm:$0x1]
          %v2089 = vmul.f32 %v2088, 2.0
          %v2090 = vsub.f32 %v2087, %v2089
          %v2091 = vrcp.pop 512.0
          %v2092 = vmul.f32 %v2090, %v2091
          %vm2093 = vcmask 0
          %2094 = vst.msk [vmem:[#allocation15] sm:$0x1] %vm2093, %v2092
        $region68: #{tpu_custom_call.1} parent=31 // pred_fallthru
          _
        // Predicated region
        $region69: #{tpu_custom_call.1} parent=31 // pred_check
          %p2095 = pneg %p118
        $region70: #{tpu_custom_call.1} parent=31 // pred_check_branch
          %2097 = sbr.rel (%p2095) target = $region72
        $region71: #{tpu_custom_call.1} parent=31 // pred_region
          %s2099 = ssub.s32 16, 16
          %2100 = vsyncadd [#allocation12], %s2099
          %s2102 = sshll.u32 [#allocation15], 4
          %s2103 = int_to_ptr.vmem [resolvable:$true] %s2102
          %2105 = dma.vmem_to_hbm [thread:$0]  %s2103, 16, %s3, [#allocation12]
        $region72: #{tpu_custom_call.1} parent=31 // pred_fallthru
          _
        // Predicated region
        $region73: #{tpu_custom_call.1} parent=31 // pred_check
          %p2106 = pneg %p118
        $region74: #{tpu_custom_call.1} parent=31 // pred_check_branch
          %2108 = sbr.rel (%p2106) target = $region76
        $region75: #{tpu_custom_call.1} parent=31 // pred_region
          %2109 = dma.done [#allocation12], 16
        $region76: #{tpu_custom_call.1} parent=31 // pred_fallthru
          _
      $region32: #{tpu_custom_call.1} parent=5 // pred_fallthru
        _
      %p2110 = scmp.le.s32.totalorder 2, %s15
      // Predicated region
      $region77: #{tpu_custom_call.1} parent=5 // pred_check
        %p2111 = pneg %p2110
      $region78: #{tpu_custom_call.1} parent=5 // pred_check_branch
        %2113 = sbr.rel (%p2111) target = $region80
      $region79: #{tpu_custom_call.1} parent=5 // pred_region
        %s2114 = ssub.s32 %s15, 2
      $region80: #{tpu_custom_call.1} parent=5 // pred_fallthru
        _
    $region6: #{tpu_custom_call.1} parent=1 // loop_footer
      %s19 = sadd.s32 1, %s15
    $region7: #{tpu_custom_call.1} parent=1 // loop_footer_branch
      %14 = sbr.rel target = $region3
    $region8: #{tpu_custom_call.1} parent=1 // loop_exit
      _
    %2115 = vsyncpa [#allocation11], 1
    %s2116 = scalar_lea.sflag [#allocation11], 1
    %2117 = vsyncpa %s2116, 1
    %2118 = vsyncpa [#allocation14], 1
    %s2119 = scalar_lea.sflag [#allocation14], 1
    %2120 = vsyncpa %s2119, 1
    %2121 = vsyncpa [#allocation12], 1
    %s2122 = scalar_lea.sflag [#allocation12], 1
    %2123 = vsyncpa %s2122, 1

// kernel: tpu_custom_call.1
$region0: #{tpu_custom_call.1}
  #allocation0 [shape = 'u32[]', space=smem, size = 0x4, offset = 0x4, fixed_abs, tag = 'smem constant byte address 0x4 - core index']
  #allocation1 [shape = 'u32[144,128]{1,0:T(1,128)}', space=vmem, size = 0x12000, scoped, tag = 'internal scratch']
  #allocation2 [shape = 'f32[256,1]{1,0:T(8,128)}', space=vmem, size = 0x20000, scoped, tag = 'scratch operand']
  #allocation3 [shape = 'f32[256,1]{1,0:T(8,128)}', space=vmem, size = 0x20000, scoped, tag = 'scratch operand']
  #allocation4 [shape = 'f32[2,1,128]{2,1,0:T(1,128)}', space=vmem, size = 0x400, scoped, tag = 'scratch operand']
  #allocation5 [shape = 'f32[2,1,128]{2,1,0:T(1,128)}', space=vmem, size = 0x400, scoped, tag = 'scratch operand']
  #allocation6 [shape = 'f32[1,1]{1,0:T(1,128)}', space=vmem, size = 0x200, scoped, tag = 'scratch operand']
  #allocation7 [shape = 'f32[1,1]{1,0:T(1,128)}', space=vmem, size = 0x200, scoped, tag = 'scratch operand']
  #allocation8 [shape = 'f32[1,1]{1,0:T(1,128)}', space=vmem, size = 0x200, scoped, tag = 'scratch operand']
  #allocation9 [shape = 'f32[1,1]{1,0:T(1,128)S(6)}', space=smem, size = 0x200, scoped, tag = 'scoped memory for tpu_custom_call.1']
  %s0 = inlined_call_operand.<no memory space> [shape: f32[1,1], index: 0, kind: input, shape index: {}]
  %s1 = inlined_call_operand.hbm [shape: bf16[256,128], index: 1, kind: input, shape index: {}]
  %s2 = inlined_call_operand.hbm [shape: bf16[256,128], index: 2, kind: input, shape index: {}]
  %s3 = inlined_call_operand.hbm [shape: f32[1,1], index: 3, kind: output, shape index: {}]
  %s4 = sld [smem:[#allocation0]]
  $region81: #{tpu_custom_call.1} parent=0
    _
  %s6 = ssub.s32 1, %s4
  %s7 = scalar_select 0, %s6, %s4
  %8 = sst [smem:[#allocation9]] %s0
  $region1: #{tpu_custom_call.1} parent=0
    #allocation10 [shape = 'u8[65536]{0}', space=vmem, size = 0x10000, scoped, tag = 'input window, operand 1, single buffered']
    #allocation11 [shape = 's32[2]{0}', space=sflag, size = 0x8, scoped, tag = 'scoped memory for tpu_custom_call.1']
    #allocation12 [shape = 's32[2]{0}', space=sflag, size = 0x8, scoped, tag = 'scoped memory for tpu_custom_call.1']
    #allocation13 [shape = 'u8[65536]{0}', space=vmem, size = 0x10000, scoped, tag = 'input window, operand 2']
    #allocation14 [shape = 's32[2]{0}', space=sflag, size = 0x8, scoped, tag = 'scoped memory for tpu_custom_call.1']
    #allocation15 [shape = 'u8[512]{0}', space=vmem, size = 0x400, scoped, tag = 'output window, operand 0, single buffered']
    %9 = vsyncpa [#allocation11], 0
    %10 = vsyncpa [#allocation14], 0
    %s11 = scalar_lea.sflag [#allocation14], 1
    %12 = vsyncpa %s11, 0
    %13 = vsyncpa [#allocation12], 0
    loop: start=0, step=1, limit=4
    $region2: #{tpu_custom_call.1} parent=1 // loop_pre_header
      _
    $region3: #{tpu_custom_call.1} parent=1 // loop_header
      %s15 = sphi 0, %s19
      %p16 = scmp.ge.s32.totalorder %s15, 4
      %s22 = sphi 0, %s34
      %s23 = sphi 0, %s30
      %s24 = sphi 0, %s22
      %s25 = sphi 0, %s23
      %s26 = sphi 0, %s24
      %s27 = sphi 0, %s25
      %s35 = sphi 0, %s35
      %s37 = sphi 0, %s35
      %s38 = sphi 0, %s37
      %s52 = sphi 0, %s38
      %s58 = sphi 0, %s60
      %s61 = sphi 0, %s58
      %s62 = sphi 0, %s61
      %s78 = sphi 0, %s62
      %s84 = sphi 0, %s86
      %s87 = sphi 0, %s84
      %s88 = sphi 0, %s87
      %s104 = sphi 0, %s88
      %s108 = sphi 0, %s108
      %s110 = sphi 0, %s108
      %s111 = sphi 0, %s110
      %s125 = sphi 0, %s111
    $region4: #{tpu_custom_call.1} parent=1 // loop_header_branch
      %18 = sbr.rel (%p16) target = $region8
    $region5: #{tpu_custom_call.1} parent=1 // loop_body
      %s20 = ssub.s32 %s15, 1
      %s21 = ssub.s32 %s15, 2
      %s28 = sadd.s32 1, %s23
      %p29 = scmp.ge.s32.totalorder %s28, 2
      %s30 = scalar_select %p29, 0, %s28
      %s31 = sadd.s32 1, %s22
      %s32 = scalar_select %p29, %s31, %s22
      %p33 = scmp.ge.s32.totalorder %s32, 1
      %s34 = scalar_select %p33, 0, %s32
      %s36 = sadd.s32 %s35, 1
      %p39 = scmp.eq.s32.totalorder %s15, 1
      %p40 = scmp.ne.s32.totalorder %s35, %s37
      %p41 = scmp.eq.s32.totalorder %s15, 0
      %p42 = por %p40, %p41
      %p43 = scmp.ne.s32.totalorder %s35, %s37
      %p44 = scmp.eq.s32.totalorder %s20, 1
      %p45 = por %p43, %p44
      %p46 = scmp.ne.s32.totalorder %s37, %s38
      %p47 = scmp.eq.s32.totalorder %s20, 0
      %p48 = por %p46, %p47
      %p49 = scmp.ne.s32.totalorder %s37, %s38
      %p50 = scmp.eq.s32.totalorder %s21, 1
      %p51 = por %p49, %p50
      %p53 = scmp.ne.s32.totalorder %s38, %s52
      %p54 = scmp.eq.s32.totalorder %s21, 0
      %p55 = por %p53, %p54
      %s56 = ssub.s32 %s22, %s34
      %p57 = scmp.eq.s32.totalorder %s56, 0
      %s59 = sadd.s32 %s58, 1
      %s60 = scalar_select %p57, %s58, %s59
      %p63 = pneg %p57
      %p64 = scmp.eq.s32.totalorder %s15, 1
      %p65 = por %p63, %p64
      %p66 = scmp.ne.s32.totalorder %s58, %s61
      %p67 = scmp.eq.s32.totalorder %s15, 0
      %p68 = por %p66, %p67
      %p69 = scmp.ne.s32.totalorder %s58, %s61
      %p70 = scmp.eq.s32.totalorder %s20, 1
      %p71 = por %p69, %p70
      %p72 = scmp.ne.s32.totalorder %s61, %s62
      %p73 = scmp.eq.s32.totalorder %s20, 0
      %p74 = por %p72, %p73
      %p75 = scmp.ne.s32.totalorder %s61, %s62
      %p76 = scmp.eq.s32.totalorder %s21, 1
      %p77 = por %p75, %p76
      %p79 = scmp.ne.s32.totalorder %s62, %s78
      %p80 = scmp.eq.s32.totalorder %s21, 0
      %p81 = por %p79, %p80
      %s82 = ssub.s32 %s23, %s30
      %p83 = scmp.eq.s32.totalorder %s82, 0
      %s85 = sadd.s32 %s84, 1
      %s86 = scalar_select %p83, %s84, %s85
      %p89 = pneg %p83
      %p90 = scmp.eq.s32.totalorder %s15, 1
      %p91 = por %p89, %p90
      %p92 = scmp.ne.s32.totalorder %s84, %s87
      %p93 = scmp.eq.s32.totalorder %s15, 0
      %p94 = por %p92, %p93
      %p95 = scmp.ne.s32.totalorder %s84, %s87
      %p96 = scmp.eq.s32.totalorder %s20, 1
      %p97 = por %p95, %p96
      %p98 = scmp.ne.s32.totalorder %s87, %s88
      %p99 = scmp.eq.s32.totalorder %s20, 0
      %p100 = por %p98, %p99
      %p101 = scmp.ne.s32.totalorder %s87, %s88
      %p102 = scmp.eq.s32.totalorder %s21, 1
      %p103 = por %p101, %p102
      %p105 = scmp.ne.s32.totalorder %s88, %s104
      %p106 = scmp.eq.s32.totalorder %s21, 0
      %p107 = por %p105, %p106
      %s109 = sadd.s32 %s108, 1
      %p112 = scmp.eq.s32.totalorder %s15, 1
      %p113 = scmp.ne.s32.totalorder %s108, %s110
      %p114 = scmp.eq.s32.totalorder %s15, 0
      %p115 = por %p113, %p114
      %p116 = scmp.ne.s32.totalorder %s108, %s110
      %p117 = scmp.eq.s32.totalorder %s20, 1
      %p118 = por %p116, %p117
      %p119 = scmp.ne.s32.totalorder %s110, %s111
      %p120 = scmp.eq.s32.totalorder %s20, 0
      %p121 = por %p119, %p120
      %p122 = scmp.ne.s32.totalorder %s110, %s111
      %p123 = scmp.eq.s32.totalorder %s21, 1
      %p124 = por %p122, %p123
      %p126 = scmp.ne.s32.totalorder %s111, %s125
      %p127 = scmp.eq.s32.totalorder %s21, 0
      %p128 = por %p126, %p127
      %p129 = scmp.le.s32.totalorder 1, %s15
      %p130 = scmp.lt.s32.totalorder %s15, 3
      %p131 = pnand %p129, %p130
      %p132 = pneg %p131
      // Predicated region
      $region9: #{tpu_custom_call.1} parent=5 // pred_check
        _
      $region10: #{tpu_custom_call.1} parent=5 // pred_check_branch
        %134 = sbr.rel (%p131) target = $region12
      $region11: #{tpu_custom_call.1} parent=5 // pred_region
        %s135 = ssub.s32 %s15, 1
        // Predicated region
        $region13: #{tpu_custom_call.1} parent=11 // pred_check
          %p136 = pneg %p48
        $region14: #{tpu_custom_call.1} parent=11 // pred_check_branch
          %138 = sbr.rel (%p136) target = $region16
        $region15: #{tpu_custom_call.1} parent=11 // pred_region
          _
        $region16: #{tpu_custom_call.1} parent=11 // pred_fallthru
          _
        // Predicated region
        $region17: #{tpu_custom_call.1} parent=11 // pred_check
          %p139 = pneg %p74
        $region18: #{tpu_custom_call.1} parent=11 // pred_check_branch
          %141 = sbr.rel (%p139) target = $region20
        $region19: #{tpu_custom_call.1} parent=11 // pred_region
          %s142 = smul.u32 32, %s24
          %s144 = ssub.s32 2048, 2048
          %145 = vsyncadd [#allocation11], %s144
          %s146 = smul.addr %s142, 64
          %s147 = scalar_lea.hbm %s1, %s146
          %s148 = sshll.u32 [#allocation10], 4
          %s149 = int_to_ptr.vmem [resolvable:$true] %s148
          %154 = dma.hbm_to_vmem [thread:$0]  %s147, 2048, %s149, [#allocation11], 64, 64, 4
        $region20: #{tpu_custom_call.1} parent=11 // pred_fallthru
          _
      $region12: #{tpu_custom_call.1} parent=5 // pred_fallthru
        _
      %p155 = scmp.lt.s32.totalorder %s15, 2
      // Predicated region
      $region21: #{tpu_custom_call.1} parent=5 // pred_check
        %p156 = pneg %p155
      $region22: #{tpu_custom_call.1} parent=5 // pred_check_branch
        %158 = sbr.rel (%p156) target = $region24
      $region23: #{tpu_custom_call.1} parent=5 // pred_region
        // Predicated region
        $region25: #{tpu_custom_call.1} parent=23 // pred_check
          %p159 = pneg %p94
        $region26: #{tpu_custom_call.1} parent=23 // pred_check_branch
          %161 = sbr.rel (%p159) target = $region28
        $region27: #{tpu_custom_call.1} parent=23 // pred_region
          %s162 = sand.u32 %s84, 1
          %s163 = scalar_lea.sflag [#allocation14], %s162
          %s164 = sand.u32 %s84, 1
          %s165 = smul.addr %s164, 64
          %s166 = scalar_lea.vmem [#allocation13], %s165
          %s167 = smul.u32 16, %s23
          %s169 = ssub.s32 1024, 1024
          %170 = vsyncadd %s163, %s169
          %s171 = smul.addr %s167, 64
          %s172 = scalar_lea.hbm %s2, %s171
          %s173 = sshll.u32 %s166, 4
          %s174 = int_to_ptr.vmem [resolvable:$true] %s173
          %179 = dma.hbm_to_vmem [thread:$0]  %s172, 1024, %s174, %s163, 64, 64, 4
        $region28: #{tpu_custom_call.1} parent=23 // pred_fallthru
          _
      $region24: #{tpu_custom_call.1} parent=5 // pred_fallthru
        _
      %p180 = scmp.le.s32.totalorder 1, %s15
      %p181 = scmp.lt.s32.totalorder %s15, 3
      %p182 = pnand %p180, %p181
      %p183 = pneg %p182
      // Predicated region
      $region29: #{tpu_custom_call.1} parent=5 // pred_check
        _
      $region30: #{tpu_custom_call.1} parent=5 // pred_check_branch
        %185 = sbr.rel (%p182) target = $region32
      $region31: #{tpu_custom_call.1} parent=5 // pred_region
        %s186 = ssub.s32 %s15, 1
        // Predicated region
        $region33: #{tpu_custom_call.1} parent=31 // pred_check
          %p187 = pneg %p74
        $region34: #{tpu_custom_call.1} parent=31 // pred_check_branch
          %189 = sbr.rel (%p187) target = $region36
        $region35: #{tpu_custom_call.1} parent=31 // pred_region
          %190 = dma.done [#allocation11], 2048
        $region36: #{tpu_custom_call.1} parent=31 // pred_fallthru
          _
        %s191 = sand.u32 %s87, 1
        %s192 = scalar_lea.sflag [#allocation14], %s191
        %s193 = sand.u32 %s87, 1
        %s194 = smul.addr %s193, 64
        %s195 = scalar_lea.vmem [#allocation13], %s194
        // Predicated region
        $region37: #{tpu_custom_call.1} parent=31 // pred_check
          %p196 = pneg %p100
        $region38: #{tpu_custom_call.1} parent=31 // pred_check_branch
          %198 = sbr.rel (%p196) target = $region40
        $region39: #{tpu_custom_call.1} parent=31 // pred_region
          %199 = dma.done %s192, 1024
        $region40: #{tpu_custom_call.1} parent=31 // pred_fallthru
          _
        %p200 = pneg %p48
        %p201 = pneg %p45
        %p202 = pneg %p74
        %p203 = pneg %p71
        %s204 = sand.u32 %s87, 1
        %s205 = scalar_lea.sflag [#allocation14], %s204
        %s206 = sand.u32 %s87, 1
        %s207 = smul.addr %s206, 64
        %s208 = scalar_lea.vmem [#allocation13], %s207
        %p209 = pneg %p100
        %p210 = pneg %p97
        %p211 = pneg %p121
        %p212 = pneg %p118
        %s213 = smul.u32 32, %s24
        %s214 = smul.u32 16, %s25
        %s216 = sld [smem:[#allocation9]]
        %v217 = vld [vmem:[#allocation10] sm:$0xf]
        %v218 = vld [vmem:[#allocation10 + $0x4] sm:$0xf]
        %v219 = vld [vmem:[#allocation10 + $0x8] sm:$0xf]
        %v220 = vld [vmem:[#allocation10 + $0xc] sm:$0xf]
        %v221 = vld [vmem:[#allocation10 + $0x10] sm:$0xf]
        %v222 = vld [vmem:[#allocation10 + $0x14] sm:$0xf]
        %v223 = vld [vmem:[#allocation10 + $0x18] sm:$0xf]
        %v224 = vld [vmem:[#allocation10 + $0x1c] sm:$0xf]
        %v225 = vld [vmem:[#allocation10 + $0x20] sm:$0xf]
        %v226 = vld [vmem:[#allocation10 + $0x24] sm:$0xf]
        %v227 = vld [vmem:[#allocation10 + $0x28] sm:$0xf]
        %v228 = vld [vmem:[#allocation10 + $0x2c] sm:$0xf]
        %v229 = vld [vmem:[#allocation10 + $0x30] sm:$0xf]
        %v230 = vld [vmem:[#allocation10 + $0x34] sm:$0xf]
        %v231 = vld [vmem:[#allocation10 + $0x38] sm:$0xf]
        %v232 = vld [vmem:[#allocation10 + $0x3c] sm:$0xf]
        %v233 = vld [vmem:[#allocation10 + $0x40] sm:$0xf]
        %v234 = vld [vmem:[#allocation10 + $0x44] sm:$0xf]
        %v235 = vld [vmem:[#allocation10 + $0x48] sm:$0xf]
        %v236 = vld [vmem:[#allocation10 + $0x4c] sm:$0xf]
        %v237 = vld [vmem:[#allocation10 + $0x50] sm:$0xf]
        %v238 = vld [vmem:[#allocation10 + $0x54] sm:$0xf]
        %v239 = vld [vmem:[#allocation10 + $0x58] sm:$0xf]
        %v240 = vld [vmem:[#allocation10 + $0x5c] sm:$0xf]
        %v241 = vld [vmem:[#allocation10 + $0x60] sm:$0xf]
        %v242 = vld [vmem:[#allocation10 + $0x64] sm:$0xf]
        %v243 = vld [vmem:[#allocation10 + $0x68] sm:$0xf]
        %v244 = vld [vmem:[#allocation10 + $0x6c] sm:$0xf]
        %v245 = vld [vmem:[#allocation10 + $0x70] sm:$0xf]
        %v246 = vld [vmem:[#allocation10 + $0x74] sm:$0xf]
        %v247 = vld [vmem:[#allocation10 + $0x78] sm:$0xf]
        %v248 = vld [vmem:[#allocation10 + $0x7c] sm:$0xf]
        %v249 = vld [vmem:[%s195] sm:$0xf]
        %v250 = vld [vmem:[%s195 + $0x4] sm:$0xf]
        %v251 = vld [vmem:[%s195 + $0x8] sm:$0xf]
        %v252 = vld [vmem:[%s195 + $0xc] sm:$0xf]
        %v253 = vld [vmem:[%s195 + $0x10] sm:$0xf]
        %v254 = vld [vmem:[%s195 + $0x14] sm:$0xf]
        %v255 = vld [vmem:[%s195 + $0x18] sm:$0xf]
        %v256 = vld [vmem:[%s195 + $0x1c] sm:$0xf]
        %v257 = vld [vmem:[%s195 + $0x20] sm:$0xf]
        %v258 = vld [vmem:[%s195 + $0x24] sm:$0xf]
        %v259 = vld [vmem:[%s195 + $0x28] sm:$0xf]
        %v260 = vld [vmem:[%s195 + $0x2c] sm:$0xf]
        %v261 = vld [vmem:[%s195 + $0x30] sm:$0xf]
        %v262 = vld [vmem:[%s195 + $0x34] sm:$0xf]
        %v263 = vld [vmem:[%s195 + $0x38] sm:$0xf]
        %v264 = vld [vmem:[%s195 + $0x3c] sm:$0xf]
        %v297 = vunpack.c.l.b16 %v217
        %v298 = vunpack.c.l.b16 %v218
        %v299 = vunpack.c.l.b16 %v219
        %v300 = vunpack.c.l.b16 %v220
        %v301 = vunpack.c.l.b16 %v221
        %v302 = vunpack.c.l.b16 %v222
        %v303 = vunpack.c.l.b16 %v223
        %v304 = vunpack.c.l.b16 %v224
        %v305 = vunpack.c.l.b16 %v225
        %v306 = vunpack.c.l.b16 %v226
        %v307 = vunpack.c.l.b16 %v227
        %v308 = vunpack.c.l.b16 %v228
        %v309 = vunpack.c.l.b16 %v229
        %v310 = vunpack.c.l.b16 %v230
        %v311 = vunpack.c.l.b16 %v231
        %v312 = vunpack.c.l.b16 %v232
        %v313 = vunpack.c.l.b16 %v233
        %v314 = vunpack.c.l.b16 %v234
        %v315 = vunpack.c.l.b16 %v235
        %v316 = vunpack.c.l.b16 %v236
        %v317 = vunpack.c.l.b16 %v237
        %v318 = vunpack.c.l.b16 %v238
        %v319 = vunpack.c.l.b16 %v239
        %v320 = vunpack.c.l.b16 %v240
        %v321 = vunpack.c.l.b16 %v241
        %v322 = vunpack.c.l.b16 %v242
        %v323 = vunpack.c.l.b16 %v243
        %v324 = vunpack.c.l.b16 %v244
        %v325 = vunpack.c.l.b16 %v245
        %v326 = vunpack.c.l.b16 %v246
        %v327 = vunpack.c.l.b16 %v247
        %v328 = vunpack.c.l.b16 %v248
        %v329 = vpack.c.b16 %v298, %v297
        %v330 = vpack.c.b16 %v300, %v299
        %v331 = vpack.c.b16 %v302, %v301
        %v332 = vpack.c.b16 %v304, %v303
        %v333 = vpack.c.b16 %v306, %v305
        %v334 = vpack.c.b16 %v308, %v307
        %v335 = vpack.c.b16 %v310, %v309
        %v336 = vpack.c.b16 %v312, %v311
        %v337 = vpack.c.b16 %v314, %v313
        %v338 = vpack.c.b16 %v316, %v315
        %v339 = vpack.c.b16 %v318, %v317
        %v340 = vpack.c.b16 %v320, %v319
        %v341 = vpack.c.b16 %v322, %v321
        %v342 = vpack.c.b16 %v324, %v323
        %v343 = vpack.c.b16 %v326, %v325
        %v344 = vpack.c.b16 %v328, %v327
        %v377 = vunpack.c.l.b16 %v249
        %v378 = vunpack.c.l.b16 %v250
        %v379 = vunpack.c.l.b16 %v251
        %v380 = vunpack.c.l.b16 %v252
        %v381 = vunpack.c.l.b16 %v253
        %v382 = vunpack.c.l.b16 %v254
        %v383 = vunpack.c.l.b16 %v255
        %v384 = vunpack.c.l.b16 %v256
        %v385 = vunpack.c.l.b16 %v257
        %v386 = vunpack.c.l.b16 %v258
        %v387 = vunpack.c.l.b16 %v259
        %v388 = vunpack.c.l.b16 %v260
        %v389 = vunpack.c.l.b16 %v261
        %v390 = vunpack.c.l.b16 %v262
        %v391 = vunpack.c.l.b16 %v263
        %v392 = vunpack.c.l.b16 %v264
        %v393 = vpack.c.b16 %v378, %v377
        %v394 = vpack.c.b16 %v380, %v379
        %v395 = vpack.c.b16 %v382, %v381
        %v396 = vpack.c.b16 %v384, %v383
        %v397 = vpack.c.b16 %v386, %v385
        %v398 = vpack.c.b16 %v388, %v387
        %v399 = vpack.c.b16 %v390, %v389
        %v400 = vpack.c.b16 %v392, %v391
        %409 = vmatprep.subr.bf16.mxu0 0
        %410 = vmatpush1.bf16.xpose.msra.mxu0 %v393
        %411 = vmatprep.subr.bf16.mxu0 0
        %412 = vmatpush1.bf16.xpose.msra.mxu0 %v394
        %413 = vmatprep.subr.bf16.mxu0 0
        %414 = vmatpush1.bf16.xpose.msra.mxu0 %v395
        %415 = vmatprep.subr.bf16.mxu0 0
        %416 = vmatpush1.bf16.xpose.msra.mxu0 %v396
        %417 = vmatprep.subr.bf16.mxu0 0
        %418 = vmatpush1.bf16.xpose.msra.mxu0 %v397
        %419 = vmatprep.subr.bf16.mxu0 0
        %420 = vmatpush1.bf16.xpose.msra.mxu0 %v398
        %421 = vmatprep.subr.bf16.mxu0 0
        %422 = vmatpush1.bf16.xpose.msra.mxu0 %v399
        %423 = vmatprep.subr.bf16.mxu0 0
        %424 = vmatpush1.bf16.xpose.msra.mxu0 %v400
        %425 = vmatprep.subr.bf16.mxu0 0
        %426 = vmatpush1.bf16.xpose.msra.mxu0 0
        %427 = vmatprep.subr.bf16.mxu0 0
        %428 = vmatpush1.bf16.xpose.msra.mxu0 0
        %429 = vmatprep.subr.bf16.mxu0 0
        %430 = vmatpush1.bf16.xpose.msra.mxu0 0
        %431 = vmatprep.subr.bf16.mxu0 0
        %432 = vmatpush1.bf16.xpose.msra.mxu0 0
        %433 = vmatprep.subr.bf16.mxu0 0
        %434 = vmatpush1.bf16.xpose.msra.mxu0 0
        %435 = vmatprep.subr.bf16.mxu0 0
        %436 = vmatpush1.bf16.xpose.msra.mxu0 0
        %437 = vmatprep.subr.bf16.mxu0 0
        %438 = vmatpush1.bf16.xpose.msra.mxu0 0
        %439 = vmatprep.subr.bf16.mxu0 0
        %440 = vmatpush1.bf16.xpose.msra.mxu0 0
        %441 = vmatprep.mubr.bf16.mxu0 0
        %442 = vmatmul.mubr.bf16.gmra.mrb[0].mxu0 %v329
        %v443 = vpop.f32.mrb[0].mxu0
        %v444 = vadd.f32 0.0, %v443
        %v445 = vpop.f32.mrb[0].mxu0
        %v446 = vpop.f32.mrb[0].mxu0
        %v447 = vadd.f32 0.0, %v446
        %v448 = vpop.f32.mrb[0].mxu0
        %449 = vmatprep.mubr.bf16.mxu0 0
        %450 = vmatmul.mubr.bf16.gmra.mrb[0].mxu0 %v330
        %v451 = vpop.f32.mrb[0].mxu0
        %v452 = vadd.f32 0.0, %v451
        %v453 = vpop.f32.mrb[0].mxu0
        %v454 = vpop.f32.mrb[0].mxu0
        %v455 = vadd.f32 0.0, %v454
        %v456 = vpop.f32.mrb[0].mxu0
        %457 = vmatprep.mubr.bf16.mxu0 0
        %458 = vmatmul.mubr.bf16.gmra.mrb[0].mxu0 %v331
        %v459 = vpop.f32.mrb[0].mxu0
        %v460 = vadd.f32 0.0, %v459
        %v461 = vpop.f32.mrb[0].mxu0
        %v462 = vpop.f32.mrb[0].mxu0
        %v463 = vadd.f32 0.0, %v462
        %v464 = vpop.f32.mrb[0].mxu0
        %465 = vmatprep.mubr.bf16.mxu0 0
        %466 = vmatmul.mubr.bf16.gmra.mrb[0].mxu0 %v332
        %v467 = vpop.f32.mrb[0].mxu0
        %v468 = vadd.f32 0.0, %v467
        %v469 = vpop.f32.mrb[0].mxu0
        %v470 = vpop.f32.mrb[0].mxu0
        %v471 = vadd.f32 0.0, %v470
        %v472 = vpop.f32.mrb[0].mxu0
        %473 = vmatprep.mubr.bf16.mxu0 0
        %474 = vmatmul.mubr.bf16.gmra.mrb[0].mxu0 %v333
        %v475 = vpop.f32.mrb[0].mxu0
        %v476 = vadd.f32 0.0, %v475
        %v477 = vpop.f32.mrb[0].mxu0
        %v478 = vpop.f32.mrb[0].mxu0
        %v479 = vadd.f32 0.0, %v478
        %v480 = vpop.f32.mrb[0].mxu0
        %481 = vmatprep.mubr.bf16.mxu0 0
        %482 = vmatmul.mubr.bf16.gmra.mrb[0].mxu0 %v334
        %v483 = vpop.f32.mrb[0].mxu0
        %v484 = vadd.f32 0.0, %v483
        %v485 = vpop.f32.mrb[0].mxu0
        %v486 = vpop.f32.mrb[0].mxu0
        %v487 = vadd.f32 0.0, %v486
        %v488 = vpop.f32.mrb[0].mxu0
        %489 = vmatprep.mubr.bf16.mxu0 0
        %490 = vmatmul.mubr.bf16.gmra.mrb[0].mxu0 %v335
        %v491 = vpop.f32.mrb[0].mxu0
        %v492 = vadd.f32 0.0, %v491
        %v493 = vpop.f32.mrb[0].mxu0
        %v494 = vpop.f32.mrb[0].mxu0
        %v495 = vadd.f32 0.0, %v494
        %v496 = vpop.f32.mrb[0].mxu0
        %497 = vmatprep.mubr.bf16.mxu0 0
        %498 = vmatmul.mubr.bf16.gmra.mrb[0].mxu0 %v336
        %v499 = vpop.f32.mrb[0].mxu0
        %v500 = vadd.f32 0.0, %v499
        %v501 = vpop.f32.mrb[0].mxu0
        %v502 = vpop.f32.mrb[0].mxu0
        %v503 = vadd.f32 0.0, %v502
        %v504 = vpop.f32.mrb[0].mxu0
        %505 = vmatprep.mubr.bf16.mxu0 0
        %506 = vmatmul.mubr.bf16.gmra.mrb[0].mxu0 %v337
        %v507 = vpop.f32.mrb[0].mxu0
        %v508 = vadd.f32 0.0, %v507
        %v509 = vpop.f32.mrb[0].mxu0
        %v510 = vpop.f32.mrb[0].mxu0
        %v511 = vadd.f32 0.0, %v510
        %v512 = vpop.f32.mrb[0].mxu0
        %513 = vmatprep.mubr.bf16.mxu0 0
        %514 = vmatmul.mubr.bf16.gmra.mrb[0].mxu0 %v338
        %v515 = vpop.f32.mrb[0].mxu0
        %v516 = vadd.f32 0.0, %v515
        %v517 = vpop.f32.mrb[0].mxu0
        %v518 = vpop.f32.mrb[0].mxu0
        %v519 = vadd.f32 0.0, %v518
        %v520 = vpop.f32.mrb[0].mxu0
        %521 = vmatprep.mubr.bf16.mxu0 0
        %522 = vmatmul.mubr.bf16.gmra.mrb[0].mxu0 %v339
        %v523 = vpop.f32.mrb[0].mxu0
        %v524 = vadd.f32 0.0, %v523
        %v525 = vpop.f32.mrb[0].mxu0
        %v526 = vpop.f32.mrb[0].mxu0
        %v527 = vadd.f32 0.0, %v526
        %v528 = vpop.f32.mrb[0].mxu0
        %529 = vmatprep.mubr.bf16.mxu0 0
        %530 = vmatmul.mubr.bf16.gmra.mrb[0].mxu0 %v340
        %v531 = vpop.f32.mrb[0].mxu0
        %v532 = vadd.f32 0.0, %v531
        %v533 = vpop.f32.mrb[0].mxu0
        %v534 = vpop.f32.mrb[0].mxu0
        %v535 = vadd.f32 0.0, %v534
        %v536 = vpop.f32.mrb[0].mxu0
        %537 = vmatprep.mubr.bf16.mxu0 0
        %538 = vmatmul.mubr.bf16.gmra.mrb[0].mxu0 %v341
        %v539 = vpop.f32.mrb[0].mxu0
        %v540 = vadd.f32 0.0, %v539
        %v541 = vpop.f32.mrb[0].mxu0
        %v542 = vpop.f32.mrb[0].mxu0
        %v543 = vadd.f32 0.0, %v542
        %v544 = vpop.f32.mrb[0].mxu0
        %545 = vmatprep.mubr.bf16.mxu0 0
        %546 = vmatmul.mubr.bf16.gmra.mrb[0].mxu0 %v342
        %v547 = vpop.f32.mrb[0].mxu0
        %v548 = vadd.f32 0.0, %v547
        %v549 = vpop.f32.mrb[0].mxu0
        %v550 = vpop.f32.mrb[0].mxu0
        %v551 = vadd.f32 0.0, %v550
        %v552 = vpop.f32.mrb[0].mxu0
        %553 = vmatprep.mubr.bf16.mxu0 0
        %554 = vmatmul.mubr.bf16.gmra.mrb[0].mxu0 %v343
        %v555 = vpop.f32.mrb[0].mxu0
        %v556 = vadd.f32 0.0, %v555
        %v557 = vpop.f32.mrb[0].mxu0
        %v558 = vpop.f32.mrb[0].mxu0
        %v559 = vadd.f32 0.0, %v558
        %v560 = vpop.f32.mrb[0].mxu0
        %561 = vmatprep.mubr.bf16.mxu0 0
        %562 = vmatmul.mubr.bf16.gmra.mrb[0].mxu0 %v344
        %v563 = vpop.f32.mrb[0].mxu0
        %v564 = vadd.f32 0.0, %v563
        %v565 = vpop.f32.mrb[0].mxu0
        %v566 = vpop.f32.mrb[0].mxu0
        %v567 = vadd.f32 0.0, %v566
        %v568 = vpop.f32.mrb[0].mxu0
        %569 = vdwg.mxu0
        %v570 = vstv %s216
        %v571 = vmul.f32 %v444, %v570
        %v572 = vmul.f32 %v447, %v570
        %v573 = vmul.f32 %v452, %v570
        %v574 = vmul.f32 %v455, %v570
        %v575 = vmul.f32 %v460, %v570
        %v576 = vmul.f32 %v463, %v570
        %v577 = vmul.f32 %v468, %v570
        %v578 = vmul.f32 %v471, %v570
        %v579 = vmul.f32 %v476, %v570
        %v580 = vmul.f32 %v479, %v570
        %v581 = vmul.f32 %v484, %v570
        %v582 = vmul.f32 %v487, %v570
        %v583 = vmul.f32 %v492, %v570
        %v584 = vmul.f32 %v495, %v570
        %v585 = vmul.f32 %v500, %v570
        %v586 = vmul.f32 %v503, %v570
        %v587 = vmul.f32 %v508, %v570
        %v588 = vmul.f32 %v511, %v570
        %v589 = vmul.f32 %v516, %v570
        %v590 = vmul.f32 %v519, %v570
        %v591 = vmul.f32 %v524, %v570
        %v592 = vmul.f32 %v527, %v570
        %v593 = vmul.f32 %v532, %v570
        %v594 = vmul.f32 %v535, %v570
        %v595 = vmul.f32 %v540, %v570
        %v596 = vmul.f32 %v543, %v570
        %v597 = vmul.f32 %v548, %v570
        %v598 = vmul.f32 %v551, %v570
        %v599 = vmul.f32 %v556, %v570
        %v600 = vmul.f32 %v559, %v570
        %v601 = vmul.f32 %v564, %v570
        %v602 = vmul.f32 %v567, %v570
        %p603 = scmp.eq.s32.totalorder %s24, 0
        %p604 = scmp.eq.s32.totalorder %s25, 0
        %p605 = pnand %p603, %p604
        %p606 = pneg %p605
        // Predicated region
        $region41: #{tpu_custom_call.1} parent=31 // pred_check
          _
        $region42: #{tpu_custom_call.1} parent=31 // pred_check_branch
          %608 = sbr.rel (%p605) target = $region44
        $region43: #{tpu_custom_call.1} parent=31 // pred_region
          %vm609 = vcmask 0
          %610 = vst.msk [vmem:[#allocation6] sm:$0x1] %vm609, 0.0
          %611 = vst.msk [vmem:[#allocation7] sm:$0x1] %vm609, 0.0
          %612 = vst.msk [vmem:[#allocation8] sm:$0x1] %vm609, 0.0
        $region44: #{tpu_custom_call.1} parent=31 // pred_fallthru
          _
        // Predicated region
        $region45: #{tpu_custom_call.1} parent=31 // pred_check
          %p613 = pneg %p604
        $region46: #{tpu_custom_call.1} parent=31 // pred_check_branch
          %615 = sbr.rel (%p613) target = $region48
        $region47: #{tpu_custom_call.1} parent=31 // pred_region
          %vm616 = vcmask 7168
          %617 = vst.msk [vmem:[#allocation2] sm:$0xff] %vm616, -1e+30
          %618 = vst.msk [vmem:[#allocation2 + $0x8] sm:$0xff] %vm616, -1e+30
          %619 = vst.msk [vmem:[#allocation2 + $0x10] sm:$0xff] %vm616, -1e+30
          %620 = vst.msk [vmem:[#allocation2 + $0x18] sm:$0xff] %vm616, -1e+30
          %621 = vst.msk [vmem:[#allocation2 + $0x20] sm:$0xff] %vm616, -1e+30
          %622 = vst.msk [vmem:[#allocation2 + $0x28] sm:$0xff] %vm616, -1e+30
          %623 = vst.msk [vmem:[#allocation2 + $0x30] sm:$0xff] %vm616, -1e+30
          %624 = vst.msk [vmem:[#allocation2 + $0x38] sm:$0xff] %vm616, -1e+30
          %625 = vst.msk [vmem:[#allocation2 + $0x40] sm:$0xff] %vm616, -1e+30
          %626 = vst.msk [vmem:[#allocation2 + $0x48] sm:$0xff] %vm616, -1e+30
          %627 = vst.msk [vmem:[#allocation2 + $0x50] sm:$0xff] %vm616, -1e+30
          %628 = vst.msk [vmem:[#allocation2 + $0x58] sm:$0xff] %vm616, -1e+30
          %629 = vst.msk [vmem:[#allocation2 + $0x60] sm:$0xff] %vm616, -1e+30
          %630 = vst.msk [vmem:[#allocation2 + $0x68] sm:$0xff] %vm616, -1e+30
          %631 = vst.msk [vmem:[#allocation2 + $0x70] sm:$0xff] %vm616, -1e+30
          %632 = vst.msk [vmem:[#allocation2 + $0x78] sm:$0xff] %vm616, -1e+30
          %633 = vst.msk [vmem:[#allocation2 + $0x80] sm:$0xff] %vm616, -1e+30
          %634 = vst.msk [vmem:[#allocation2 + $0x88] sm:$0xff] %vm616, -1e+30
          %635 = vst.msk [vmem:[#allocation2 + $0x90] sm:$0xff] %vm616, -1e+30
          %636 = vst.msk [vmem:[#allocation2 + $0x98] sm:$0xff] %vm616, -1e+30
          %637 = vst.msk [vmem:[#allocation2 + $0xa0] sm:$0xff] %vm616, -1e+30
          %638 = vst.msk [vmem:[#allocation2 + $0xa8] sm:$0xff] %vm616, -1e+30
          %639 = vst.msk [vmem:[#allocation2 + $0xb0] sm:$0xff] %vm616, -1e+30
          %640 = vst.msk [vmem:[#allocation2 + $0xb8] sm:$0xff] %vm616, -1e+30
          %641 = vst.msk [vmem:[#allocation2 + $0xc0] sm:$0xff] %vm616, -1e+30
          %642 = vst.msk [vmem:[#allocation2 + $0xc8] sm:$0xff] %vm616, -1e+30
          %643 = vst.msk [vmem:[#allocation2 + $0xd0] sm:$0xff] %vm616, -1e+30
          %644 = vst.msk [vmem:[#allocation2 + $0xd8] sm:$0xff] %vm616, -1e+30
          %645 = vst.msk [vmem:[#allocation2 + $0xe0] sm:$0xff] %vm616, -1e+30
          %646 = vst.msk [vmem:[#allocation2 + $0xe8] sm:$0xff] %vm616, -1e+30
          %647 = vst.msk [vmem:[#allocation2 + $0xf0] sm:$0xff] %vm616, -1e+30
          %648 = vst.msk [vmem:[#allocation2 + $0xf8] sm:$0xff] %vm616, -1e+30
          %649 = vst.msk [vmem:[#allocation3] sm:$0xff] %vm616, 0.0
          %650 = vst.msk [vmem:[#allocation3 + $0x8] sm:$0xff] %vm616, 0.0
          %651 = vst.msk [vmem:[#allocation3 + $0x10] sm:$0xff] %vm616, 0.0
          %652 = vst.msk [vmem:[#allocation3 + $0x18] sm:$0xff] %vm616, 0.0
          %653 = vst.msk [vmem:[#allocation3 + $0x20] sm:$0xff] %vm616, 0.0
          %654 = vst.msk [vmem:[#allocation3 + $0x28] sm:$0xff] %vm616, 0.0
          %655 = vst.msk [vmem:[#allocation3 + $0x30] sm:$0xff] %vm616, 0.0
          %656 = vst.msk [vmem:[#allocation3 + $0x38] sm:$0xff] %vm616, 0.0
          %657 = vst.msk [vmem:[#allocation3 + $0x40] sm:$0xff] %vm616, 0.0
          %658 = vst.msk [vmem:[#allocation3 + $0x48] sm:$0xff] %vm616, 0.0
          %659 = vst.msk [vmem:[#allocation3 + $0x50] sm:$0xff] %vm616, 0.0
          %660 = vst.msk [vmem:[#allocation3 + $0x58] sm:$0xff] %vm616, 0.0
          %661 = vst.msk [vmem:[#allocation3 + $0x60] sm:$0xff] %vm616, 0.0
          %662 = vst.msk [vmem:[#allocation3 + $0x68] sm:$0xff] %vm616, 0.0
          %663 = vst.msk [vmem:[#allocation3 + $0x70] sm:$0xff] %vm616, 0.0
          %664 = vst.msk [vmem:[#allocation3 + $0x78] sm:$0xff] %vm616, 0.0
          %665 = vst.msk [vmem:[#allocation3 + $0x80] sm:$0xff] %vm616, 0.0
          %666 = vst.msk [vmem:[#allocation3 + $0x88] sm:$0xff] %vm616, 0.0
          %667 = vst.msk [vmem:[#allocation3 + $0x90] sm:$0xff] %vm616, 0.0
          %668 = vst.msk [vmem:[#allocation3 + $0x98] sm:$0xff] %vm616, 0.0
          %669 = vst.msk [vmem:[#allocation3 + $0xa0] sm:$0xff] %vm616, 0.0
          %670 = vst.msk [vmem:[#allocation3 + $0xa8] sm:$0xff] %vm616, 0.0
          %671 = vst.msk [vmem:[#allocation3 + $0xb0] sm:$0xff] %vm616, 0.0
          %672 = vst.msk [vmem:[#allocation3 + $0xb8] sm:$0xff] %vm616, 0.0
          %673 = vst.msk [vmem:[#allocation3 + $0xc0] sm:$0xff] %vm616, 0.0
          %674 = vst.msk [vmem:[#allocation3 + $0xc8] sm:$0xff] %vm616, 0.0
          %675 = vst.msk [vmem:[#allocation3 + $0xd0] sm:$0xff] %vm616, 0.0
          %676 = vst.msk [vmem:[#allocation3 + $0xd8] sm:$0xff] %vm616, 0.0
          %677 = vst.msk [vmem:[#allocation3 + $0xe0] sm:$0xff] %vm616, 0.0
          %678 = vst.msk [vmem:[#allocation3 + $0xe8] sm:$0xff] %vm616, 0.0
          %679 = vst.msk [vmem:[#allocation3 + $0xf0] sm:$0xff] %vm616, 0.0
          %680 = vst.msk [vmem:[#allocation3 + $0xf8] sm:$0xff] %vm616, 0.0
        $region48: #{tpu_custom_call.1} parent=31 // pred_fallthru
          _
        %v681 = vld [vmem:[#allocation2] sm:$0xff]
        %v682 = vld [vmem:[#allocation2 + $0x8] sm:$0xff]
        %v683 = vld [vmem:[#allocation2 + $0x10] sm:$0xff]
        %v684 = vld [vmem:[#allocation2 + $0x18] sm:$0xff]
        %v685 = vld [vmem:[#allocation2 + $0x20] sm:$0xff]
        %v686 = vld [vmem:[#allocation2 + $0x28] sm:$0xff]
        %v687 = vld [vmem:[#allocation2 + $0x30] sm:$0xff]
        %v688 = vld [vmem:[#allocation2 + $0x38] sm:$0xff]
        %v689 = vld [vmem:[#allocation2 + $0x40] sm:$0xff]
        %v690 = vld [vmem:[#allocation2 + $0x48] sm:$0xff]
        %v691 = vld [vmem:[#allocation2 + $0x50] sm:$0xff]
        %v692 = vld [vmem:[#allocation2 + $0x58] sm:$0xff]
        %v693 = vld [vmem:[#allocation2 + $0x60] sm:$0xff]
        %v694 = vld [vmem:[#allocation2 + $0x68] sm:$0xff]
        %v695 = vld [vmem:[#allocation2 + $0x70] sm:$0xff]
        %v696 = vld [vmem:[#allocation2 + $0x78] sm:$0xff]
        %v697 = vld [vmem:[#allocation2 + $0x80] sm:$0xff]
        %v698 = vld [vmem:[#allocation2 + $0x88] sm:$0xff]
        %v699 = vld [vmem:[#allocation2 + $0x90] sm:$0xff]
        %v700 = vld [vmem:[#allocation2 + $0x98] sm:$0xff]
        %v701 = vld [vmem:[#allocation2 + $0xa0] sm:$0xff]
        %v702 = vld [vmem:[#allocation2 + $0xa8] sm:$0xff]
        %v703 = vld [vmem:[#allocation2 + $0xb0] sm:$0xff]
        %v704 = vld [vmem:[#allocation2 + $0xb8] sm:$0xff]
        %v705 = vld [vmem:[#allocation2 + $0xc0] sm:$0xff]
        %v706 = vld [vmem:[#allocation2 + $0xc8] sm:$0xff]
        %v707 = vld [vmem:[#allocation2 + $0xd0] sm:$0xff]
        %v708 = vld [vmem:[#allocation2 + $0xd8] sm:$0xff]
        %v709 = vld [vmem:[#allocation2 + $0xe0] sm:$0xff]
        %v710 = vld [vmem:[#allocation2 + $0xe8] sm:$0xff]
        %v711 = vld [vmem:[#allocation2 + $0xf0] sm:$0xff]
        %v712 = vld [vmem:[#allocation2 + $0xf8] sm:$0xff]
        %713 = vmax.xlane.f32.xlu0 %v571
        %v714 = vpop.xlane.xlu0 %713
        %715 = vmax.xlane.f32.xlu0 %v572
        %v716 = vpop.xlane.xlu0 %715
        %717 = vmax.xlane.f32.xlu0 %v573
        %v718 = vpop.xlane.xlu0 %717
        %719 = vmax.xlane.f32.xlu0 %v574
        %v720 = vpop.xlane.xlu0 %719
        %721 = vmax.xlane.f32.xlu0 %v575
        %v722 = vpop.xlane.xlu0 %721
        %723 = vmax.xlane.f32.xlu0 %v576
        %v724 = vpop.xlane.xlu0 %723
        %725 = vmax.xlane.f32.xlu0 %v577
        %v726 = vpop.xlane.xlu0 %725
        %727 = vmax.xlane.f32.xlu0 %v578
        %v728 = vpop.xlane.xlu0 %727
        %729 = vmax.xlane.f32.xlu0 %v579
        %v730 = vpop.xlane.xlu0 %729
        %731 = vmax.xlane.f32.xlu0 %v580
        %v732 = vpop.xlane.xlu0 %731
        %733 = vmax.xlane.f32.xlu0 %v581
        %v734 = vpop.xlane.xlu0 %733
        %735 = vmax.xlane.f32.xlu0 %v582
        %v736 = vpop.xlane.xlu0 %735
        %737 = vmax.xlane.f32.xlu0 %v583
        %v738 = vpop.xlane.xlu0 %737
        %739 = vmax.xlane.f32.xlu0 %v584
        %v740 = vpop.xlane.xlu0 %739
        %741 = vmax.xlane.f32.xlu0 %v585
        %v742 = vpop.xlane.xlu0 %741
        %743 = vmax.xlane.f32.xlu0 %v586
        %v744 = vpop.xlane.xlu0 %743
        %745 = vmax.xlane.f32.xlu0 %v587
        %v746 = vpop.xlane.xlu0 %745
        %747 = vmax.xlane.f32.xlu0 %v588
        %v748 = vpop.xlane.xlu0 %747
        %749 = vmax.xlane.f32.xlu0 %v589
        %v750 = vpop.xlane.xlu0 %749
        %751 = vmax.xlane.f32.xlu0 %v590
        %v752 = vpop.xlane.xlu0 %751
        %753 = vmax.xlane.f32.xlu0 %v591
        %v754 = vpop.xlane.xlu0 %753
        %755 = vmax.xlane.f32.xlu0 %v592
        %v756 = vpop.xlane.xlu0 %755
        %757 = vmax.xlane.f32.xlu0 %v593
        %v758 = vpop.xlane.xlu0 %757
        %759 = vmax.xlane.f32.xlu0 %v594
        %v760 = vpop.xlane.xlu0 %759
        %761 = vmax.xlane.f32.xlu0 %v595
        %v762 = vpop.xlane.xlu0 %761
        %763 = vmax.xlane.f32.xlu0 %v596
        %v764 = vpop.xlane.xlu0 %763
        %765 = vmax.xlane.f32.xlu0 %v597
        %v766 = vpop.xlane.xlu0 %765
        %767 = vmax.xlane.f32.xlu0 %v598
        %v768 = vpop.xlane.xlu0 %767
        %769 = vmax.xlane.f32.xlu0 %v599
        %v770 = vpop.xlane.xlu0 %769
        %771 = vmax.xlane.f32.xlu0 %v600
        %v772 = vpop.xlane.xlu0 %771
        %773 = vmax.xlane.f32.xlu0 %v601
        %v774 = vpop.xlane.xlu0 %773
        %775 = vmax.xlane.f32.xlu0 %v602
        %v776 = vpop.xlane.xlu0 %775
        %v777 = vmax.f32 %v681, %v714
        %v778 = vmax.f32 %v682, %v716
        %v779 = vmax.f32 %v683, %v718
        %v780 = vmax.f32 %v684, %v720
        %v781 = vmax.f32 %v685, %v722
        %v782 = vmax.f32 %v686, %v724
        %v783 = vmax.f32 %v687, %v726
        %v784 = vmax.f32 %v688, %v728
        %v785 = vmax.f32 %v689, %v730
        %v786 = vmax.f32 %v690, %v732
        %v787 = vmax.f32 %v691, %v734
        %v788 = vmax.f32 %v692, %v736
        %v789 = vmax.f32 %v693, %v738
        %v790 = vmax.f32 %v694, %v740
        %v791 = vmax.f32 %v695, %v742
        %v792 = vmax.f32 %v696, %v744
        %v793 = vmax.f32 %v697, %v746
        %v794 = vmax.f32 %v698, %v748
        %v795 = vmax.f32 %v699, %v750
        %v796 = vmax.f32 %v700, %v752
        %v797 = vmax.f32 %v701, %v754
        %v798 = vmax.f32 %v702, %v756
        %v799 = vmax.f32 %v703, %v758
        %v800 = vmax.f32 %v704, %v760
        %v801 = vmax.f32 %v705, %v762
        %v802 = vmax.f32 %v706, %v764
        %v803 = vmax.f32 %v707, %v766
        %v804 = vmax.f32 %v708, %v768
        %v805 = vmax.f32 %v709, %v770
        %v806 = vmax.f32 %v710, %v772
        %v807 = vmax.f32 %v711, %v774
        %v808 = vmax.f32 %v712, %v776
        %v809 = vld [vmem:[#allocation3] sm:$0xff]
        %v810 = vld [vmem:[#allocation3 + $0x8] sm:$0xff]
        %v811 = vld [vmem:[#allocation3 + $0x10] sm:$0xff]
        %v812 = vld [vmem:[#allocation3 + $0x18] sm:$0xff]
        %v813 = vld [vmem:[#allocation3 + $0x20] sm:$0xff]
        %v814 = vld [vmem:[#allocation3 + $0x28] sm:$0xff]
        %v815 = vld [vmem:[#allocation3 + $0x30] sm:$0xff]
        %v816 = vld [vmem:[#allocation3 + $0x38] sm:$0xff]
        %v817 = vld [vmem:[#allocation3 + $0x40] sm:$0xff]
        %v818 = vld [vmem:[#allocation3 + $0x48] sm:$0xff]
        %v819 = vld [vmem:[#allocation3 + $0x50] sm:$0xff]
        %v820 = vld [vmem:[#allocation3 + $0x58] sm:$0xff]
        %v821 = vld [vmem:[#allocation3 + $0x60] sm:$0xff]
        %v822 = vld [vmem:[#allocation3 + $0x68] sm:$0xff]
        %v823 = vld [vmem:[#allocation3 + $0x70] sm:$0xff]
        %v824 = vld [vmem:[#allocation3 + $0x78] sm:$0xff]
        %v825 = vld [vmem:[#allocation3 + $0x80] sm:$0xff]
        %v826 = vld [vmem:[#allocation3 + $0x88] sm:$0xff]
        %v827 = vld [vmem:[#allocation3 + $0x90] sm:$0xff]
        %v828 = vld [vmem:[#allocation3 + $0x98] sm:$0xff]
        %v829 = vld [vmem:[#allocation3 + $0xa0] sm:$0xff]
        %v830 = vld [vmem:[#allocation3 + $0xa8] sm:$0xff]
        %v831 = vld [vmem:[#allocation3 + $0xb0] sm:$0xff]
        %v832 = vld [vmem:[#allocation3 + $0xb8] sm:$0xff]
        %v833 = vld [vmem:[#allocation3 + $0xc0] sm:$0xff]
        %v834 = vld [vmem:[#allocation3 + $0xc8] sm:$0xff]
        %v835 = vld [vmem:[#allocation3 + $0xd0] sm:$0xff]
        %v836 = vld [vmem:[#allocation3 + $0xd8] sm:$0xff]
        %v837 = vld [vmem:[#allocation3 + $0xe0] sm:$0xff]
        %v838 = vld [vmem:[#allocation3 + $0xe8] sm:$0xff]
        %v839 = vld [vmem:[#allocation3 + $0xf0] sm:$0xff]
        %v840 = vld [vmem:[#allocation3 + $0xf8] sm:$0xff]
        %v841 = vsub.f32 %v681, %v777
        %v842 = vsub.f32 %v682, %v778
        %v843 = vsub.f32 %v683, %v779
        %v844 = vsub.f32 %v684, %v780
        %v845 = vsub.f32 %v685, %v781
        %v846 = vsub.f32 %v686, %v782
        %v847 = vsub.f32 %v687, %v783
        %v848 = vsub.f32 %v688, %v784
        %v849 = vsub.f32 %v689, %v785
        %v850 = vsub.f32 %v690, %v786
        %v851 = vsub.f32 %v691, %v787
        %v852 = vsub.f32 %v692, %v788
        %v853 = vsub.f32 %v693, %v789
        %v854 = vsub.f32 %v694, %v790
        %v855 = vsub.f32 %v695, %v791
        %v856 = vsub.f32 %v696, %v792
        %v857 = vsub.f32 %v697, %v793
        %v858 = vsub.f32 %v698, %v794
        %v859 = vsub.f32 %v699, %v795
        %v860 = vsub.f32 %v700, %v796
        %v861 = vsub.f32 %v701, %v797
        %v862 = vsub.f32 %v702, %v798
        %v863 = vsub.f32 %v703, %v799
        %v864 = vsub.f32 %v704, %v800
        %v865 = vsub.f32 %v705, %v801
        %v866 = vsub.f32 %v706, %v802
        %v867 = vsub.f32 %v707, %v803
        %v868 = vsub.f32 %v708, %v804
        %v869 = vsub.f32 %v709, %v805
        %v870 = vsub.f32 %v710, %v806
        %v871 = vsub.f32 %v711, %v807
        %v872 = vsub.f32 %v712, %v808
        %v873 = vmul.f32 %v841, 1.442695
        %v874 = vpow.pop %v873
        %v875 = vmul.f32 %v842, 1.442695
        %v876 = vpow.pop %v875
        %v877 = vmul.f32 %v843, 1.442695
        %v878 = vpow.pop %v877
        %v879 = vmul.f32 %v844, 1.442695
        %v880 = vpow.pop %v879
        %v881 = vmul.f32 %v845, 1.442695
        %v882 = vpow.pop %v881
        %v883 = vmul.f32 %v846, 1.442695
        %v884 = vpow.pop %v883
        %v885 = vmul.f32 %v847, 1.442695
        %v886 = vpow.pop %v885
        %v887 = vmul.f32 %v848, 1.442695
        %v888 = vpow.pop %v887
        %v889 = vmul.f32 %v849, 1.442695
        %v890 = vpow.pop %v889
        %v891 = vmul.f32 %v850, 1.442695
        %v892 = vpow.pop %v891
        %v893 = vmul.f32 %v851, 1.442695
        %v894 = vpow.pop %v893
        %v895 = vmul.f32 %v852, 1.442695
        %v896 = vpow.pop %v895
        %v897 = vmul.f32 %v853, 1.442695
        %v898 = vpow.pop %v897
        %v899 = vmul.f32 %v854, 1.442695
        %v900 = vpow.pop %v899
        %v901 = vmul.f32 %v855, 1.442695
        %v902 = vpow.pop %v901
        %v903 = vmul.f32 %v856, 1.442695
        %v904 = vpow.pop %v903
        %v905 = vmul.f32 %v857, 1.442695
        %v906 = vpow.pop %v905
        %v907 = vmul.f32 %v858, 1.442695
        %v908 = vpow.pop %v907
        %v909 = vmul.f32 %v859, 1.442695
        %v910 = vpow.pop %v909
        %v911 = vmul.f32 %v860, 1.442695
        %v912 = vpow.pop %v911
        %v913 = vmul.f32 %v861, 1.442695
        %v914 = vpow.pop %v913
        %v915 = vmul.f32 %v862, 1.442695
        %v916 = vpow.pop %v915
        %v917 = vmul.f32 %v863, 1.442695
        %v918 = vpow.pop %v917
        %v919 = vmul.f32 %v864, 1.442695
        %v920 = vpow.pop %v919
        %v921 = vmul.f32 %v865, 1.442695
        %v922 = vpow.pop %v921
        %v923 = vmul.f32 %v866, 1.442695
        %v924 = vpow.pop %v923
        %v925 = vmul.f32 %v867, 1.442695
        %v926 = vpow.pop %v925
        %v927 = vmul.f32 %v868, 1.442695
        %v928 = vpow.pop %v927
        %v929 = vmul.f32 %v869, 1.442695
        %v930 = vpow.pop %v929
        %v931 = vmul.f32 %v870, 1.442695
        %v932 = vpow.pop %v931
        %v933 = vmul.f32 %v871, 1.442695
        %v934 = vpow.pop %v933
        %v935 = vmul.f32 %v872, 1.442695
        %v936 = vpow.pop %v935
        %v937 = vmul.f32 %v809, %v874
        %v938 = vmul.f32 %v810, %v876
        %v939 = vmul.f32 %v811, %v878
        %v940 = vmul.f32 %v812, %v880
        %v941 = vmul.f32 %v813, %v882
        %v942 = vmul.f32 %v814, %v884
        %v943 = vmul.f32 %v815, %v886
        %v944 = vmul.f32 %v816, %v888
        %v945 = vmul.f32 %v817, %v890
        %v946 = vmul.f32 %v818, %v892
        %v947 = vmul.f32 %v819, %v894
        %v948 = vmul.f32 %v820, %v896
        %v949 = vmul.f32 %v821, %v898
        %v950 = vmul.f32 %v822, %v900
        %v951 = vmul.f32 %v823, %v902
        %v952 = vmul.f32 %v824, %v904
        %v953 = vmul.f32 %v825, %v906
        %v954 = vmul.f32 %v826, %v908
        %v955 = vmul.f32 %v827, %v910
        %v956 = vmul.f32 %v828, %v912
        %v957 = vmul.f32 %v829, %v914
        %v958 = vmul.f32 %v830, %v916
        %v959 = vmul.f32 %v831, %v918
        %v960 = vmul.f32 %v832, %v920
        %v961 = vmul.f32 %v833, %v922
        %v962 = vmul.f32 %v834, %v924
        %v963 = vmul.f32 %v835, %v926
        %v964 = vmul.f32 %v836, %v928
        %v965 = vmul.f32 %v837, %v930
        %v966 = vmul.f32 %v838, %v932
        %v967 = vmul.f32 %v839, %v934
        %v968 = vmul.f32 %v840, %v936
        %970 = vset.pattern.permute.xlu0 0
        %971 = vperm.xlu0 %970, %v777
        %v972 = vpop.permute.xlu0 %971
        %975 = vset.pattern.permute.xlu0 0
        %976 = vperm.xlu0 %975, %v778
        %v977 = vpop.permute.xlu0 %976
        %980 = vset.pattern.permute.xlu0 0
        %981 = vperm.xlu0 %980, %v779
        %v982 = vpop.permute.xlu0 %981
        %985 = vset.pattern.permute.xlu0 0
        %986 = vperm.xlu0 %985, %v780
        %v987 = vpop.permute.xlu0 %986
        %990 = vset.pattern.permute.xlu0 0
        %991 = vperm.xlu0 %990, %v781
        %v992 = vpop.permute.xlu0 %991
        %995 = vset.pattern.permute.xlu0 0
        %996 = vperm.xlu0 %995, %v782
        %v997 = vpop.permute.xlu0 %996
        %1000 = vset.pattern.permute.xlu0 0
        %1001 = vperm.xlu0 %1000, %v783
        %v1002 = vpop.permute.xlu0 %1001
        %1005 = vset.pattern.permute.xlu0 0
        %1006 = vperm.xlu0 %1005, %v784
        %v1007 = vpop.permute.xlu0 %1006
        %1010 = vset.pattern.permute.xlu0 0
        %1011 = vperm.xlu0 %1010, %v785
        %v1012 = vpop.permute.xlu0 %1011
        %1015 = vset.pattern.permute.xlu0 0
        %1016 = vperm.xlu0 %1015, %v786
        %v1017 = vpop.permute.xlu0 %1016
        %1020 = vset.pattern.permute.xlu0 0
        %1021 = vperm.xlu0 %1020, %v787
        %v1022 = vpop.permute.xlu0 %1021
        %1025 = vset.pattern.permute.xlu0 0
        %1026 = vperm.xlu0 %1025, %v788
        %v1027 = vpop.permute.xlu0 %1026
        %1030 = vset.pattern.permute.xlu0 0
        %1031 = vperm.xlu0 %1030, %v789
        %v1032 = vpop.permute.xlu0 %1031
        %1035 = vset.pattern.permute.xlu0 0
        %1036 = vperm.xlu0 %1035, %v790
        %v1037 = vpop.permute.xlu0 %1036
        %1040 = vset.pattern.permute.xlu0 0
        %1041 = vperm.xlu0 %1040, %v791
        %v1042 = vpop.permute.xlu0 %1041
        %1045 = vset.pattern.permute.xlu0 0
        %1046 = vperm.xlu0 %1045, %v792
        %v1047 = vpop.permute.xlu0 %1046
        %1050 = vset.pattern.permute.xlu0 0
        %1051 = vperm.xlu0 %1050, %v793
        %v1052 = vpop.permute.xlu0 %1051
        %1055 = vset.pattern.permute.xlu0 0
        %1056 = vperm.xlu0 %1055, %v794
        %v1057 = vpop.permute.xlu0 %1056
        %1060 = vset.pattern.permute.xlu0 0
        %1061 = vperm.xlu0 %1060, %v795
        %v1062 = vpop.permute.xlu0 %1061
        %1065 = vset.pattern.permute.xlu0 0
        %1066 = vperm.xlu0 %1065, %v796
        %v1067 = vpop.permute.xlu0 %1066
        %1070 = vset.pattern.permute.xlu0 0
        %1071 = vperm.xlu0 %1070, %v797
        %v1072 = vpop.permute.xlu0 %1071
        %1075 = vset.pattern.permute.xlu0 0
        %1076 = vperm.xlu0 %1075, %v798
        %v1077 = vpop.permute.xlu0 %1076
        %1080 = vset.pattern.permute.xlu0 0
        %1081 = vperm.xlu0 %1080, %v799
        %v1082 = vpop.permute.xlu0 %1081
        %1085 = vset.pattern.permute.xlu0 0
        %1086 = vperm.xlu0 %1085, %v800
        %v1087 = vpop.permute.xlu0 %1086
        %1090 = vset.pattern.permute.xlu0 0
        %1091 = vperm.xlu0 %1090, %v801
        %v1092 = vpop.permute.xlu0 %1091
        %1095 = vset.pattern.permute.xlu0 0
        %1096 = vperm.xlu0 %1095, %v802
        %v1097 = vpop.permute.xlu0 %1096
        %1100 = vset.pattern.permute.xlu0 0
        %1101 = vperm.xlu0 %1100, %v803
        %v1102 = vpop.permute.xlu0 %1101
        %1105 = vset.pattern.permute.xlu0 0
        %1106 = vperm.xlu0 %1105, %v804
        %v1107 = vpop.permute.xlu0 %1106
        %1110 = vset.pattern.permute.xlu0 0
        %1111 = vperm.xlu0 %1110, %v805
        %v1112 = vpop.permute.xlu0 %1111
        %1115 = vset.pattern.permute.xlu0 0
        %1116 = vperm.xlu0 %1115, %v806
        %v1117 = vpop.permute.xlu0 %1116
        %1120 = vset.pattern.permute.xlu0 0
        %1121 = vperm.xlu0 %1120, %v807
        %v1122 = vpop.permute.xlu0 %1121
        %1125 = vset.pattern.permute.xlu0 0
        %1126 = vperm.xlu0 %1125, %v808
        %v1127 = vpop.permute.xlu0 %1126
        %v1129 = vsub.f32 %v571, %v972
        %v1130 = vsub.f32 %v572, %v977
        %v1131 = vsub.f32 %v573, %v982
        %v1132 = vsub.f32 %v574, %v987
        %v1133 = vsub.f32 %v575, %v992
        %v1134 = vsub.f32 %v576, %v997
        %v1135 = vsub.f32 %v577, %v1002
        %v1136 = vsub.f32 %v578, %v1007
        %v1137 = vsub.f32 %v579, %v1012
        %v1138 = vsub.f32 %v580, %v1017
        %v1139 = vsub.f32 %v581, %v1022
        %v1140 = vsub.f32 %v582, %v1027
        %v1141 = vsub.f32 %v583, %v1032
        %v1142 = vsub.f32 %v584, %v1037
        %v1143 = vsub.f32 %v585, %v1042
        %v1144 = vsub.f32 %v586, %v1047
        %v1145 = vsub.f32 %v587, %v1052
        %v1146 = vsub.f32 %v588, %v1057
        %v1147 = vsub.f32 %v589, %v1062
        %v1148 = vsub.f32 %v590, %v1067
        %v1149 = vsub.f32 %v591, %v1072
        %v1150 = vsub.f32 %v592, %v1077
        %v1151 = vsub.f32 %v593, %v1082
        %v1152 = vsub.f32 %v594, %v1087
        %v1153 = vsub.f32 %v595, %v1092
        %v1154 = vsub.f32 %v596, %v1097
        %v1155 = vsub.f32 %v597, %v1102
        %v1156 = vsub.f32 %v598, %v1107
        %v1157 = vsub.f32 %v599, %v1112
        %v1158 = vsub.f32 %v600, %v1117
        %v1159 = vsub.f32 %v601, %v1122
        %v1160 = vsub.f32 %v602, %v1127
        %v1161 = vmul.f32 %v1129, 1.442695
        %v1162 = vpow.pop %v1161
        %v1163 = vmul.f32 %v1130, 1.442695
        %v1164 = vpow.pop %v1163
        %v1165 = vmul.f32 %v1131, 1.442695
        %v1166 = vpow.pop %v1165
        %v1167 = vmul.f32 %v1132, 1.442695
        %v1168 = vpow.pop %v1167
        %v1169 = vmul.f32 %v1133, 1.442695
        %v1170 = vpow.pop %v1169
        %v1171 = vmul.f32 %v1134, 1.442695
        %v1172 = vpow.pop %v1171
        %v1173 = vmul.f32 %v1135, 1.442695
        %v1174 = vpow.pop %v1173
        %v1175 = vmul.f32 %v1136, 1.442695
        %v1176 = vpow.pop %v1175
        %v1177 = vmul.f32 %v1137, 1.442695
        %v1178 = vpow.pop %v1177
        %v1179 = vmul.f32 %v1138, 1.442695
        %v1180 = vpow.pop %v1179
        %v1181 = vmul.f32 %v1139, 1.442695
        %v1182 = vpow.pop %v1181
        %v1183 = vmul.f32 %v1140, 1.442695
        %v1184 = vpow.pop %v1183
        %v1185 = vmul.f32 %v1141, 1.442695
        %v1186 = vpow.pop %v1185
        %v1187 = vmul.f32 %v1142, 1.442695
        %v1188 = vpow.pop %v1187
        %v1189 = vmul.f32 %v1143, 1.442695
        %v1190 = vpow.pop %v1189
        %v1191 = vmul.f32 %v1144, 1.442695
        %v1192 = vpow.pop %v1191
        %v1193 = vmul.f32 %v1145, 1.442695
        %v1194 = vpow.pop %v1193
        %v1195 = vmul.f32 %v1146, 1.442695
        %v1196 = vpow.pop %v1195
        %v1197 = vmul.f32 %v1147, 1.442695
        %v1198 = vpow.pop %v1197
        %v1199 = vmul.f32 %v1148, 1.442695
        %v1200 = vpow.pop %v1199
        %v1201 = vmul.f32 %v1149, 1.442695
        %v1202 = vpow.pop %v1201
        %v1203 = vmul.f32 %v1150, 1.442695
        %v1204 = vpow.pop %v1203
        %v1205 = vmul.f32 %v1151, 1.442695
        %v1206 = vpow.pop %v1205
        %v1207 = vmul.f32 %v1152, 1.442695
        %v1208 = vpow.pop %v1207
        %v1209 = vmul.f32 %v1153, 1.442695
        %v1210 = vpow.pop %v1209
        %v1211 = vmul.f32 %v1154, 1.442695
        %v1212 = vpow.pop %v1211
        %v1213 = vmul.f32 %v1155, 1.442695
        %v1214 = vpow.pop %v1213
        %v1215 = vmul.f32 %v1156, 1.442695
        %v1216 = vpow.pop %v1215
        %v1217 = vmul.f32 %v1157, 1.442695
        %v1218 = vpow.pop %v1217
        %v1219 = vmul.f32 %v1158, 1.442695
        %v1220 = vpow.pop %v1219
        %v1221 = vmul.f32 %v1159, 1.442695
        %v1222 = vpow.pop %v1221
        %v1223 = vmul.f32 %v1160, 1.442695
        %v1224 = vpow.pop %v1223
        %1225 = vadd.xlane.f32.xlu0 %v1162
        %v1226 = vpop.xlane.xlu0 %1225
        %1227 = vadd.xlane.f32.xlu0 %v1164
        %v1228 = vpop.xlane.xlu0 %1227
        %1229 = vadd.xlane.f32.xlu0 %v1166
        %v1230 = vpop.xlane.xlu0 %1229
        %1231 = vadd.xlane.f32.xlu0 %v1168
        %v1232 = vpop.xlane.xlu0 %1231
        %1233 = vadd.xlane.f32.xlu0 %v1170
        %v1234 = vpop.xlane.xlu0 %1233
        %1235 = vadd.xlane.f32.xlu0 %v1172
        %v1236 = vpop.xlane.xlu0 %1235
        %1237 = vadd.xlane.f32.xlu0 %v1174
        %v1238 = vpop.xlane.xlu0 %1237
        %1239 = vadd.xlane.f32.xlu0 %v1176
        %v1240 = vpop.xlane.xlu0 %1239
        %1241 = vadd.xlane.f32.xlu0 %v1178
        %v1242 = vpop.xlane.xlu0 %1241
        %1243 = vadd.xlane.f32.xlu0 %v1180
        %v1244 = vpop.xlane.xlu0 %1243
        %1245 = vadd.xlane.f32.xlu0 %v1182
        %v1246 = vpop.xlane.xlu0 %1245
        %1247 = vadd.xlane.f32.xlu0 %v1184
        %v1248 = vpop.xlane.xlu0 %1247
        %1249 = vadd.xlane.f32.xlu0 %v1186
        %v1250 = vpop.xlane.xlu0 %1249
        %1251 = vadd.xlane.f32.xlu0 %v1188
        %v1252 = vpop.xlane.xlu0 %1251
        %1253 = vadd.xlane.f32.xlu0 %v1190
        %v1254 = vpop.xlane.xlu0 %1253
        %1255 = vadd.xlane.f32.xlu0 %v1192
        %v1256 = vpop.xlane.xlu0 %1255
        %1257 = vadd.xlane.f32.xlu0 %v1194
        %v1258 = vpop.xlane.xlu0 %1257
        %1259 = vadd.xlane.f32.xlu0 %v1196
        %v1260 = vpop.xlane.xlu0 %1259
        %1261 = vadd.xlane.f32.xlu0 %v1198
        %v1262 = vpop.xlane.xlu0 %1261
        %1263 = vadd.xlane.f32.xlu0 %v1200
        %v1264 = vpop.xlane.xlu0 %1263
        %1265 = vadd.xlane.f32.xlu0 %v1202
        %v1266 = vpop.xlane.xlu0 %1265
        %1267 = vadd.xlane.f32.xlu0 %v1204
        %v1268 = vpop.xlane.xlu0 %1267
        %1269 = vadd.xlane.f32.xlu0 %v1206
        %v1270 = vpop.xlane.xlu0 %1269
        %1271 = vadd.xlane.f32.xlu0 %v1208
        %v1272 = vpop.xlane.xlu0 %1271
        %1273 = vadd.xlane.f32.xlu0 %v1210
        %v1274 = vpop.xlane.xlu0 %1273
        %1275 = vadd.xlane.f32.xlu0 %v1212
        %v1276 = vpop.xlane.xlu0 %1275
        %1277 = vadd.xlane.f32.xlu0 %v1214
        %v1278 = vpop.xlane.xlu0 %1277
        %1279 = vadd.xlane.f32.xlu0 %v1216
        %v1280 = vpop.xlane.xlu0 %1279
        %1281 = vadd.xlane.f32.xlu0 %v1218
        %v1282 = vpop.xlane.xlu0 %1281
        %1283 = vadd.xlane.f32.xlu0 %v1220
        %v1284 = vpop.xlane.xlu0 %1283
        %1285 = vadd.xlane.f32.xlu0 %v1222
        %v1286 = vpop.xlane.xlu0 %1285
        %1287 = vadd.xlane.f32.xlu0 %v1224
        %v1288 = vpop.xlane.xlu0 %1287
        %v1289 = vadd.f32 %v937, %v1226
        %v1290 = vadd.f32 %v938, %v1228
        %v1291 = vadd.f32 %v939, %v1230
        %v1292 = vadd.f32 %v940, %v1232
        %v1293 = vadd.f32 %v941, %v1234
        %v1294 = vadd.f32 %v942, %v1236
        %v1295 = vadd.f32 %v943, %v1238
        %v1296 = vadd.f32 %v944, %v1240
        %v1297 = vadd.f32 %v945, %v1242
        %v1298 = vadd.f32 %v946, %v1244
        %v1299 = vadd.f32 %v947, %v1246
        %v1300 = vadd.f32 %v948, %v1248
        %v1301 = vadd.f32 %v949, %v1250
        %v1302 = vadd.f32 %v950, %v1252
        %v1303 = vadd.f32 %v951, %v1254
        %v1304 = vadd.f32 %v952, %v1256
        %v1305 = vadd.f32 %v953, %v1258
        %v1306 = vadd.f32 %v954, %v1260
        %v1307 = vadd.f32 %v955, %v1262
        %v1308 = vadd.f32 %v956, %v1264
        %v1309 = vadd.f32 %v957, %v1266
        %v1310 = vadd.f32 %v958, %v1268
        %v1311 = vadd.f32 %v959, %v1270
        %v1312 = vadd.f32 %v960, %v1272
        %v1313 = vadd.f32 %v961, %v1274
        %v1314 = vadd.f32 %v962, %v1276
        %v1315 = vadd.f32 %v963, %v1278
        %v1316 = vadd.f32 %v964, %v1280
        %v1317 = vadd.f32 %v965, %v1282
        %v1318 = vadd.f32 %v966, %v1284
        %v1319 = vadd.f32 %v967, %v1286
        %v1320 = vadd.f32 %v968, %v1288
        %vm1321 = vcmask 7168
        %1322 = vst.msk [vmem:[#allocation3] sm:$0xff] %vm1321, %v1289
        %1323 = vst.msk [vmem:[#allocation3 + $0x8] sm:$0xff] %vm1321, %v1290
        %1324 = vst.msk [vmem:[#allocation3 + $0x10] sm:$0xff] %vm1321, %v1291
        %1325 = vst.msk [vmem:[#allocation3 + $0x18] sm:$0xff] %vm1321, %v1292
        %1326 = vst.msk [vmem:[#allocation3 + $0x20] sm:$0xff] %vm1321, %v1293
        %1327 = vst.msk [vmem:[#allocation3 + $0x28] sm:$0xff] %vm1321, %v1294
        %1328 = vst.msk [vmem:[#allocation3 + $0x30] sm:$0xff] %vm1321, %v1295
        %1329 = vst.msk [vmem:[#allocation3 + $0x38] sm:$0xff] %vm1321, %v1296
        %1330 = vst.msk [vmem:[#allocation3 + $0x40] sm:$0xff] %vm1321, %v1297
        %1331 = vst.msk [vmem:[#allocation3 + $0x48] sm:$0xff] %vm1321, %v1298
        %1332 = vst.msk [vmem:[#allocation3 + $0x50] sm:$0xff] %vm1321, %v1299
        %1333 = vst.msk [vmem:[#allocation3 + $0x58] sm:$0xff] %vm1321, %v1300
        %1334 = vst.msk [vmem:[#allocation3 + $0x60] sm:$0xff] %vm1321, %v1301
        %1335 = vst.msk [vmem:[#allocation3 + $0x68] sm:$0xff] %vm1321, %v1302
        %1336 = vst.msk [vmem:[#allocation3 + $0x70] sm:$0xff] %vm1321, %v1303
        %1337 = vst.msk [vmem:[#allocation3 + $0x78] sm:$0xff] %vm1321, %v1304
        %1338 = vst.msk [vmem:[#allocation3 + $0x80] sm:$0xff] %vm1321, %v1305
        %1339 = vst.msk [vmem:[#allocation3 + $0x88] sm:$0xff] %vm1321, %v1306
        %1340 = vst.msk [vmem:[#allocation3 + $0x90] sm:$0xff] %vm1321, %v1307
        %1341 = vst.msk [vmem:[#allocation3 + $0x98] sm:$0xff] %vm1321, %v1308
        %1342 = vst.msk [vmem:[#allocation3 + $0xa0] sm:$0xff] %vm1321, %v1309
        %1343 = vst.msk [vmem:[#allocation3 + $0xa8] sm:$0xff] %vm1321, %v1310
        %1344 = vst.msk [vmem:[#allocation3 + $0xb0] sm:$0xff] %vm1321, %v1311
        %1345 = vst.msk [vmem:[#allocation3 + $0xb8] sm:$0xff] %vm1321, %v1312
        %1346 = vst.msk [vmem:[#allocation3 + $0xc0] sm:$0xff] %vm1321, %v1313
        %1347 = vst.msk [vmem:[#allocation3 + $0xc8] sm:$0xff] %vm1321, %v1314
        %1348 = vst.msk [vmem:[#allocation3 + $0xd0] sm:$0xff] %vm1321, %v1315
        %1349 = vst.msk [vmem:[#allocation3 + $0xd8] sm:$0xff] %vm1321, %v1316
        %1350 = vst.msk [vmem:[#allocation3 + $0xe0] sm:$0xff] %vm1321, %v1317
        %1351 = vst.msk [vmem:[#allocation3 + $0xe8] sm:$0xff] %vm1321, %v1318
        %1352 = vst.msk [vmem:[#allocation3 + $0xf0] sm:$0xff] %vm1321, %v1319
        %1353 = vst.msk [vmem:[#allocation3 + $0xf8] sm:$0xff] %vm1321, %v1320
        %1354 = vst.msk [vmem:[#allocation2] sm:$0xff] %vm1321, %v777
        %1355 = vst.msk [vmem:[#allocation2 + $0x8] sm:$0xff] %vm1321, %v778
        %1356 = vst.msk [vmem:[#allocation2 + $0x10] sm:$0xff] %vm1321, %v779
        %1357 = vst.msk [vmem:[#allocation2 + $0x18] sm:$0xff] %vm1321, %v780
        %1358 = vst.msk [vmem:[#allocation2 + $0x20] sm:$0xff] %vm1321, %v781
        %1359 = vst.msk [vmem:[#allocation2 + $0x28] sm:$0xff] %vm1321, %v782
        %1360 = vst.msk [vmem:[#allocation2 + $0x30] sm:$0xff] %vm1321, %v783
        %1361 = vst.msk [vmem:[#allocation2 + $0x38] sm:$0xff] %vm1321, %v784
        %1362 = vst.msk [vmem:[#allocation2 + $0x40] sm:$0xff] %vm1321, %v785
        %1363 = vst.msk [vmem:[#allocation2 + $0x48] sm:$0xff] %vm1321, %v786
        %1364 = vst.msk [vmem:[#allocation2 + $0x50] sm:$0xff] %vm1321, %v787
        %1365 = vst.msk [vmem:[#allocation2 + $0x58] sm:$0xff] %vm1321, %v788
        %1366 = vst.msk [vmem:[#allocation2 + $0x60] sm:$0xff] %vm1321, %v789
        %1367 = vst.msk [vmem:[#allocation2 + $0x68] sm:$0xff] %vm1321, %v790
        %1368 = vst.msk [vmem:[#allocation2 + $0x70] sm:$0xff] %vm1321, %v791
        %1369 = vst.msk [vmem:[#allocation2 + $0x78] sm:$0xff] %vm1321, %v792
        %1370 = vst.msk [vmem:[#allocation2 + $0x80] sm:$0xff] %vm1321, %v793
        %1371 = vst.msk [vmem:[#allocation2 + $0x88] sm:$0xff] %vm1321, %v794
        %1372 = vst.msk [vmem:[#allocation2 + $0x90] sm:$0xff] %vm1321, %v795
        %1373 = vst.msk [vmem:[#allocation2 + $0x98] sm:$0xff] %vm1321, %v796
        %1374 = vst.msk [vmem:[#allocation2 + $0xa0] sm:$0xff] %vm1321, %v797
        %1375 = vst.msk [vmem:[#allocation2 + $0xa8] sm:$0xff] %vm1321, %v798
        %1376 = vst.msk [vmem:[#allocation2 + $0xb0] sm:$0xff] %vm1321, %v799
        %1377 = vst.msk [vmem:[#allocation2 + $0xb8] sm:$0xff] %vm1321, %v800
        %1378 = vst.msk [vmem:[#allocation2 + $0xc0] sm:$0xff] %vm1321, %v801
        %1379 = vst.msk [vmem:[#allocation2 + $0xc8] sm:$0xff] %vm1321, %v802
        %1380 = vst.msk [vmem:[#allocation2 + $0xd0] sm:$0xff] %vm1321, %v803
        %1381 = vst.msk [vmem:[#allocation2 + $0xd8] sm:$0xff] %vm1321, %v804
        %1382 = vst.msk [vmem:[#allocation2 + $0xe0] sm:$0xff] %vm1321, %v805
        %1383 = vst.msk [vmem:[#allocation2 + $0xe8] sm:$0xff] %vm1321, %v806
        %1384 = vst.msk [vmem:[#allocation2 + $0xf0] sm:$0xff] %vm1321, %v807
        %1385 = vst.msk [vmem:[#allocation2 + $0xf8] sm:$0xff] %vm1321, %v808
        %p1386 = scmp.eq.s32.totalorder %s25, 1
        // Predicated region
        $region49: #{tpu_custom_call.1} parent=31 // pred_check
          %p1387 = pneg %p1386
        $region50: #{tpu_custom_call.1} parent=31 // pred_check_branch
          %1389 = sbr.rel (%p1387) target = $region52
        $region51: #{tpu_custom_call.1} parent=31 // pred_region
          %v1390 = vld [vmem:[#allocation2] sm:$0xff]
          %v1391 = vld [vmem:[#allocation2 + $0x8] sm:$0xff]
          %v1392 = vld [vmem:[#allocation2 + $0x10] sm:$0xff]
          %v1393 = vld [vmem:[#allocation2 + $0x18] sm:$0xff]
          %v1394 = vld [vmem:[#allocation2 + $0x20] sm:$0xff]
          %v1395 = vld [vmem:[#allocation2 + $0x28] sm:$0xff]
          %v1396 = vld [vmem:[#allocation2 + $0x30] sm:$0xff]
          %v1397 = vld [vmem:[#allocation2 + $0x38] sm:$0xff]
          %v1398 = vld [vmem:[#allocation2 + $0x40] sm:$0xff]
          %v1399 = vld [vmem:[#allocation2 + $0x48] sm:$0xff]
          %v1400 = vld [vmem:[#allocation2 + $0x50] sm:$0xff]
          %v1401 = vld [vmem:[#allocation2 + $0x58] sm:$0xff]
          %v1402 = vld [vmem:[#allocation2 + $0x60] sm:$0xff]
          %v1403 = vld [vmem:[#allocation2 + $0x68] sm:$0xff]
          %v1404 = vld [vmem:[#allocation2 + $0x70] sm:$0xff]
          %v1405 = vld [vmem:[#allocation2 + $0x78] sm:$0xff]
          %v1406 = vld [vmem:[#allocation2 + $0x80] sm:$0xff]
          %v1407 = vld [vmem:[#allocation2 + $0x88] sm:$0xff]
          %v1408 = vld [vmem:[#allocation2 + $0x90] sm:$0xff]
          %v1409 = vld [vmem:[#allocation2 + $0x98] sm:$0xff]
          %v1410 = vld [vmem:[#allocation2 + $0xa0] sm:$0xff]
          %v1411 = vld [vmem:[#allocation2 + $0xa8] sm:$0xff]
          %v1412 = vld [vmem:[#allocation2 + $0xb0] sm:$0xff]
          %v1413 = vld [vmem:[#allocation2 + $0xb8] sm:$0xff]
          %v1414 = vld [vmem:[#allocation2 + $0xc0] sm:$0xff]
          %v1415 = vld [vmem:[#allocation2 + $0xc8] sm:$0xff]
          %v1416 = vld [vmem:[#allocation2 + $0xd0] sm:$0xff]
          %v1417 = vld [vmem:[#allocation2 + $0xd8] sm:$0xff]
          %v1418 = vld [vmem:[#allocation2 + $0xe0] sm:$0xff]
          %v1419 = vld [vmem:[#allocation2 + $0xe8] sm:$0xff]
          %v1420 = vld [vmem:[#allocation2 + $0xf0] sm:$0xff]
          %v1421 = vld [vmem:[#allocation2 + $0xf8] sm:$0xff]
          %v1422 = vld [vmem:[#allocation3] sm:$0xff]
          %v1423 = vld [vmem:[#allocation3 + $0x8] sm:$0xff]
          %v1424 = vld [vmem:[#allocation3 + $0x10] sm:$0xff]
          %v1425 = vld [vmem:[#allocation3 + $0x18] sm:$0xff]
          %v1426 = vld [vmem:[#allocation3 + $0x20] sm:$0xff]
          %v1427 = vld [vmem:[#allocation3 + $0x28] sm:$0xff]
          %v1428 = vld [vmem:[#allocation3 + $0x30] sm:$0xff]
          %v1429 = vld [vmem:[#allocation3 + $0x38] sm:$0xff]
          %v1430 = vld [vmem:[#allocation3 + $0x40] sm:$0xff]
          %v1431 = vld [vmem:[#allocation3 + $0x48] sm:$0xff]
          %v1432 = vld [vmem:[#allocation3 + $0x50] sm:$0xff]
          %v1433 = vld [vmem:[#allocation3 + $0x58] sm:$0xff]
          %v1434 = vld [vmem:[#allocation3 + $0x60] sm:$0xff]
          %v1435 = vld [vmem:[#allocation3 + $0x68] sm:$0xff]
          %v1436 = vld [vmem:[#allocation3 + $0x70] sm:$0xff]
          %v1437 = vld [vmem:[#allocation3 + $0x78] sm:$0xff]
          %v1438 = vld [vmem:[#allocation3 + $0x80] sm:$0xff]
          %v1439 = vld [vmem:[#allocation3 + $0x88] sm:$0xff]
          %v1440 = vld [vmem:[#allocation3 + $0x90] sm:$0xff]
          %v1441 = vld [vmem:[#allocation3 + $0x98] sm:$0xff]
          %v1442 = vld [vmem:[#allocation3 + $0xa0] sm:$0xff]
          %v1443 = vld [vmem:[#allocation3 + $0xa8] sm:$0xff]
          %v1444 = vld [vmem:[#allocation3 + $0xb0] sm:$0xff]
          %v1445 = vld [vmem:[#allocation3 + $0xb8] sm:$0xff]
          %v1446 = vld [vmem:[#allocation3 + $0xc0] sm:$0xff]
          %v1447 = vld [vmem:[#allocation3 + $0xc8] sm:$0xff]
          %v1448 = vld [vmem:[#allocation3 + $0xd0] sm:$0xff]
          %v1449 = vld [vmem:[#allocation3 + $0xd8] sm:$0xff]
          %v1450 = vld [vmem:[#allocation3 + $0xe0] sm:$0xff]
          %v1451 = vld [vmem:[#allocation3 + $0xe8] sm:$0xff]
          %v1452 = vld [vmem:[#allocation3 + $0xf0] sm:$0xff]
          %v1453 = vld [vmem:[#allocation3 + $0xf8] sm:$0xff]
          %v1454 = vlog2.pop %v1422
          %v1455 = vmul.f32 %v1454, 0.6931472
          %v1456 = vlog2.pop %v1423
          %v1457 = vmul.f32 %v1456, 0.6931472
          %v1458 = vlog2.pop %v1424
          %v1459 = vmul.f32 %v1458, 0.6931472
          %v1460 = vlog2.pop %v1425
          %v1461 = vmul.f32 %v1460, 0.6931472
          %v1462 = vlog2.pop %v1426
          %v1463 = vmul.f32 %v1462, 0.6931472
          %v1464 = vlog2.pop %v1427
          %v1465 = vmul.f32 %v1464, 0.6931472
          %v1466 = vlog2.pop %v1428
          %v1467 = vmul.f32 %v1466, 0.6931472
          %v1468 = vlog2.pop %v1429
          %v1469 = vmul.f32 %v1468, 0.6931472
          %v1470 = vlog2.pop %v1430
          %v1471 = vmul.f32 %v1470, 0.6931472
          %v1472 = vlog2.pop %v1431
          %v1473 = vmul.f32 %v1472, 0.6931472
          %v1474 = vlog2.pop %v1432
          %v1475 = vmul.f32 %v1474, 0.6931472
          %v1476 = vlog2.pop %v1433
          %v1477 = vmul.f32 %v1476, 0.6931472
          %v1478 = vlog2.pop %v1434
          %v1479 = vmul.f32 %v1478, 0.6931472
          %v1480 = vlog2.pop %v1435
          %v1481 = vmul.f32 %v1480, 0.6931472
          %v1482 = vlog2.pop %v1436
          %v1483 = vmul.f32 %v1482, 0.6931472
          %v1484 = vlog2.pop %v1437
          %v1485 = vmul.f32 %v1484, 0.6931472
          %v1486 = vlog2.pop %v1438
          %v1487 = vmul.f32 %v1486, 0.6931472
          %v1488 = vlog2.pop %v1439
          %v1489 = vmul.f32 %v1488, 0.6931472
          %v1490 = vlog2.pop %v1440
          %v1491 = vmul.f32 %v1490, 0.6931472
          %v1492 = vlog2.pop %v1441
          %v1493 = vmul.f32 %v1492, 0.6931472
          %v1494 = vlog2.pop %v1442
          %v1495 = vmul.f32 %v1494, 0.6931472
          %v1496 = vlog2.pop %v1443
          %v1497 = vmul.f32 %v1496, 0.6931472
          %v1498 = vlog2.pop %v1444
          %v1499 = vmul.f32 %v1498, 0.6931472
          %v1500 = vlog2.pop %v1445
          %v1501 = vmul.f32 %v1500, 0.6931472
          %v1502 = vlog2.pop %v1446
          %v1503 = vmul.f32 %v1502, 0.6931472
          %v1504 = vlog2.pop %v1447
          %v1505 = vmul.f32 %v1504, 0.6931472
          %v1506 = vlog2.pop %v1448
          %v1507 = vmul.f32 %v1506, 0.6931472
          %v1508 = vlog2.pop %v1449
          %v1509 = vmul.f32 %v1508, 0.6931472
          %v1510 = vlog2.pop %v1450
          %v1511 = vmul.f32 %v1510, 0.6931472
          %v1512 = vlog2.pop %v1451
          %v1513 = vmul.f32 %v1512, 0.6931472
          %v1514 = vlog2.pop %v1452
          %v1515 = vmul.f32 %v1514, 0.6931472
          %v1516 = vlog2.pop %v1453
          %v1517 = vmul.f32 %v1516, 0.6931472
          %v1518 = vadd.f32 %v1390, %v1455
          %v1519 = vadd.f32 %v1391, %v1457
          %v1520 = vadd.f32 %v1392, %v1459
          %v1521 = vadd.f32 %v1393, %v1461
          %v1522 = vadd.f32 %v1394, %v1463
          %v1523 = vadd.f32 %v1395, %v1465
          %v1524 = vadd.f32 %v1396, %v1467
          %v1525 = vadd.f32 %v1397, %v1469
          %v1526 = vadd.f32 %v1398, %v1471
          %v1527 = vadd.f32 %v1399, %v1473
          %v1528 = vadd.f32 %v1400, %v1475
          %v1529 = vadd.f32 %v1401, %v1477
          %v1530 = vadd.f32 %v1402, %v1479
          %v1531 = vadd.f32 %v1403, %v1481
          %v1532 = vadd.f32 %v1404, %v1483
          %v1533 = vadd.f32 %v1405, %v1485
          %v1534 = vadd.f32 %v1406, %v1487
          %v1535 = vadd.f32 %v1407, %v1489
          %v1536 = vadd.f32 %v1408, %v1491
          %v1537 = vadd.f32 %v1409, %v1493
          %v1538 = vadd.f32 %v1410, %v1495
          %v1539 = vadd.f32 %v1411, %v1497
          %v1540 = vadd.f32 %v1412, %v1499
          %v1541 = vadd.f32 %v1413, %v1501
          %v1542 = vadd.f32 %v1414, %v1503
          %v1543 = vadd.f32 %v1415, %v1505
          %v1544 = vadd.f32 %v1416, %v1507
          %v1545 = vadd.f32 %v1417, %v1509
          %v1546 = vadd.f32 %v1418, %v1511
          %v1547 = vadd.f32 %v1419, %v1513
          %v1548 = vadd.f32 %v1420, %v1515
          %v1549 = vadd.f32 %v1421, %v1517
          %v1550 = vld [vmem:[#allocation6] sm:$0x1]
          %v1551 = vsel %vm1321, %v1518, 0.0
          %v1552 = vsel %vm1321, %v1519, 0.0
          %v1553 = vadd.f32 %v1551, %v1552
          %v1554 = vsel %vm1321, %v1520, 0.0
          %v1555 = vadd.f32 %v1553, %v1554
          %v1556 = vsel %vm1321, %v1521, 0.0
          %v1557 = vadd.f32 %v1555, %v1556
          %v1558 = vsel %vm1321, %v1522, 0.0
          %v1559 = vadd.f32 %v1557, %v1558
          %v1560 = vsel %vm1321, %v1523, 0.0
          %v1561 = vadd.f32 %v1559, %v1560
          %v1562 = vsel %vm1321, %v1524, 0.0
          %v1563 = vadd.f32 %v1561, %v1562
          %v1564 = vsel %vm1321, %v1525, 0.0
          %v1565 = vadd.f32 %v1563, %v1564
          %v1566 = vsel %vm1321, %v1526, 0.0
          %v1567 = vadd.f32 %v1565, %v1566
          %v1568 = vsel %vm1321, %v1527, 0.0
          %v1569 = vadd.f32 %v1567, %v1568
          %v1570 = vsel %vm1321, %v1528, 0.0
          %v1571 = vadd.f32 %v1569, %v1570
          %v1572 = vsel %vm1321, %v1529, 0.0
          %v1573 = vadd.f32 %v1571, %v1572
          %v1574 = vsel %vm1321, %v1530, 0.0
          %v1575 = vadd.f32 %v1573, %v1574
          %v1576 = vsel %vm1321, %v1531, 0.0
          %v1577 = vadd.f32 %v1575, %v1576
          %v1578 = vsel %vm1321, %v1532, 0.0
          %v1579 = vadd.f32 %v1577, %v1578
          %v1580 = vsel %vm1321, %v1533, 0.0
          %v1581 = vadd.f32 %v1579, %v1580
          %v1582 = vsel %vm1321, %v1534, 0.0
          %v1583 = vadd.f32 %v1581, %v1582
          %v1584 = vsel %vm1321, %v1535, 0.0
          %v1585 = vadd.f32 %v1583, %v1584
          %v1586 = vsel %vm1321, %v1536, 0.0
          %v1587 = vadd.f32 %v1585, %v1586
          %v1588 = vsel %vm1321, %v1537, 0.0
          %v1589 = vadd.f32 %v1587, %v1588
          %v1590 = vsel %vm1321, %v1538, 0.0
          %v1591 = vadd.f32 %v1589, %v1590
          %v1592 = vsel %vm1321, %v1539, 0.0
          %v1593 = vadd.f32 %v1591, %v1592
          %v1594 = vsel %vm1321, %v1540, 0.0
          %v1595 = vadd.f32 %v1593, %v1594
          %v1596 = vsel %vm1321, %v1541, 0.0
          %v1597 = vadd.f32 %v1595, %v1596
          %v1598 = vsel %vm1321, %v1542, 0.0
          %v1599 = vadd.f32 %v1597, %v1598
          %v1600 = vsel %vm1321, %v1543, 0.0
          %v1601 = vadd.f32 %v1599, %v1600
          %v1602 = vsel %vm1321, %v1544, 0.0
          %v1603 = vadd.f32 %v1601, %v1602
          %v1604 = vsel %vm1321, %v1545, 0.0
          %v1605 = vadd.f32 %v1603, %v1604
          %v1606 = vsel %vm1321, %v1546, 0.0
          %v1607 = vadd.f32 %v1605, %v1606
          %v1608 = vsel %vm1321, %v1547, 0.0
          %v1609 = vadd.f32 %v1607, %v1608
          %v1610 = vsel %vm1321, %v1548, 0.0
          %v1611 = vadd.f32 %v1609, %v1610
          %v1612 = vsel %vm1321, %v1549, 0.0
          %v1613 = vadd.f32 %v1611, %v1612
          %v1614 = vrot.slane %v1613, 4
          %v1615 = vadd.f32 %v1613, %v1614
          %v1616 = vrot.slane %v1615, 2
          %v1617 = vadd.f32 %v1615, %v1616
          %v1618 = vrot.slane %v1617, 1
          %v1619 = vadd.f32 %v1617, %v1618
          %v1620 = vadd.f32 %v1550, %v1619
          %vm1621 = vcmask 0
          %1622 = vst.msk [vmem:[#allocation6] sm:$0x1] %vm1621, %v1620
        $region52: #{tpu_custom_call.1} parent=31 // pred_fallthru
          _
        // Predicated region
        $region53: #{tpu_custom_call.1} parent=31 // pred_check
          %p1623 = pneg %p603
        $region54: #{tpu_custom_call.1} parent=31 // pred_check_branch
          %1625 = sbr.rel (%p1623) target = $region56
        $region55: #{tpu_custom_call.1} parent=31 // pred_region
          %s1626 = scalar_lea.vmem [#allocation4], %s25
          %1627 = vst [vmem:[%s1626] sm:$0x1] -1e+30
          %s1628 = scalar_lea.vmem [#allocation5], %s25
          %1629 = vst [vmem:[%s1628] sm:$0x1] 0.0
        $region56: #{tpu_custom_call.1} parent=31 // pred_fallthru
          _
        %s1630 = scalar_lea.vmem [#allocation4], %s25
        %v1631 = vld [vmem:[%s1630] sm:$0x1]
        %v1632 = vmax.f32 %v571, %v575
        %v1633 = vmax.f32 %v572, %v576
        %v1634 = vmax.f32 %v573, %v577
        %v1635 = vmax.f32 %v574, %v578
        %v1636 = vmax.f32 %v1632, %v579
        %v1637 = vmax.f32 %v1633, %v580
        %v1638 = vmax.f32 %v1634, %v581
        %v1639 = vmax.f32 %v1635, %v582
        %v1640 = vmax.f32 %v1636, %v583
        %v1641 = vmax.f32 %v1637, %v584
        %v1642 = vmax.f32 %v1638, %v585
        %v1643 = vmax.f32 %v1639, %v586
        %v1644 = vmax.f32 %v1640, %v587
        %v1645 = vmax.f32 %v1641, %v588
        %v1646 = vmax.f32 %v1642, %v589
        %v1647 = vmax.f32 %v1643, %v590
        %v1648 = vmax.f32 %v1644, %v591
        %v1649 = vmax.f32 %v1645, %v592
        %v1650 = vmax.f32 %v1646, %v593
        %v1651 = vmax.f32 %v1647, %v594
        %v1652 = vmax.f32 %v1648, %v595
        %v1653 = vmax.f32 %v1649, %v596
        %v1654 = vmax.f32 %v1650, %v597
        %v1655 = vmax.f32 %v1651, %v598
        %v1656 = vmax.f32 %v1652, %v599
        %v1657 = vmax.f32 %v1653, %v600
        %v1658 = vmax.f32 %v1654, %v601
        %v1659 = vmax.f32 %v1655, %v602
        %v1660 = vmax.f32 %v1656, %v1657
        %v1661 = vmax.f32 %v1658, %v1659
        %v1662 = vmax.f32 %v1660, %v1661
        %v1663 = vrot.slane %v1662, 4
        %v1664 = vmax.f32 %v1662, %v1663
        %v1665 = vrot.slane %v1664, 2
        %v1666 = vmax.f32 %v1664, %v1665
        %v1667 = vrot.slane %v1666, 1
        %v1668 = vmax.f32 %v1666, %v1667
        %v1669 = vmax.f32 %v1631, %v1668
        %s1670 = scalar_lea.vmem [#allocation5], %s25
        %v1671 = vld [vmem:[%s1670] sm:$0x1]
        %v1672 = vsub.f32 %v1631, %v1669
        %v1673 = vmul.f32 %v1672, 1.442695
        %v1674 = vpow.pop %v1673
        %v1675 = vmul.f32 %v1671, %v1674
        %v1677 = vlaneseq
        %v1678 = vshrl.u32 %v1677, 7
        %v1679 = vsub.s32 0, %v1678
        %v1680 = vrot.slane %v1669, %v1679
        %v1682 = vsub.f32 %v571, %v1680
        %v1683 = vsub.f32 %v572, %v1680
        %v1684 = vsub.f32 %v573, %v1680
        %v1685 = vsub.f32 %v574, %v1680
        %v1686 = vsub.f32 %v575, %v1680
        %v1687 = vsub.f32 %v576, %v1680
        %v1688 = vsub.f32 %v577, %v1680
        %v1689 = vsub.f32 %v578, %v1680
        %v1690 = vsub.f32 %v579, %v1680
        %v1691 = vsub.f32 %v580, %v1680
        %v1692 = vsub.f32 %v581, %v1680
        %v1693 = vsub.f32 %v582, %v1680
        %v1694 = vsub.f32 %v583, %v1680
        %v1695 = vsub.f32 %v584, %v1680
        %v1696 = vsub.f32 %v585, %v1680
        %v1697 = vsub.f32 %v586, %v1680
        %v1698 = vsub.f32 %v587, %v1680
        %v1699 = vsub.f32 %v588, %v1680
        %v1700 = vsub.f32 %v589, %v1680
        %v1701 = vsub.f32 %v590, %v1680
        %v1702 = vsub.f32 %v591, %v1680
        %v1703 = vsub.f32 %v592, %v1680
        %v1704 = vsub.f32 %v593, %v1680
        %v1705 = vsub.f32 %v594, %v1680
        %v1706 = vsub.f32 %v595, %v1680
        %v1707 = vsub.f32 %v596, %v1680
        %v1708 = vsub.f32 %v597, %v1680
        %v1709 = vsub.f32 %v598, %v1680
        %v1710 = vsub.f32 %v599, %v1680
        %v1711 = vsub.f32 %v600, %v1680
        %v1712 = vsub.f32 %v601, %v1680
        %v1713 = vsub.f32 %v602, %v1680
        %v1714 = vmul.f32 %v1682, 1.442695
        %v1715 = vpow.pop %v1714
        %v1716 = vmul.f32 %v1683, 1.442695
        %v1717 = vpow.pop %v1716
        %v1718 = vmul.f32 %v1684, 1.442695
        %v1719 = vpow.pop %v1718
        %v1720 = vmul.f32 %v1685, 1.442695
        %v1721 = vpow.pop %v1720
        %v1722 = vmul.f32 %v1686, 1.442695
        %v1723 = vpow.pop %v1722
        %v1724 = vmul.f32 %v1687, 1.442695
        %v1725 = vpow.pop %v1724
        %v1726 = vmul.f32 %v1688, 1.442695
        %v1727 = vpow.pop %v1726
        %v1728 = vmul.f32 %v1689, 1.442695
        %v1729 = vpow.pop %v1728
        %v1730 = vmul.f32 %v1690, 1.442695
        %v1731 = vpow.pop %v1730
        %v1732 = vmul.f32 %v1691, 1.442695
        %v1733 = vpow.pop %v1732
        %v1734 = vmul.f32 %v1692, 1.442695
        %v1735 = vpow.pop %v1734
        %v1736 = vmul.f32 %v1693, 1.442695
        %v1737 = vpow.pop %v1736
        %v1738 = vmul.f32 %v1694, 1.442695
        %v1739 = vpow.pop %v1738
        %v1740 = vmul.f32 %v1695, 1.442695
        %v1741 = vpow.pop %v1740
        %v1742 = vmul.f32 %v1696, 1.442695
        %v1743 = vpow.pop %v1742
        %v1744 = vmul.f32 %v1697, 1.442695
        %v1745 = vpow.pop %v1744
        %v1746 = vmul.f32 %v1698, 1.442695
        %v1747 = vpow.pop %v1746
        %v1748 = vmul.f32 %v1699, 1.442695
        %v1749 = vpow.pop %v1748
        %v1750 = vmul.f32 %v1700, 1.442695
        %v1751 = vpow.pop %v1750
        %v1752 = vmul.f32 %v1701, 1.442695
        %v1753 = vpow.pop %v1752
        %v1754 = vmul.f32 %v1702, 1.442695
        %v1755 = vpow.pop %v1754
        %v1756 = vmul.f32 %v1703, 1.442695
        %v1757 = vpow.pop %v1756
        %v1758 = vmul.f32 %v1704, 1.442695
        %v1759 = vpow.pop %v1758
        %v1760 = vmul.f32 %v1705, 1.442695
        %v1761 = vpow.pop %v1760
        %v1762 = vmul.f32 %v1706, 1.442695
        %v1763 = vpow.pop %v1762
        %v1764 = vmul.f32 %v1707, 1.442695
        %v1765 = vpow.pop %v1764
        %v1766 = vmul.f32 %v1708, 1.442695
        %v1767 = vpow.pop %v1766
        %v1768 = vmul.f32 %v1709, 1.442695
        %v1769 = vpow.pop %v1768
        %v1770 = vmul.f32 %v1710, 1.442695
        %v1771 = vpow.pop %v1770
        %v1772 = vmul.f32 %v1711, 1.442695
        %v1773 = vpow.pop %v1772
        %v1774 = vmul.f32 %v1712, 1.442695
        %v1775 = vpow.pop %v1774
        %v1776 = vmul.f32 %v1713, 1.442695
        %v1777 = vpow.pop %v1776
        %v1778 = vadd.f32 %v1715, %v1717
        %v1779 = vadd.f32 %v1778, %v1719
        %v1780 = vadd.f32 %v1779, %v1721
        %v1781 = vadd.f32 %v1780, %v1723
        %v1782 = vadd.f32 %v1781, %v1725
        %v1783 = vadd.f32 %v1782, %v1727
        %v1784 = vadd.f32 %v1783, %v1729
        %v1785 = vadd.f32 %v1784, %v1731
        %v1786 = vadd.f32 %v1785, %v1733
        %v1787 = vadd.f32 %v1786, %v1735
        %v1788 = vadd.f32 %v1787, %v1737
        %v1789 = vadd.f32 %v1788, %v1739
        %v1790 = vadd.f32 %v1789, %v1741
        %v1791 = vadd.f32 %v1790, %v1743
        %v1792 = vadd.f32 %v1791, %v1745
        %v1793 = vadd.f32 %v1792, %v1747
        %v1794 = vadd.f32 %v1793, %v1749
        %v1795 = vadd.f32 %v1794, %v1751
        %v1796 = vadd.f32 %v1795, %v1753
        %v1797 = vadd.f32 %v1796, %v1755
        %v1798 = vadd.f32 %v1797, %v1757
        %v1799 = vadd.f32 %v1798, %v1759
        %v1800 = vadd.f32 %v1799, %v1761
        %v1801 = vadd.f32 %v1800, %v1763
        %v1802 = vadd.f32 %v1801, %v1765
        %v1803 = vadd.f32 %v1802, %v1767
        %v1804 = vadd.f32 %v1803, %v1769
        %v1805 = vadd.f32 %v1804, %v1771
        %v1806 = vadd.f32 %v1805, %v1773
        %v1807 = vadd.f32 %v1806, %v1775
        %v1808 = vadd.f32 %v1807, %v1777
        %v1809 = vrot.slane %v1808, 4
        %v1810 = vadd.f32 %v1808, %v1809
        %v1811 = vrot.slane %v1810, 2
        %v1812 = vadd.f32 %v1810, %v1811
        %v1813 = vrot.slane %v1812, 1
        %v1814 = vadd.f32 %v1812, %v1813
        %v1815 = vadd.f32 %v1675, %v1814
        %1816 = vst [vmem:[%s1630] sm:$0x1] %v1669
        %1817 = vst [vmem:[%s1670] sm:$0x1] %v1815
        // Predicated region
        $region57: #{tpu_custom_call.1} parent=31 // pred_check
          %p1818 = pneg %p603
        $region58: #{tpu_custom_call.1} parent=31 // pred_check_branch
          %1820 = sbr.rel (%p1818) target = $region60
        $region59: #{tpu_custom_call.1} parent=31 // pred_region
          %v1821 = vlog2.pop %v1815
          %v1822 = vmul.f32 %v1821, 0.6931472
          %v1823 = vadd.f32 %v1669, %v1822
          %v1824 = vld [vmem:[#allocation7] sm:$0x1]
          %vm1825 = vcmask 1040384
          %v1826 = vsel %vm1825, %v1823, 0.0
          %1827 = vadd.xlane.f32.xlu0 %v1826
          %v1828 = vpop.xlane.xlu0 %1827
          %v1829 = vadd.f32 %v1824, %v1828
          %vm1830 = vcmask 0
          %1831 = vst.msk [vmem:[#allocation7] sm:$0x1] %vm1830, %v1829
        $region60: #{tpu_custom_call.1} parent=31 // pred_fallthru
          _
        %s1832 = smul.u32 %s24, 256
        %s1833 = smul.u32 %s25, 128
        %s1834 = sadd.s32 %s1833, 128
        %p1835 = scmp.gt.s32.totalorder %s1834, %s1832
        %s1836 = sadd.s32 %s1832, 256
        %p1837 = scmp.lt.s32.totalorder %s1833, %s1836
        %p1838 = pnand %p1835, %p1837
        %p1839 = pneg %p1838
        // Predicated region
        $region61: #{tpu_custom_call.1} parent=31 // pred_check
          _
        $region62: #{tpu_custom_call.1} parent=31 // pred_check_branch
          %1841 = sbr.rel (%p1838) target = $region64
        $region63: #{tpu_custom_call.1} parent=31 // pred_region
          %v1842 = vlaneseq
          %v1843 = vshrl.u32 %v1842, 7
          %v1844 = vadd.s32 %v1843, 8
          %v1845 = vadd.s32 %v1843, 16
          %v1846 = vadd.s32 %v1843, 24
          %v1847 = vadd.s32 %v1843, 32
          %v1848 = vadd.s32 %v1843, 40
          %v1849 = vadd.s32 %v1843, 48
          %v1850 = vadd.s32 %v1843, 56
          %v1851 = vadd.s32 %v1843, 64
          %v1852 = vadd.s32 %v1843, 72
          %v1853 = vadd.s32 %v1843, 80
          %v1854 = vadd.s32 %v1843, 88
          %v1855 = vadd.s32 %v1843, 96
          %v1856 = vadd.s32 %v1843, 104
          %v1857 = vadd.s32 %v1843, 112
          %v1858 = vadd.s32 %v1843, 120
          %v1859 = vadd.s32 %v1843, 128
          %v1860 = vadd.s32 %v1843, 136
          %v1861 = vadd.s32 %v1843, 144
          %v1862 = vadd.s32 %v1843, 152
          %v1863 = vadd.s32 %v1843, 160
          %v1864 = vadd.s32 %v1843, 168
          %v1865 = vadd.s32 %v1843, 176
          %v1866 = vadd.s32 %v1843, 184
          %v1867 = vadd.s32 %v1843, 192
          %v1868 = vadd.s32 %v1843, 200
          %v1869 = vadd.s32 %v1843, 208
          %v1870 = vadd.s32 %v1843, 216
          %v1871 = vadd.s32 %v1843, 224
          %v1872 = vadd.s32 %v1843, 232
          %v1873 = vadd.s32 %v1843, 240
          %v1874 = vadd.s32 %v1843, 248
          %v1875 = vstv %s1832
          %v1876 = vadd.s32 %v1875, %v1843
          %v1877 = vadd.s32 %v1875, %v1844
          %v1878 = vadd.s32 %v1875, %v1845
          %v1879 = vadd.s32 %v1875, %v1846
          %v1880 = vadd.s32 %v1875, %v1847
          %v1881 = vadd.s32 %v1875, %v1848
          %v1882 = vadd.s32 %v1875, %v1849
          %v1883 = vadd.s32 %v1875, %v1850
          %v1884 = vadd.s32 %v1875, %v1851
          %v1885 = vadd.s32 %v1875, %v1852
          %v1886 = vadd.s32 %v1875, %v1853
          %v1887 = vadd.s32 %v1875, %v1854
          %v1888 = vadd.s32 %v1875, %v1855
          %v1889 = vadd.s32 %v1875, %v1856
          %v1890 = vadd.s32 %v1875, %v1857
          %v1891 = vadd.s32 %v1875, %v1858
          %v1892 = vadd.s32 %v1875, %v1859
          %v1893 = vadd.s32 %v1875, %v1860
          %v1894 = vadd.s32 %v1875, %v1861
          %v1895 = vadd.s32 %v1875, %v1862
          %v1896 = vadd.s32 %v1875, %v1863
          %v1897 = vadd.s32 %v1875, %v1864
          %v1898 = vadd.s32 %v1875, %v1865
          %v1899 = vadd.s32 %v1875, %v1866
          %v1900 = vadd.s32 %v1875, %v1867
          %v1901 = vadd.s32 %v1875, %v1868
          %v1902 = vadd.s32 %v1875, %v1869
          %v1903 = vadd.s32 %v1875, %v1870
          %v1904 = vadd.s32 %v1875, %v1871
          %v1905 = vadd.s32 %v1875, %v1872
          %v1906 = vadd.s32 %v1875, %v1873
          %v1907 = vadd.s32 %v1875, %v1874
          %v1908 = vlaneseq
          %v1909 = vand.u32 %v1908, 127
          %v1910 = vstv %s1833
          %v1911 = vadd.s32 %v1910, %v1909
          %vm1912 = vcmp.eq.s32.totalorder %v1876, %v1911
          %vm1913 = vcmp.eq.s32.totalorder %v1877, %v1911
          %vm1914 = vcmp.eq.s32.totalorder %v1878, %v1911
          %vm1915 = vcmp.eq.s32.totalorder %v1879, %v1911
          %vm1916 = vcmp.eq.s32.totalorder %v1880, %v1911
          %vm1917 = vcmp.eq.s32.totalorder %v1881, %v1911
          %vm1918 = vcmp.eq.s32.totalorder %v1882, %v1911
          %vm1919 = vcmp.eq.s32.totalorder %v1883, %v1911
          %vm1920 = vcmp.eq.s32.totalorder %v1884, %v1911
          %vm1921 = vcmp.eq.s32.totalorder %v1885, %v1911
          %vm1922 = vcmp.eq.s32.totalorder %v1886, %v1911
          %vm1923 = vcmp.eq.s32.totalorder %v1887, %v1911
          %vm1924 = vcmp.eq.s32.totalorder %v1888, %v1911
          %vm1925 = vcmp.eq.s32.totalorder %v1889, %v1911
          %vm1926 = vcmp.eq.s32.totalorder %v1890, %v1911
          %vm1927 = vcmp.eq.s32.totalorder %v1891, %v1911
          %vm1928 = vcmp.eq.s32.totalorder %v1892, %v1911
          %vm1929 = vcmp.eq.s32.totalorder %v1893, %v1911
          %vm1930 = vcmp.eq.s32.totalorder %v1894, %v1911
          %vm1931 = vcmp.eq.s32.totalorder %v1895, %v1911
          %vm1932 = vcmp.eq.s32.totalorder %v1896, %v1911
          %vm1933 = vcmp.eq.s32.totalorder %v1897, %v1911
          %vm1934 = vcmp.eq.s32.totalorder %v1898, %v1911
          %vm1935 = vcmp.eq.s32.totalorder %v1899, %v1911
          %vm1936 = vcmp.eq.s32.totalorder %v1900, %v1911
          %vm1937 = vcmp.eq.s32.totalorder %v1901, %v1911
          %vm1938 = vcmp.eq.s32.totalorder %v1902, %v1911
          %vm1939 = vcmp.eq.s32.totalorder %v1903, %v1911
          %vm1940 = vcmp.eq.s32.totalorder %v1904, %v1911
          %vm1941 = vcmp.eq.s32.totalorder %v1905, %v1911
          %vm1942 = vcmp.eq.s32.totalorder %v1906, %v1911
          %vm1943 = vcmp.eq.s32.totalorder %v1907, %v1911
          %v1944 = vsel %vm1912, %v571, 0.0
          %v1945 = vsel %vm1913, %v572, 0.0
          %v1946 = vsel %vm1914, %v573, 0.0
          %v1947 = vsel %vm1915, %v574, 0.0
          %v1948 = vsel %vm1916, %v575, 0.0
          %v1949 = vsel %vm1917, %v576, 0.0
          %v1950 = vsel %vm1918, %v577, 0.0
          %v1951 = vsel %vm1919, %v578, 0.0
          %v1952 = vsel %vm1920, %v579, 0.0
          %v1953 = vsel %vm1921, %v580, 0.0
          %v1954 = vsel %vm1922, %v581, 0.0
          %v1955 = vsel %vm1923, %v582, 0.0
          %v1956 = vsel %vm1924, %v583, 0.0
          %v1957 = vsel %vm1925, %v584, 0.0
          %v1958 = vsel %vm1926, %v585, 0.0
          %v1959 = vsel %vm1927, %v586, 0.0
          %v1960 = vsel %vm1928, %v587, 0.0
          %v1961 = vsel %vm1929, %v588, 0.0
          %v1962 = vsel %vm1930, %v589, 0.0
          %v1963 = vsel %vm1931, %v590, 0.0
          %v1964 = vsel %vm1932, %v591, 0.0
          %v1965 = vsel %vm1933, %v592, 0.0
          %v1966 = vsel %vm1934, %v593, 0.0
          %v1967 = vsel %vm1935, %v594, 0.0
          %v1968 = vsel %vm1936, %v595, 0.0
          %v1969 = vsel %vm1937, %v596, 0.0
          %v1970 = vsel %vm1938, %v597, 0.0
          %v1971 = vsel %vm1939, %v598, 0.0
          %v1972 = vsel %vm1940, %v599, 0.0
          %v1973 = vsel %vm1941, %v600, 0.0
          %v1974 = vsel %vm1942, %v601, 0.0
          %v1975 = vsel %vm1943, %v602, 0.0
          %1976 = vadd.xlane.f32.xlu0 %v1944
          %v1977 = vpop.xlane.xlu0 %1976
          %1978 = vadd.xlane.f32.xlu0 %v1945
          %v1979 = vpop.xlane.xlu0 %1978
          %1980 = vadd.xlane.f32.xlu0 %v1946
          %v1981 = vpop.xlane.xlu0 %1980
          %1982 = vadd.xlane.f32.xlu0 %v1947
          %v1983 = vpop.xlane.xlu0 %1982
          %1984 = vadd.xlane.f32.xlu0 %v1948
          %v1985 = vpop.xlane.xlu0 %1984
          %1986 = vadd.xlane.f32.xlu0 %v1949
          %v1987 = vpop.xlane.xlu0 %1986
          %1988 = vadd.xlane.f32.xlu0 %v1950
          %v1989 = vpop.xlane.xlu0 %1988
          %1990 = vadd.xlane.f32.xlu0 %v1951
          %v1991 = vpop.xlane.xlu0 %1990
          %1992 = vadd.xlane.f32.xlu0 %v1952
          %v1993 = vpop.xlane.xlu0 %1992
          %1994 = vadd.xlane.f32.xlu0 %v1953
          %v1995 = vpop.xlane.xlu0 %1994
          %1996 = vadd.xlane.f32.xlu0 %v1954
          %v1997 = vpop.xlane.xlu0 %1996
          %1998 = vadd.xlane.f32.xlu0 %v1955
          %v1999 = vpop.xlane.xlu0 %1998
          %2000 = vadd.xlane.f32.xlu0 %v1956
          %v2001 = vpop.xlane.xlu0 %2000
          %2002 = vadd.xlane.f32.xlu0 %v1957
          %v2003 = vpop.xlane.xlu0 %2002
          %2004 = vadd.xlane.f32.xlu0 %v1958
          %v2005 = vpop.xlane.xlu0 %2004
          %2006 = vadd.xlane.f32.xlu0 %v1959
          %v2007 = vpop.xlane.xlu0 %2006
          %2008 = vadd.xlane.f32.xlu0 %v1960
          %v2009 = vpop.xlane.xlu0 %2008
          %2010 = vadd.xlane.f32.xlu0 %v1961
          %v2011 = vpop.xlane.xlu0 %2010
          %2012 = vadd.xlane.f32.xlu0 %v1962
          %v2013 = vpop.xlane.xlu0 %2012
          %2014 = vadd.xlane.f32.xlu0 %v1963
          %v2015 = vpop.xlane.xlu0 %2014
          %2016 = vadd.xlane.f32.xlu0 %v1964
          %v2017 = vpop.xlane.xlu0 %2016
          %2018 = vadd.xlane.f32.xlu0 %v1965
          %v2019 = vpop.xlane.xlu0 %2018
          %2020 = vadd.xlane.f32.xlu0 %v1966
          %v2021 = vpop.xlane.xlu0 %2020
          %2022 = vadd.xlane.f32.xlu0 %v1967
          %v2023 = vpop.xlane.xlu0 %2022
          %2024 = vadd.xlane.f32.xlu0 %v1968
          %v2025 = vpop.xlane.xlu0 %2024
          %2026 = vadd.xlane.f32.xlu0 %v1969
          %v2027 = vpop.xlane.xlu0 %2026
          %2028 = vadd.xlane.f32.xlu0 %v1970
          %v2029 = vpop.xlane.xlu0 %2028
          %2030 = vadd.xlane.f32.xlu0 %v1971
          %v2031 = vpop.xlane.xlu0 %2030
          %2032 = vadd.xlane.f32.xlu0 %v1972
          %v2033 = vpop.xlane.xlu0 %2032
          %2034 = vadd.xlane.f32.xlu0 %v1973
          %v2035 = vpop.xlane.xlu0 %2034
          %2036 = vadd.xlane.f32.xlu0 %v1974
          %v2037 = vpop.xlane.xlu0 %2036
          %2038 = vadd.xlane.f32.xlu0 %v1975
          %v2039 = vpop.xlane.xlu0 %2038
          %v2040 = vld [vmem:[#allocation8] sm:$0x1]
          %v2041 = vadd.f32 %v1977, %v1979
          %v2042 = vadd.f32 %v2041, %v1981
          %v2043 = vadd.f32 %v2042, %v1983
          %v2044 = vadd.f32 %v2043, %v1985
          %v2045 = vadd.f32 %v2044, %v1987
          %v2046 = vadd.f32 %v2045, %v1989
          %v2047 = vadd.f32 %v2046, %v1991
          %v2048 = vadd.f32 %v2047, %v1993
          %v2049 = vadd.f32 %v2048, %v1995
          %v2050 = vadd.f32 %v2049, %v1997
          %v2051 = vadd.f32 %v2050, %v1999
          %v2052 = vadd.f32 %v2051, %v2001
          %v2053 = vadd.f32 %v2052, %v2003
          %v2054 = vadd.f32 %v2053, %v2005
          %v2055 = vadd.f32 %v2054, %v2007
          %v2056 = vadd.f32 %v2055, %v2009
          %v2057 = vadd.f32 %v2056, %v2011
          %v2058 = vadd.f32 %v2057, %v2013
          %v2059 = vadd.f32 %v2058, %v2015
          %v2060 = vadd.f32 %v2059, %v2017
          %v2061 = vadd.f32 %v2060, %v2019
          %v2062 = vadd.f32 %v2061, %v2021
          %v2063 = vadd.f32 %v2062, %v2023
          %v2064 = vadd.f32 %v2063, %v2025
          %v2065 = vadd.f32 %v2064, %v2027
          %v2066 = vadd.f32 %v2065, %v2029
          %v2067 = vadd.f32 %v2066, %v2031
          %v2068 = vadd.f32 %v2067, %v2033
          %v2069 = vadd.f32 %v2068, %v2035
          %v2070 = vadd.f32 %v2069, %v2037
          %v2071 = vadd.f32 %v2070, %v2039
          %v2072 = vrot.slane %v2071, 4
          %v2073 = vadd.f32 %v2071, %v2072
          %v2074 = vrot.slane %v2073, 2
          %v2075 = vadd.f32 %v2073, %v2074
          %v2076 = vrot.slane %v2075, 1
          %v2077 = vadd.f32 %v2075, %v2076
          %v2078 = vadd.f32 %v2040, %v2077
          %vm2079 = vcmask 0
          %2080 = vst.msk [vmem:[#allocation8] sm:$0x1] %vm2079, %v2078
        $region64: #{tpu_custom_call.1} parent=31 // pred_fallthru
          _
        %p2081 = pnand %p603, %p1386
        %p2082 = pneg %p2081
        // Predicated region
        $region65: #{tpu_custom_call.1} parent=31 // pred_check
          _
        $region66: #{tpu_custom_call.1} parent=31 // pred_check_branch
          %2084 = sbr.rel (%p2081) target = $region68
        $region67: #{tpu_custom_call.1} parent=31 // pred_region
          %v2085 = vld [vmem:[#allocation6] sm:$0x1]
          %v2086 = vld [vmem:[#allocation7] sm:$0x1]
          %v2087 = vadd.f32 %v2085, %v2086
          %v2088 = vld [vmem:[#allocation8] sm:$0x1]
          %v2089 = vmul.f32 %v2088, 2.0
          %v2090 = vsub.f32 %v2087, %v2089
          %v2091 = vrcp.pop 512.0
          %v2092 = vmul.f32 %v2090, %v2091
          %vm2093 = vcmask 0
          %2094 = vst.msk [vmem:[#allocation15] sm:$0x1] %vm2093, %v2092
        $region68: #{tpu_custom_call.1} parent=31 // pred_fallthru
          _
        // Predicated region
        $region69: #{tpu_custom_call.1} parent=31 // pred_check
          %p2095 = pneg %p118
        $region70: #{tpu_custom_call.1} parent=31 // pred_check_branch
          %2097 = sbr.rel (%p2095) target = $region72
        $region71: #{tpu_custom_call.1} parent=31 // pred_region
          %s2099 = ssub.s32 16, 16
          %2100 = vsyncadd [#allocation12], %s2099
          %s2102 = sshll.u32 [#allocation15], 4
          %s2103 = int_to_ptr.vmem [resolvable:$true] %s2102
          %2105 = dma.vmem_to_hbm [thread:$0]  %s2103, 16, %s3, [#allocation12]
        $region72: #{tpu_custom_call.1} parent=31 // pred_fallthru
          _
        // Predicated region
        $region73: #{tpu_custom_call.1} parent=31 // pred_check
          %p2106 = pneg %p118
        $region74: #{tpu_custom_call.1} parent=31 // pred_check_branch
          %2108 = sbr.rel (%p2106) target = $region76
        $region75: #{tpu_custom_call.1} parent=31 // pred_region
          %2109 = dma.done [#allocation12], 16
        $region76: #{tpu_custom_call.1} parent=31 // pred_fallthru
          _
      $region32: #{tpu_custom_call.1} parent=5 // pred_fallthru
        _
      %p2110 = scmp.le.s32.totalorder 2, %s15
      // Predicated region
      $region77: #{tpu_custom_call.1} parent=5 // pred_check
        %p2111 = pneg %p2110
      $region78: #{tpu_custom_call.1} parent=5 // pred_check_branch
        %2113 = sbr.rel (%p2111) target = $region80
      $region79: #{tpu_custom_call.1} parent=5 // pred_region
        %s2114 = ssub.s32 %s15, 2
      $region80: #{tpu_custom_call.1} parent=5 // pred_fallthru
        _
    $region6: #{tpu_custom_call.1} parent=1 // loop_footer
      %s19 = sadd.s32 1, %s15
    $region7: #{tpu_custom_call.1} parent=1 // loop_footer_branch
      %14 = sbr.rel target = $region3
    $region8: #{tpu_custom_call.1} parent=1 // loop_exit
      _
    %2115 = vsyncpa [#allocation11], 1
    %s2116 = scalar_lea.sflag [#allocation11], 1
    %2117 = vsyncpa %s2116, 1
    %2118 = vsyncpa [#allocation14], 1
    %s2119 = scalar_lea.sflag [#allocation14], 1
    %2120 = vsyncpa %s2119, 1
    %2121 = vsyncpa [#allocation12], 1
    %s2122 = scalar_lea.sflag [#allocation12], 1
    %2123 = vsyncpa %s2122, 1

</llo_original>
